<compile_context>
chip_gen: v6e
topology: v6e:2x2x1
jax: 0.10.0
libtpu: 0.0.40
codegen_flags: <defaults>
</compile_context>

<pallas_src>
import functools

import jax
import jax.numpy as jnp
from jax.experimental import pallas as pl
from jax.experimental.pallas import tpu as pltpu


# ------------------------------------------------------------------ fused forward kernel

def _custom_clip_kernel(
    prompts_ref, pos_ref,
    ln1_g_ref, ln1_b_ref, w_qkv_ref, b_qkv_ref, w_ao_ref, b_ao_ref,
    ln2_g_ref, ln2_b_ref, w_fc_ref, b_fc_ref, w_pr_ref, b_pr_ref,
    lnf_g_ref, lnf_b_ref, w_tp_ref, eot_ref,
    xg_ref, adj_ref, sel_ref, gw1_ref, gb1_ref, gw2_ref, gb2_ref,
    scale_ref,
    o_ref,
    *, n_heads):
    C, L, D = prompts_ref.shape
    CL = C * L
    dh = D // n_heads

    def ln(x, g_ref, b_ref):                    # LayerNorm in f32 (VPU/EUP)
        mu = jnp.mean(x, axis=-1, keepdims=True)
        var = jnp.mean((x - mu) ** 2, axis=-1, keepdims=True)
        return (x - mu) * jax.lax.rsqrt(var + 1e-5) * g_ref[...] + b_ref[...]

    def mxu(a, b):                              # bf16 operands, f32 accumulation on MXU
        return jnp.dot(a.astype(jnp.bfloat16), b.astype(jnp.bfloat16),
                       preferred_element_type=jnp.float32)

    # ---------------- text encoder (one pre-LN CLIP transformer block) ----------------
    # prompts + positional_embedding ; residual stream kept 2D (C*L, D) and VMEM-resident.
    x = (prompts_ref[...] + pos_ref[...][None]).reshape(CL, D)

    # attention: LN1 -> fused QKV matmul -> causal softmax per head -> out-projection
    h = ln(x, ln1_g_ref, ln1_b_ref)
    qkv = mxu(h, w_qkv_ref[...]) + b_qkv_ref[...]               # (CL, 3D), f32

    row = jax.lax.broadcasted_iota(jnp.int32, (L, L), 0)
    col = jax.lax.broadcasted_iota(jnp.int32, (L, L), 1)
    causal = (col <= row)[None]                                 # built once per forward

    w_ao = w_ao_ref[...]
    inv_sqrt_dh = jnp.float32(1.0 / (dh ** 0.5))
    attn_out = jnp.zeros((CL, D), jnp.float32)
    for hd in range(n_heads):                                   # static, unrolled
        q = qkv[:, 0 * D + hd * dh:0 * D + (hd + 1) * dh].reshape(C, L, dh)
        k = qkv[:, 1 * D + hd * dh:1 * D + (hd + 1) * dh].reshape(C, L, dh)
        v = qkv[:, 2 * D + hd * dh:2 * D + (hd + 1) * dh].reshape(C, L, dh)
        s = jnp.einsum("cqd,ckd->cqk",
                       q.astype(jnp.bfloat16), k.astype(jnp.bfloat16),
                       preferred_element_type=jnp.float32) * inv_sqrt_dh
        s = jnp.where(causal, s, jnp.float32(-1e9))             # mask + softmax in f32
        p = jax.nn.softmax(s, axis=-1)
        o_h = jnp.einsum("cqk,ckd->cqd",
                         p.astype(jnp.bfloat16), v.astype(jnp.bfloat16),
                         preferred_element_type=jnp.float32).reshape(CL, dh)
        # concat-free head merge: concat_h(o_h) @ W == sum_h o_h @ W[h*dh:(h+1)*dh, :]
        attn_out = attn_out + mxu(o_h, w_ao[hd * dh:(hd + 1) * dh, :])
    x = x + attn_out + b_ao_ref[...]

    # MLP: LN2 -> FC + QuickGELU -> proj, residual
    h = ln(x, ln2_g_ref, ln2_b_ref)
    h = mxu(h, w_fc_ref[...]) + b_fc_ref[...]
    h = h * jax.nn.sigmoid(1.702 * h)                           # QuickGELU in f32
    x = x + mxu(h, w_pr_ref[...]) + b_pr_ref[...]

    # ln_final, EOT pooling (one-hot select), text projection
    xf = ln(x, lnf_g_ref, lnf_b_ref).reshape(C, L, D)
    pooled = jnp.sum(eot_ref[...][:, :, None] * xf, axis=1)     # (C, D), exact gather
    txt = mxu(pooled, w_tp_ref[...])                            # (C, D)

    # ---------------- image encoder: 2-layer GCN, s_n gather folded in ----------------
    adj = adj_ref[...]
    hg = mxu(adj, xg_ref[...])                                  # adj @ x
    hg = jnp.maximum(mxu(hg, gw1_ref[...]) + gb1_ref[...], 0.0)
    hg = mxu(adj, hg)                                           # adj @ h
    hb = jnp.dot(sel_ref[...], hg,
                 preferred_element_type=jnp.float32)            # (B, D): only selected rows
    img = mxu(hb, gw2_ref[...]) + gb2_ref[...]                  # (B, D)

    # ---------------- normalize + logit_scale.exp() * img @ txt.T ---------------------
    img = img * jax.lax.rsqrt(jnp.sum(img * img, axis=-1, keepdims=True) + 1e-12)
    txt = txt * jax.lax.rsqrt(jnp.sum(txt * txt, axis=-1, keepdims=True) + 1e-12)
    scale = jnp.exp(scale_ref[0, 0])
    o_ref[...] = scale * jax.lax.dot_general(                   # contract last dims, no .T
        img, txt, (((1,), (1,)), ((), ())), preferred_element_type=jnp.float32)


# --------------------------------------------------------------------------- model glue

def init_params(key, *, n_cls, n_ctx, ctx_len, dim, feat_in):
    ks = jax.random.split(key, 16)

    def nrm(k, shape, std=0.02):
        return std * jax.random.normal(k, shape, jnp.float32)

    return dict(
        # PromptLearner (ctx_init=False, class_specific=False, position='end')
        ctx=nrm(ks[0], (n_ctx, dim)),
        token_prefix=nrm(ks[1], (n_cls, 1, dim)),
        token_suffix=nrm(ks[2], (n_cls, ctx_len - 1 - n_ctx, dim)),
        # TextEncoder (one synthetic CLIP-style pre-LN transformer block)
        pos_emb=nrm(ks[3], (ctx_len, dim)),
        ln1_g=jnp.ones((dim,), jnp.float32), ln1_b=jnp.zeros((dim,), jnp.float32),
        w_qkv=nrm(ks[4], (dim, 3 * dim)), b_qkv=jnp.zeros((3 * dim,), jnp.float32),
        w_attn_out=nrm(ks[5], (dim, dim)), b_attn_out=jnp.zeros((dim,), jnp.float32),
        ln2_g=jnp.ones((dim,), jnp.float32), ln2_b=jnp.zeros((dim,), jnp.float32),
        w_fc=nrm(ks[6], (dim, 4 * dim)), b_fc=jnp.zeros((4 * dim,), jnp.float32),
        w_proj=nrm(ks[7], (4 * dim, dim)), b_proj=jnp.zeros((dim,), jnp.float32),
        lnf_g=jnp.ones((dim,), jnp.float32), lnf_b=jnp.zeros((dim,), jnp.float32),
        text_projection=nrm(ks[8], (dim, dim)),
        # image encoder = clip_model.gnn (synthetic 2-layer GCN)
        gnn_w1=nrm(ks[9], (feat_in, dim)), gnn_b1=jnp.zeros((dim,), jnp.float32),
        gnn_w2=nrm(ks[10], (dim, dim)), gnn_b2=jnp.zeros((dim,), jnp.float32),
        # CLIP logit scale init: ln(1/0.07)
        logit_scale=jnp.float32(jnp.log(1.0 / 0.07)),
    )


def prompt_learner_forward(p, n_cls):
    ctx = p["ctx"]                                           # (n_ctx, dim), dim()==2
    ctx = jnp.broadcast_to(ctx[None], (n_cls,) + ctx.shape)  # expand to (n_cls, n_ctx, dim)
    # class_token_position == 'end'
    return jnp.concatenate([p["token_prefix"], ctx, p["token_suffix"]], axis=1)


def custom_clip_forward(p, s_n, x, adj, tokenized_prompts, *, n_cls, n_heads):
    bf16 = jnp.bfloat16
    prompts = prompt_learner_forward(p, n_cls)               # (C, L, D)  cheap JAX concat
    C, L, D = prompts.shape
    N = x.shape[0]
    B = s_n.shape[0]

    # EOT pooling / s_n gather expressed as exact one-hot selectors (done in the kernel).
    eot_onehot = jax.nn.one_hot(jnp.argmax(tokenized_prompts, axis=-1), L,
                                dtype=jnp.float32)           # (C, L)
    sel = jax.nn.one_hot(s_n, N, dtype=jnp.float32)          # (B, N)
    scale = jnp.asarray(p["logit_scale"], jnp.float32).reshape(1, 1)

    args = (
        prompts, p["pos_emb"],
        p["ln1_g"].reshape(1, D), p["ln1_b"].reshape(1, D),
        p["w_qkv"].astype(bf16), p["b_qkv"].reshape(1, 3 * D),
        p["w_attn_out"].astype(bf16), p["b_attn_out"].reshape(1, D),
        p["ln2_g"].reshape(1, D), p["ln2_b"].reshape(1, D),
        p["w_fc"].astype(bf16), p["b_fc"].reshape(1, 4 * D),
        p["w_proj"].astype(bf16), p["b_proj"].reshape(1, D),
        p["lnf_g"].reshape(1, D), p["lnf_b"].reshape(1, D),
        p["text_projection"].astype(bf16),
        eot_onehot,
        x, adj, sel,
        p["gnn_w1"].astype(bf16), p["gnn_b1"].reshape(1, D),
        p["gnn_w2"].astype(bf16), p["gnn_b2"].reshape(1, D),
        scale,
    )

    vmem = pl.BlockSpec(memory_space=pltpu.MemorySpace.VMEM)
    smem = pl.BlockSpec(memory_space=pltpu.MemorySpace.SMEM)

    return pl.pallas_call(
        functools.partial(_custom_clip_kernel, n_heads=n_heads),
        out_shape=jax.ShapeDtypeStruct((B, C), jnp.float32),
        in_specs=[vmem] * (len(args) - 1) + [smem],
        out_specs=vmem,
        compiler_params=pltpu.CompilerParams(vmem_limit_bytes=32 * 1024 * 1024),
    )(*args)


# --------------------------------------------------------------------------------- main

if __name__ == "__main__":
    n_cls = 4       # number of class prompts
    n_ctx = 4       # learnable context tokens
    ctx_len = 16    # context_length
    dim = 128       # ctx_dim / transformer width / projection dim (lane-dense)
    n_heads = 2
    n_nodes = 16    # graph nodes
    feat_in = 128   # node feature dim (lane-dense)
    batch = 2       # |s_n|

    key = jax.random.PRNGKey(0)
    k_par, k_x, k_adj = jax.random.split(key, 3)

    params = init_params(k_par, n_cls=n_cls, n_ctx=n_ctx, ctx_len=ctx_len,
                         dim=dim, feat_in=feat_in)

    # graph inputs
    x = jax.random.normal(k_x, (n_nodes, feat_in), jnp.float32)
    a = jax.random.uniform(k_adj, (n_nodes, n_nodes), jnp.float32)
    a = 0.5 * (a + a.T) + jnp.eye(n_nodes, dtype=jnp.float32)
    adj = a / jnp.sum(a, axis=-1, keepdims=True)             # row-normalized adjacency
    s_n = jnp.array([3, 7], dtype=jnp.int32)

    # synthetic tokenized_prompts: EOT token (largest id) marks the pooling position
    tok = (jnp.tile(jnp.arange(ctx_len, dtype=jnp.int32)[None], (n_cls, 1)) % 5) + 1
    eot_pos = jnp.array([6, 7, 7, 8], dtype=jnp.int32)
    tokenized_prompts = tok.at[jnp.arange(n_cls), eot_pos].set(49407)

    forward = jax.jit(functools.partial(custom_clip_forward, n_cls=n_cls, n_heads=n_heads))
    logits = forward(params, s_n, x, adj, tokenized_prompts)
    logits = jax.block_until_ready(logits)
    assert logits.shape == (batch, n_cls) and logits.dtype == jnp.float32
    assert bool(jnp.all(jnp.isfinite(logits)))
    print("KERNEL_OK")
</pallas_src>

<mosaic_0001>
module attributes {stable_mosaic.version = 11 : i64} {
  func.func @_custom_clip_kernel(%arg0: memref<4x16x128xf32, #tpu.memory_space<vmem>>, %arg1: memref<16x128xf32, #tpu.memory_space<vmem>>, %arg2: memref<1x128xf32, #tpu.memory_space<vmem>>, %arg3: memref<1x128xf32, #tpu.memory_space<vmem>>, %arg4: memref<128x384xbf16, #tpu.memory_space<vmem>>, %arg5: memref<1x384xf32, #tpu.memory_space<vmem>>, %arg6: memref<128x128xbf16, #tpu.memory_space<vmem>>, %arg7: memref<1x128xf32, #tpu.memory_space<vmem>>, %arg8: memref<1x128xf32, #tpu.memory_space<vmem>>, %arg9: memref<1x128xf32, #tpu.memory_space<vmem>>, %arg10: memref<128x512xbf16, #tpu.memory_space<vmem>>, %arg11: memref<1x512xf32, #tpu.memory_space<vmem>>, %arg12: memref<512x128xbf16, #tpu.memory_space<vmem>>, %arg13: memref<1x128xf32, #tpu.memory_space<vmem>>, %arg14: memref<1x128xf32, #tpu.memory_space<vmem>>, %arg15: memref<1x128xf32, #tpu.memory_space<vmem>>, %arg16: memref<128x128xbf16, #tpu.memory_space<vmem>>, %arg17: memref<4x16xf32, #tpu.memory_space<vmem>>, %arg18: memref<16x128xf32, #tpu.memory_space<vmem>>, %arg19: memref<16x16xf32, #tpu.memory_space<vmem>>, %arg20: memref<2x16xf32, #tpu.memory_space<vmem>>, %arg21: memref<128x128xbf16, #tpu.memory_space<vmem>>, %arg22: memref<1x128xf32, #tpu.memory_space<vmem>>, %arg23: memref<128x128xbf16, #tpu.memory_space<vmem>>, %arg24: memref<1x128xf32, #tpu.memory_space<vmem>>, %arg25: memref<1x1xf32, #tpu.memory_space<smem>>, %arg26: memref<2x4xf32, #tpu.memory_space<vmem>>) attributes {dimension_semantics = [], scalar_prefetch = 0 : i64, scratch_operands = 0 : i64, tpu.core_type = #tpu.core_type<tc>} {
    %c0 = arith.constant 0 : index
    %c0_0 = arith.constant 0 : index
    %c0_1 = arith.constant 0 : index
    %0 = vector.load %arg0[%c0, %c0_0, %c0_1] : memref<4x16x128xf32, #tpu.memory_space<vmem>>, vector<4x16x128xf32>
    %c0_2 = arith.constant 0 : index
    %c0_3 = arith.constant 0 : index
    %1 = vector.load %arg1[%c0_2, %c0_3] : memref<16x128xf32, #tpu.memory_space<vmem>>, vector<16x128xf32>
    %2 = vector.shape_cast %1 : vector<16x128xf32> to vector<1x16x128xf32>
    %3 = vector.broadcast %2 : vector<1x16x128xf32> to vector<4x16x128xf32>
    %4 = arith.addf %0, %3 : vector<4x16x128xf32>
    %5 = vector.shape_cast %4 : vector<4x16x128xf32> to vector<64x128xf32>
    %cst = arith.constant dense<0.000000e+00> : vector<64xf32>
    %6 = vector.multi_reduction <add>, %5, %cst [1] : vector<64x128xf32> to vector<64xf32>
    %7 = vector.shape_cast %6 : vector<64xf32> to vector<64x1xf32>
    %cst_4 = arith.constant 1.280000e+02 : f32
    %8 = vector.broadcast %cst_4 : f32 to vector<64x1xf32>
    %9 = arith.divf %7, %8 : vector<64x1xf32>
    %10 = vector.broadcast %9 : vector<64x1xf32> to vector<64x128xf32>
    %11 = arith.subf %5, %10 : vector<64x128xf32>
    %12 = arith.mulf %11, %11 : vector<64x128xf32>
    %cst_5 = arith.constant dense<0.000000e+00> : vector<64xf32>
    %13 = vector.multi_reduction <add>, %12, %cst_5 [1] : vector<64x128xf32> to vector<64xf32>
    %14 = vector.shape_cast %13 : vector<64xf32> to vector<64x1xf32>
    %cst_6 = arith.constant 1.280000e+02 : f32
    %15 = vector.broadcast %cst_6 : f32 to vector<64x1xf32>
    %16 = arith.divf %14, %15 : vector<64x1xf32>
    %17 = vector.broadcast %9 : vector<64x1xf32> to vector<64x128xf32>
    %18 = arith.subf %5, %17 : vector<64x128xf32>
    %cst_7 = arith.constant 9.99999974E-6 : f32
    %19 = vector.broadcast %cst_7 : f32 to vector<64x1xf32>
    %20 = arith.addf %16, %19 : vector<64x1xf32>
    %21 = math.rsqrt %20 : vector<64x1xf32>
    %22 = vector.broadcast %21 : vector<64x1xf32> to vector<64x128xf32>
    %23 = arith.mulf %18, %22 : vector<64x128xf32>
    %c0_8 = arith.constant 0 : index
    %c0_9 = arith.constant 0 : index
    %24 = vector.load %arg2[%c0_8, %c0_9] : memref<1x128xf32, #tpu.memory_space<vmem>>, vector<1x128xf32>
    %25 = vector.broadcast %24 : vector<1x128xf32> to vector<64x128xf32>
    %26 = arith.mulf %23, %25 : vector<64x128xf32>
    %c0_10 = arith.constant 0 : index
    %c0_11 = arith.constant 0 : index
    %27 = vector.load %arg3[%c0_10, %c0_11] : memref<1x128xf32, #tpu.memory_space<vmem>>, vector<1x128xf32>
    %28 = vector.broadcast %27 : vector<1x128xf32> to vector<64x128xf32>
    %29 = arith.addf %26, %28 : vector<64x128xf32>
    %c0_12 = arith.constant 0 : index
    %c0_13 = arith.constant 0 : index
    %30 = vector.load %arg4[%c0_12, %c0_13] : memref<128x384xbf16, #tpu.memory_space<vmem>>, vector<128x384xbf16>
    %31 = arith.truncf %29 : vector<64x128xf32> to vector<64x128xbf16>
    %cst_14 = arith.constant dense<0.000000e+00> : vector<64x384xf32>
    %32 = tpu.matmul %31, %30, %cst_14 {dimension_numbers = #tpu.dot_dimension_numbers<[1], [0], [0], [1], [0, 0, 1, 1], [], []>} : vector<64x128xbf16>, vector<128x384xbf16>, vector<64x384xf32> -> vector<64x384xf32>
    %c0_15 = arith.constant 0 : index
    %c0_16 = arith.constant 0 : index
    %33 = vector.load %arg5[%c0_15, %c0_16] : memref<1x384xf32, #tpu.memory_space<vmem>>, vector<1x384xf32>
    %34 = vector.broadcast %33 : vector<1x384xf32> to vector<64x384xf32>
    %35 = arith.addf %32, %34 : vector<64x384xf32>
    %36 = tpu.iota {dimensions = array<i32: 0>} : vector<16x16xi32>
    %37 = tpu.iota {dimensions = array<i32: 1>} : vector<16x16xi32>
    %38 = arith.cmpi sle, %37, %36 : vector<16x16xi32>
    %39 = vector.shape_cast %38 : vector<16x16xi1> to vector<1x16x16xi1>
    %c0_17 = arith.constant 0 : index
    %c0_18 = arith.constant 0 : index
    %40 = vector.load %arg6[%c0_17, %c0_18] : memref<128x128xbf16, #tpu.memory_space<vmem>>, vector<128x128xbf16>
    %cst_19 = arith.constant 0.000000e+00 : f32
    %41 = vector.broadcast %cst_19 : f32 to vector<64x128xf32>
    %42 = vector.extract_strided_slice %35 {offsets = [0, 0], sizes = [64, 64], strides = [1, 1]} : vector<64x384xf32> to vector<64x64xf32>
    %43 = vector.shape_cast %42 : vector<64x64xf32> to vector<4x16x64xf32>
    %44 = vector.extract_strided_slice %35 {offsets = [0, 128], sizes = [64, 64], strides = [1, 1]} : vector<64x384xf32> to vector<64x64xf32>
    %45 = vector.shape_cast %44 : vector<64x64xf32> to vector<4x16x64xf32>
    %46 = vector.extract_strided_slice %35 {offsets = [0, 256], sizes = [64, 64], strides = [1, 1]} : vector<64x384xf32> to vector<64x64xf32>
    %47 = vector.shape_cast %46 : vector<64x64xf32> to vector<4x16x64xf32>
    %48 = arith.truncf %43 : vector<4x16x64xf32> to vector<4x16x64xbf16>
    %49 = arith.truncf %45 : vector<4x16x64xf32> to vector<4x16x64xbf16>
    "tpu.trace_start"() <{level = 10 : i32, message = "cqd,ckd->cqk"}> : () -> ()
    %cst_20 = arith.constant dense<0.000000e+00> : vector<4x16x16xf32>
    %50 = tpu.matmul %48, %49, %cst_20 {dimension_numbers = #tpu.dot_dimension_numbers<[2], [2], [1], [1], [0, 0, 0, 1, 1, 1], [0], [0]>} : vector<4x16x64xbf16>, vector<4x16x64xbf16>, vector<4x16x16xf32> -> vector<4x16x16xf32>
    "tpu.trace_stop"() : () -> ()
    %cst_21 = arith.constant 1.250000e-01 : f32
    %51 = vector.broadcast %cst_21 : f32 to vector<4x16x16xf32>
    %52 = arith.mulf %50, %51 : vector<4x16x16xf32>
    %cst_22 = arith.constant -1.000000e+09 : f32
    %53 = vector.shape_cast %39 : vector<1x16x16xi1> to vector<1x16x16xi1>
    %54 = vector.broadcast %53 : vector<1x16x16xi1> to vector<4x16x16xi1>
    %55 = vector.broadcast %cst_22 : f32 to vector<4x16x16xf32>
    %56 = arith.select %54, %52, %55 : vector<4x16x16xi1>, vector<4x16x16xf32>
    %cst_23 = arith.constant dense<0xFF800000> : vector<4x16xf32>
    %57 = vector.multi_reduction <maximumf>, %56, %cst_23 [2] : vector<4x16x16xf32> to vector<4x16xf32>
    %cst_24 = arith.constant 0xFF800000 : f32
    %58 = vector.broadcast %cst_24 : f32 to vector<4x16xf32>
    %59 = arith.maximumf %58, %57 : vector<4x16xf32>
    %60 = vector.shape_cast %59 : vector<4x16xf32> to vector<4x16x1xf32>
    %61 = vector.broadcast %60 : vector<4x16x1xf32> to vector<4x16x16xf32>
    %62 = arith.subf %56, %61 : vector<4x16x16xf32>
    %63 = math.exp %62 : vector<4x16x16xf32>
    %cst_25 = arith.constant dense<0.000000e+00> : vector<4x16xf32>
    %64 = vector.multi_reduction <add>, %63, %cst_25 [2] : vector<4x16x16xf32> to vector<4x16xf32>
    %65 = vector.shape_cast %64 : vector<4x16xf32> to vector<4x16x1xf32>
    %66 = vector.broadcast %65 : vector<4x16x1xf32> to vector<4x16x16xf32>
    %67 = arith.divf %63, %66 : vector<4x16x16xf32>
    %68 = arith.truncf %67 : vector<4x16x16xf32> to vector<4x16x16xbf16>
    %69 = arith.truncf %47 : vector<4x16x64xf32> to vector<4x16x64xbf16>
    "tpu.trace_start"() <{level = 10 : i32, message = "cqk,ckd->cqd"}> : () -> ()
    %cst_26 = arith.constant dense<0.000000e+00> : vector<4x16x64xf32>
    %70 = tpu.matmul %68, %69, %cst_26 {dimension_numbers = #tpu.dot_dimension_numbers<[2], [1], [1], [2], [0, 0, 0, 1, 1, 2], [0], [0]>} : vector<4x16x16xbf16>, vector<4x16x64xbf16>, vector<4x16x64xf32> -> vector<4x16x64xf32>
    "tpu.trace_stop"() : () -> ()
    %71 = vector.shape_cast %70 : vector<4x16x64xf32> to vector<64x64xf32>
    %72 = vector.extract_strided_slice %40 {offsets = [0, 0], sizes = [64, 128], strides = [1, 1]} : vector<128x128xbf16> to vector<64x128xbf16>
    %73 = arith.truncf %71 : vector<64x64xf32> to vector<64x64xbf16>
    %cst_27 = arith.constant dense<0.000000e+00> : vector<64x128xf32>
    %74 = tpu.matmul %73, %72, %cst_27 {dimension_numbers = #tpu.dot_dimension_numbers<[1], [0], [0], [1], [0, 0, 1, 1], [], []>} : vector<64x64xbf16>, vector<64x128xbf16>, vector<64x128xf32> -> vector<64x128xf32>
    %75 = arith.addf %41, %74 : vector<64x128xf32>
    %76 = vector.extract_strided_slice %35 {offsets = [0, 64], sizes = [64, 64], strides = [1, 1]} : vector<64x384xf32> to vector<64x64xf32>
    %77 = vector.shape_cast %76 : vector<64x64xf32> to vector<4x16x64xf32>
    %78 = vector.extract_strided_slice %35 {offsets = [0, 192], sizes = [64, 64], strides = [1, 1]} : vector<64x384xf32> to vector<64x64xf32>
    %79 = vector.shape_cast %78 : vector<64x64xf32> to vector<4x16x64xf32>
    %80 = vector.extract_strided_slice %35 {offsets = [0, 320], sizes = [64, 64], strides = [1, 1]} : vector<64x384xf32> to vector<64x64xf32>
    %81 = vector.shape_cast %80 : vector<64x64xf32> to vector<4x16x64xf32>
    %82 = arith.truncf %77 : vector<4x16x64xf32> to vector<4x16x64xbf16>
    %83 = arith.truncf %79 : vector<4x16x64xf32> to vector<4x16x64xbf16>
    "tpu.trace_start"() <{level = 10 : i32, message = "cqd,ckd->cqk"}> : () -> ()
    %cst_28 = arith.constant dense<0.000000e+00> : vector<4x16x16xf32>
    %84 = tpu.matmul %82, %83, %cst_28 {dimension_numbers = #tpu.dot_dimension_numbers<[2], [2], [1], [1], [0, 0, 0, 1, 1, 1], [0], [0]>} : vector<4x16x64xbf16>, vector<4x16x64xbf16>, vector<4x16x16xf32> -> vector<4x16x16xf32>
    "tpu.trace_stop"() : () -> ()
    %cst_29 = arith.constant 1.250000e-01 : f32
    %85 = vector.broadcast %cst_29 : f32 to vector<4x16x16xf32>
    %86 = arith.mulf %84, %85 : vector<4x16x16xf32>
    %cst_30 = arith.constant -1.000000e+09 : f32
    %87 = vector.shape_cast %39 : vector<1x16x16xi1> to vector<1x16x16xi1>
    %88 = vector.broadcast %87 : vector<1x16x16xi1> to vector<4x16x16xi1>
    %89 = vector.broadcast %cst_30 : f32 to vector<4x16x16xf32>
    %90 = arith.select %88, %86, %89 : vector<4x16x16xi1>, vector<4x16x16xf32>
    %cst_31 = arith.constant dense<0xFF800000> : vector<4x16xf32>
    %91 = vector.multi_reduction <maximumf>, %90, %cst_31 [2] : vector<4x16x16xf32> to vector<4x16xf32>
    %cst_32 = arith.constant 0xFF800000 : f32
    %92 = vector.broadcast %cst_32 : f32 to vector<4x16xf32>
    %93 = arith.maximumf %92, %91 : vector<4x16xf32>
    %94 = vector.shape_cast %93 : vector<4x16xf32> to vector<4x16x1xf32>
    %95 = vector.broadcast %94 : vector<4x16x1xf32> to vector<4x16x16xf32>
    %96 = arith.subf %90, %95 : vector<4x16x16xf32>
    %97 = math.exp %96 : vector<4x16x16xf32>
    %cst_33 = arith.constant dense<0.000000e+00> : vector<4x16xf32>
    %98 = vector.multi_reduction <add>, %97, %cst_33 [2] : vector<4x16x16xf32> to vector<4x16xf32>
    %99 = vector.shape_cast %98 : vector<4x16xf32> to vector<4x16x1xf32>
    %100 = vector.broadcast %99 : vector<4x16x1xf32> to vector<4x16x16xf32>
    %101 = arith.divf %97, %100 : vector<4x16x16xf32>
    %102 = arith.truncf %101 : vector<4x16x16xf32> to vector<4x16x16xbf16>
    %103 = arith.truncf %81 : vector<4x16x64xf32> to vector<4x16x64xbf16>
    "tpu.trace_start"() <{level = 10 : i32, message = "cqk,ckd->cqd"}> : () -> ()
    %cst_34 = arith.constant dense<0.000000e+00> : vector<4x16x64xf32>
    %104 = tpu.matmul %102, %103, %cst_34 {dimension_numbers = #tpu.dot_dimension_numbers<[2], [1], [1], [2], [0, 0, 0, 1, 1, 2], [0], [0]>} : vector<4x16x16xbf16>, vector<4x16x64xbf16>, vector<4x16x64xf32> -> vector<4x16x64xf32>
    "tpu.trace_stop"() : () -> ()
    %105 = vector.shape_cast %104 : vector<4x16x64xf32> to vector<64x64xf32>
    %106 = vector.extract_strided_slice %40 {offsets = [64, 0], sizes = [64, 128], strides = [1, 1]} : vector<128x128xbf16> to vector<64x128xbf16>
    %107 = arith.truncf %105 : vector<64x64xf32> to vector<64x64xbf16>
    %cst_35 = arith.constant dense<0.000000e+00> : vector<64x128xf32>
    %108 = tpu.matmul %107, %106, %cst_35 {dimension_numbers = #tpu.dot_dimension_numbers<[1], [0], [0], [1], [0, 0, 1, 1], [], []>} : vector<64x64xbf16>, vector<64x128xbf16>, vector<64x128xf32> -> vector<64x128xf32>
    %109 = arith.addf %75, %108 : vector<64x128xf32>
    %110 = arith.addf %5, %109 : vector<64x128xf32>
    %c0_36 = arith.constant 0 : index
    %c0_37 = arith.constant 0 : index
    %111 = vector.load %arg7[%c0_36, %c0_37] : memref<1x128xf32, #tpu.memory_space<vmem>>, vector<1x128xf32>
    %112 = vector.broadcast %111 : vector<1x128xf32> to vector<64x128xf32>
    %113 = arith.addf %110, %112 : vector<64x128xf32>
    %cst_38 = arith.constant dense<0.000000e+00> : vector<64xf32>
    %114 = vector.multi_reduction <add>, %113, %cst_38 [1] : vector<64x128xf32> to vector<64xf32>
    %115 = vector.shape_cast %114 : vector<64xf32> to vector<64x1xf32>
    %cst_39 = arith.constant 1.280000e+02 : f32
    %116 = vector.broadcast %cst_39 : f32 to vector<64x1xf32>
    %117 = arith.divf %115, %116 : vector<64x1xf32>
    %118 = vector.broadcast %117 : vector<64x1xf32> to vector<64x128xf32>
    %119 = arith.subf %113, %118 : vector<64x128xf32>
    %120 = arith.mulf %119, %119 : vector<64x128xf32>
    %cst_40 = arith.constant dense<0.000000e+00> : vector<64xf32>
    %121 = vector.multi_reduction <add>, %120, %cst_40 [1] : vector<64x128xf32> to vector<64xf32>
    %122 = vector.shape_cast %121 : vector<64xf32> to vector<64x1xf32>
    %cst_41 = arith.constant 1.280000e+02 : f32
    %123 = vector.broadcast %cst_41 : f32 to vector<64x1xf32>
    %124 = arith.divf %122, %123 : vector<64x1xf32>
    %125 = vector.broadcast %117 : vector<64x1xf32> to vector<64x128xf32>
    %126 = arith.subf %113, %125 : vector<64x128xf32>
    %cst_42 = arith.constant 9.99999974E-6 : f32
    %127 = vector.broadcast %cst_42 : f32 to vector<64x1xf32>
    %128 = arith.addf %124, %127 : vector<64x1xf32>
    %129 = math.rsqrt %128 : vector<64x1xf32>
    %130 = vector.broadcast %129 : vector<64x1xf32> to vector<64x128xf32>
    %131 = arith.mulf %126, %130 : vector<64x128xf32>
    %c0_43 = arith.constant 0 : index
    %c0_44 = arith.constant 0 : index
    %132 = vector.load %arg8[%c0_43, %c0_44] : memref<1x128xf32, #tpu.memory_space<vmem>>, vector<1x128xf32>
    %133 = vector.broadcast %132 : vector<1x128xf32> to vector<64x128xf32>
    %134 = arith.mulf %131, %133 : vector<64x128xf32>
    %c0_45 = arith.constant 0 : index
    %c0_46 = arith.constant 0 : index
    %135 = vector.load %arg9[%c0_45, %c0_46] : memref<1x128xf32, #tpu.memory_space<vmem>>, vector<1x128xf32>
    %136 = vector.broadcast %135 : vector<1x128xf32> to vector<64x128xf32>
    %137 = arith.addf %134, %136 : vector<64x128xf32>
    %c0_47 = arith.constant 0 : index
    %c0_48 = arith.constant 0 : index
    %138 = vector.load %arg10[%c0_47, %c0_48] : memref<128x512xbf16, #tpu.memory_space<vmem>>, vector<128x512xbf16>
    %139 = arith.truncf %137 : vector<64x128xf32> to vector<64x128xbf16>
    %cst_49 = arith.constant dense<0.000000e+00> : vector<64x512xf32>
    %140 = tpu.matmul %139, %138, %cst_49 {dimension_numbers = #tpu.dot_dimension_numbers<[1], [0], [0], [1], [0, 0, 1, 1], [], []>} : vector<64x128xbf16>, vector<128x512xbf16>, vector<64x512xf32> -> vector<64x512xf32>
    %c0_50 = arith.constant 0 : index
    %c0_51 = arith.constant 0 : index
    %141 = vector.load %arg11[%c0_50, %c0_51] : memref<1x512xf32, #tpu.memory_space<vmem>>, vector<1x512xf32>
    %142 = vector.broadcast %141 : vector<1x512xf32> to vector<64x512xf32>
    %143 = arith.addf %140, %142 : vector<64x512xf32>
    %cst_52 = arith.constant 1.702000e+00 : f32
    %144 = vector.broadcast %cst_52 : f32 to vector<64x512xf32>
    %145 = arith.mulf %144, %143 : vector<64x512xf32>
    %146 = arith.negf %145 : vector<64x512xf32>
    %147 = math.exp %146 : vector<64x512xf32>
    %cst_53 = arith.constant 1.000000e+00 : f32
    %148 = vector.broadcast %cst_53 : f32 to vector<64x512xf32>
    %149 = arith.addf %148, %147 : vector<64x512xf32>
    %150 = arith.divf %148, %149 : vector<64x512xf32>
    %151 = arith.mulf %143, %150 : vector<64x512xf32>
    %c0_54 = arith.constant 0 : index
    %c0_55 = arith.constant 0 : index
    %152 = vector.load %arg12[%c0_54, %c0_55] : memref<512x128xbf16, #tpu.memory_space<vmem>>, vector<512x128xbf16>
    %153 = arith.truncf %151 : vector<64x512xf32> to vector<64x512xbf16>
    %cst_56 = arith.constant dense<0.000000e+00> : vector<64x128xf32>
    %154 = tpu.matmul %153, %152, %cst_56 {dimension_numbers = #tpu.dot_dimension_numbers<[1], [0], [0], [1], [0, 0, 1, 1], [], []>} : vector<64x512xbf16>, vector<512x128xbf16>, vector<64x128xf32> -> vector<64x128xf32>
    %155 = arith.addf %113, %154 : vector<64x128xf32>
    %c0_57 = arith.constant 0 : index
    %c0_58 = arith.constant 0 : index
    %156 = vector.load %arg13[%c0_57, %c0_58] : memref<1x128xf32, #tpu.memory_space<vmem>>, vector<1x128xf32>
    %157 = vector.broadcast %156 : vector<1x128xf32> to vector<64x128xf32>
    %158 = arith.addf %155, %157 : vector<64x128xf32>
    %cst_59 = arith.constant dense<0.000000e+00> : vector<64xf32>
    %159 = vector.multi_reduction <add>, %158, %cst_59 [1] : vector<64x128xf32> to vector<64xf32>
    %160 = vector.shape_cast %159 : vector<64xf32> to vector<64x1xf32>
    %cst_60 = arith.constant 1.280000e+02 : f32
    %161 = vector.broadcast %cst_60 : f32 to vector<64x1xf32>
    %162 = arith.divf %160, %161 : vector<64x1xf32>
    %163 = vector.broadcast %162 : vector<64x1xf32> to vector<64x128xf32>
    %164 = arith.subf %158, %163 : vector<64x128xf32>
    %165 = arith.mulf %164, %164 : vector<64x128xf32>
    %cst_61 = arith.constant dense<0.000000e+00> : vector<64xf32>
    %166 = vector.multi_reduction <add>, %165, %cst_61 [1] : vector<64x128xf32> to vector<64xf32>
    %167 = vector.shape_cast %166 : vector<64xf32> to vector<64x1xf32>
    %cst_62 = arith.constant 1.280000e+02 : f32
    %168 = vector.broadcast %cst_62 : f32 to vector<64x1xf32>
    %169 = arith.divf %167, %168 : vector<64x1xf32>
    %170 = vector.broadcast %162 : vector<64x1xf32> to vector<64x128xf32>
    %171 = arith.subf %158, %170 : vector<64x128xf32>
    %cst_63 = arith.constant 9.99999974E-6 : f32
    %172 = vector.broadcast %cst_63 : f32 to vector<64x1xf32>
    %173 = arith.addf %169, %172 : vector<64x1xf32>
    %174 = math.rsqrt %173 : vector<64x1xf32>
    %175 = vector.broadcast %174 : vector<64x1xf32> to vector<64x128xf32>
    %176 = arith.mulf %171, %175 : vector<64x128xf32>
    %c0_64 = arith.constant 0 : index
    %c0_65 = arith.constant 0 : index
    %177 = vector.load %arg14[%c0_64, %c0_65] : memref<1x128xf32, #tpu.memory_space<vmem>>, vector<1x128xf32>
    %178 = vector.broadcast %177 : vector<1x128xf32> to vector<64x128xf32>
    %179 = arith.mulf %176, %178 : vector<64x128xf32>
    %c0_66 = arith.constant 0 : index
    %c0_67 = arith.constant 0 : index
    %180 = vector.load %arg15[%c0_66, %c0_67] : memref<1x128xf32, #tpu.memory_space<vmem>>, vector<1x128xf32>
    %181 = vector.broadcast %180 : vector<1x128xf32> to vector<64x128xf32>
    %182 = arith.addf %179, %181 : vector<64x128xf32>
    %183 = vector.shape_cast %182 : vector<64x128xf32> to vector<4x16x128xf32>
    %c0_68 = arith.constant 0 : index
    %c0_69 = arith.constant 0 : index
    %184 = vector.load %arg17[%c0_68, %c0_69] : memref<4x16xf32, #tpu.memory_space<vmem>>, vector<4x16xf32>
    %185 = vector.shape_cast %184 : vector<4x16xf32> to vector<4x16x1xf32>
    %186 = vector.broadcast %185 : vector<4x16x1xf32> to vector<4x16x128xf32>
    %187 = arith.mulf %186, %183 : vector<4x16x128xf32>
    %cst_70 = arith.constant dense<0.000000e+00> : vector<4x128xf32>
    %188 = vector.multi_reduction <add>, %187, %cst_70 [1] : vector<4x16x128xf32> to vector<4x128xf32>
    %c0_71 = arith.constant 0 : index
    %c0_72 = arith.constant 0 : index
    %189 = vector.load %arg16[%c0_71, %c0_72] : memref<128x128xbf16, #tpu.memory_space<vmem>>, vector<128x128xbf16>
    %190 = arith.truncf %188 : vector<4x128xf32> to vector<4x128xbf16>
    %cst_73 = arith.constant dense<0.000000e+00> : vector<4x128xf32>
    %191 = tpu.matmul %190, %189, %cst_73 {dimension_numbers = #tpu.dot_dimension_numbers<[1], [0], [0], [1], [0, 0, 1, 1], [], []>} : vector<4x128xbf16>, vector<128x128xbf16>, vector<4x128xf32> -> vector<4x128xf32>
    %c0_74 = arith.constant 0 : index
    %c0_75 = arith.constant 0 : index
    %192 = vector.load %arg19[%c0_74, %c0_75] : memref<16x16xf32, #tpu.memory_space<vmem>>, vector<16x16xf32>
    %c0_76 = arith.constant 0 : index
    %c0_77 = arith.constant 0 : index
    %193 = vector.load %arg18[%c0_76, %c0_77] : memref<16x128xf32, #tpu.memory_space<vmem>>, vector<16x128xf32>
    %194 = arith.truncf %192 : vector<16x16xf32> to vector<16x16xbf16>
    %195 = arith.truncf %193 : vector<16x128xf32> to vector<16x128xbf16>
    %cst_78 = arith.constant dense<0.000000e+00> : vector<16x128xf32>
    %196 = tpu.matmul %194, %195, %cst_78 {dimension_numbers = #tpu.dot_dimension_numbers<[1], [0], [0], [1], [0, 0, 1, 1], [], []>} : vector<16x16xbf16>, vector<16x128xbf16>, vector<16x128xf32> -> vector<16x128xf32>
    %c0_79 = arith.constant 0 : index
    %c0_80 = arith.constant 0 : index
    %197 = vector.load %arg21[%c0_79, %c0_80] : memref<128x128xbf16, #tpu.memory_space<vmem>>, vector<128x128xbf16>
    %198 = arith.truncf %196 : vector<16x128xf32> to vector<16x128xbf16>
    %cst_81 = arith.constant dense<0.000000e+00> : vector<16x128xf32>
    %199 = tpu.matmul %198, %197, %cst_81 {dimension_numbers = #tpu.dot_dimension_numbers<[1], [0], [0], [1], [0, 0, 1, 1], [], []>} : vector<16x128xbf16>, vector<128x128xbf16>, vector<16x128xf32> -> vector<16x128xf32>
    %c0_82 = arith.constant 0 : index
    %c0_83 = arith.constant 0 : index
    %200 = vector.load %arg22[%c0_82, %c0_83] : memref<1x128xf32, #tpu.memory_space<vmem>>, vector<1x128xf32>
    %201 = vector.broadcast %200 : vector<1x128xf32> to vector<16x128xf32>
    %202 = arith.addf %199, %201 : vector<16x128xf32>
    %cst_84 = arith.constant 0.000000e+00 : f32
    %203 = vector.broadcast %cst_84 : f32 to vector<16x128xf32>
    %204 = arith.maximumf %202, %203 : vector<16x128xf32>
    %205 = arith.truncf %192 : vector<16x16xf32> to vector<16x16xbf16>
    %206 = arith.truncf %204 : vector<16x128xf32> to vector<16x128xbf16>
    %cst_85 = arith.constant dense<0.000000e+00> : vector<16x128xf32>
    %207 = tpu.matmul %205, %206, %cst_85 {dimension_numbers = #tpu.dot_dimension_numbers<[1], [0], [0], [1], [0, 0, 1, 1], [], []>} : vector<16x16xbf16>, vector<16x128xbf16>, vector<16x128xf32> -> vector<16x128xf32>
    %c0_86 = arith.constant 0 : index
    %c0_87 = arith.constant 0 : index
    %208 = vector.load %arg20[%c0_86, %c0_87] : memref<2x16xf32, #tpu.memory_space<vmem>>, vector<2x16xf32>
    %cst_88 = arith.constant dense<0.000000e+00> : vector<2x128xf32>
    %209 = tpu.matmul %208, %207, %cst_88 {dimension_numbers = #tpu.dot_dimension_numbers<[1], [0], [0], [1], [0, 0, 1, 1], [], []>} : vector<2x16xf32>, vector<16x128xf32>, vector<2x128xf32> -> vector<2x128xf32>
    %c0_89 = arith.constant 0 : index
    %c0_90 = arith.constant 0 : index
    %210 = vector.load %arg23[%c0_89, %c0_90] : memref<128x128xbf16, #tpu.memory_space<vmem>>, vector<128x128xbf16>
    %211 = arith.truncf %209 : vector<2x128xf32> to vector<2x128xbf16>
    %cst_91 = arith.constant dense<0.000000e+00> : vector<2x128xf32>
    %212 = tpu.matmul %211, %210, %cst_91 {dimension_numbers = #tpu.dot_dimension_numbers<[1], [0], [0], [1], [0, 0, 1, 1], [], []>} : vector<2x128xbf16>, vector<128x128xbf16>, vector<2x128xf32> -> vector<2x128xf32>
    %c0_92 = arith.constant 0 : index
    %c0_93 = arith.constant 0 : index
    %213 = vector.load %arg24[%c0_92, %c0_93] : memref<1x128xf32, #tpu.memory_space<vmem>>, vector<1x128xf32>
    %214 = vector.broadcast %213 : vector<1x128xf32> to vector<2x128xf32>
    %215 = arith.addf %212, %214 : vector<2x128xf32>
    %216 = arith.mulf %215, %215 : vector<2x128xf32>
    %cst_94 = arith.constant dense<0.000000e+00> : vector<2xf32>
    %217 = vector.multi_reduction <add>, %216, %cst_94 [1] : vector<2x128xf32> to vector<2xf32>
    %218 = vector.shape_cast %217 : vector<2xf32> to vector<2x1xf32>
    %cst_95 = arith.constant 9.99999996E-13 : f32
    %219 = vector.broadcast %cst_95 : f32 to vector<2x1xf32>
    %220 = arith.addf %218, %219 : vector<2x1xf32>
    %221 = math.rsqrt %220 : vector<2x1xf32>
    %222 = vector.broadcast %221 : vector<2x1xf32> to vector<2x128xf32>
    %223 = arith.mulf %215, %222 : vector<2x128xf32>
    %224 = arith.mulf %191, %191 : vector<4x128xf32>
    %cst_96 = arith.constant dense<0.000000e+00> : vector<4xf32>
    %225 = vector.multi_reduction <add>, %224, %cst_96 [1] : vector<4x128xf32> to vector<4xf32>
    %226 = vector.shape_cast %225 : vector<4xf32> to vector<4x1xf32>
    %cst_97 = arith.constant 9.99999996E-13 : f32
    %227 = vector.broadcast %cst_97 : f32 to vector<4x1xf32>
    %228 = arith.addf %226, %227 : vector<4x1xf32>
    %229 = math.rsqrt %228 : vector<4x1xf32>
    %230 = vector.broadcast %229 : vector<4x1xf32> to vector<4x128xf32>
    %231 = arith.mulf %191, %230 : vector<4x128xf32>
    %c0_98 = arith.constant 0 : index
    %c0_99 = arith.constant 0 : index
    %232 = memref.load %arg25[%c0_98, %c0_99] : memref<1x1xf32, #tpu.memory_space<smem>>
    %233 = math.exp %232 : f32
    %cst_100 = arith.constant dense<0.000000e+00> : vector<2x4xf32>
    %234 = tpu.matmul %223, %231, %cst_100 {dimension_numbers = #tpu.dot_dimension_numbers<[1], [1], [0], [0], [0, 0, 1, 0], [], []>} : vector<2x128xf32>, vector<4x128xf32>, vector<2x4xf32> -> vector<2x4xf32>
    %235 = vector.broadcast %233 : f32 to vector<2x4xf32>
    %236 = arith.mulf %235, %234 : vector<2x4xf32>
    %c0_101 = arith.constant 0 : index
    %c0_102 = arith.constant 0 : index
    %237 = vector.load %arg26[%c0_101, %c0_102] : memref<2x4xf32, #tpu.memory_space<vmem>>, vector<2x4xf32>
    tpu.vector_store %arg26[%c0_101, %c0_102], %236 {strides = array<i32>} : memref<2x4xf32, #tpu.memory_space<vmem>>, vector<2x4xf32>,
    return
  }
}

</mosaic_0001>

<llo_original>
// kernel: custom_clip_forward.1
$region0: #{custom_clip_forward.1}
  #allocation0 [shape = 'u32[]', space=smem, size = 0x4, offset = 0x4, fixed_abs, tag = 'smem constant byte address 0x4 - core index']
  #allocation1 [shape = 'u32[144,128]{1,0:T(1,128)}', space=vmem, size = 0x12000, scoped, tag = 'internal scratch']
  #allocation2 [shape = 'f32[1,1]{1,0:T(1,128)S(6)}', space=smem, size = 0x200, scoped, tag = 'scoped memory for custom_clip_forward.1']
  %s0 = inlined_call_operand.vmem [shape: f32[4,16,128], index: 0, kind: input, shape index: {}]
  %s1 = inlined_call_operand.vmem [shape: f32[16,128], index: 1, kind: input, shape index: {}]
  %s2 = inlined_call_operand.vmem [shape: f32[1,128], index: 2, kind: input, shape index: {}]
  %s3 = inlined_call_operand.vmem [shape: f32[1,128], index: 3, kind: input, shape index: {}]
  %s4 = inlined_call_operand.vmem [shape: bf16[128,384], index: 4, kind: input, shape index: {}]
  %s5 = inlined_call_operand.vmem [shape: f32[1,384], index: 5, kind: input, shape index: {}]
  %s6 = inlined_call_operand.vmem [shape: bf16[128,128], index: 6, kind: input, shape index: {}]
  %s7 = inlined_call_operand.vmem [shape: f32[1,128], index: 7, kind: input, shape index: {}]
  %s8 = inlined_call_operand.vmem [shape: f32[1,128], index: 8, kind: input, shape index: {}]
  %s9 = inlined_call_operand.vmem [shape: f32[1,128], index: 9, kind: input, shape index: {}]
  %s10 = inlined_call_operand.vmem [shape: bf16[128,512], index: 10, kind: input, shape index: {}]
  %s11 = inlined_call_operand.vmem [shape: f32[1,512], index: 11, kind: input, shape index: {}]
  %s12 = inlined_call_operand.vmem [shape: bf16[512,128], index: 12, kind: input, shape index: {}]
  %s13 = inlined_call_operand.vmem [shape: f32[1,128], index: 13, kind: input, shape index: {}]
  %s14 = inlined_call_operand.vmem [shape: f32[1,128], index: 14, kind: input, shape index: {}]
  %s15 = inlined_call_operand.vmem [shape: f32[1,128], index: 15, kind: input, shape index: {}]
  %s16 = inlined_call_operand.vmem [shape: bf16[128,128], index: 16, kind: input, shape index: {}]
  %s17 = inlined_call_operand.vmem [shape: f32[4,16], index: 17, kind: input, shape index: {}]
  %s18 = inlined_call_operand.vmem [shape: f32[16,128], index: 18, kind: input, shape index: {}]
  %s19 = inlined_call_operand.vmem [shape: f32[16,16], index: 19, kind: input, shape index: {}]
  %s20 = inlined_call_operand.vmem [shape: f32[2,16], index: 20, kind: input, shape index: {}]
  %s21 = inlined_call_operand.vmem [shape: bf16[128,128], index: 21, kind: input, shape index: {}]
  %s22 = inlined_call_operand.vmem [shape: f32[1,128], index: 22, kind: input, shape index: {}]
  %s23 = inlined_call_operand.vmem [shape: bf16[128,128], index: 23, kind: input, shape index: {}]
  %s24 = inlined_call_operand.vmem [shape: f32[1,128], index: 24, kind: input, shape index: {}]
  %s25 = inlined_call_operand.<no memory space> [shape: f32[1,1], index: 25, kind: input, shape index: {}]
  %s26 = inlined_call_operand.hbm [shape: f32[2,4], index: 26, kind: output, shape index: {}]
  %s27 = sld [smem:[#allocation0]]
  $region114: #{custom_clip_forward.1} parent=0
    _
  %s29 = ssub.s32 1, %s27
  %s30 = scalar_select 0, %s29, %s27
  %31 = sst [smem:[#allocation2]] %s25
  $region1: #{custom_clip_forward.1} parent=0
    #allocation3 [shape = 'u8[1024]{0}', space=vmem, size = 0x400, scoped, tag = 'output window, operand 0, single buffered']
    #allocation4 [shape = 's32[1]{0}', space=sflag, size = 0x4, scoped, tag = 'scoped memory for custom_clip_forward.1']
    %32 = vsyncpa [#allocation4], 0
    // Predicated region
    $region2: #{custom_clip_forward.1} parent=1 // pred_check
      _
    $region3: #{custom_clip_forward.1} parent=1 // pred_check_branch
      %34 = sbr.rel (0) target = $region5
    $region4: #{custom_clip_forward.1} parent=1 // pred_region
      _
    $region5: #{custom_clip_forward.1} parent=1 // pred_fallthru
      _
    // Predicated region
    $region6: #{custom_clip_forward.1} parent=1 // pred_check
      _
    $region7: #{custom_clip_forward.1} parent=1 // pred_check_branch
      %36 = sbr.rel (0) target = $region9
    $region8: #{custom_clip_forward.1} parent=1 // pred_region
      _
    $region9: #{custom_clip_forward.1} parent=1 // pred_fallthru
      _
    // Predicated region
    $region10: #{custom_clip_forward.1} parent=1 // pred_check
      _
    $region11: #{custom_clip_forward.1} parent=1 // pred_check_branch
      %38 = sbr.rel (0) target = $region13
    $region12: #{custom_clip_forward.1} parent=1 // pred_region
      _
    $region13: #{custom_clip_forward.1} parent=1 // pred_fallthru
      _
    // Predicated region
    $region14: #{custom_clip_forward.1} parent=1 // pred_check
      _
    $region15: #{custom_clip_forward.1} parent=1 // pred_check_branch
      %40 = sbr.rel (0) target = $region17
    $region16: #{custom_clip_forward.1} parent=1 // pred_region
      _
    $region17: #{custom_clip_forward.1} parent=1 // pred_fallthru
      _
    // Predicated region
    $region18: #{custom_clip_forward.1} parent=1 // pred_check
      _
    $region19: #{custom_clip_forward.1} parent=1 // pred_check_branch
      %42 = sbr.rel (0) target = $region21
    $region20: #{custom_clip_forward.1} parent=1 // pred_region
      _
    $region21: #{custom_clip_forward.1} parent=1 // pred_fallthru
      _
    // Predicated region
    $region22: #{custom_clip_forward.1} parent=1 // pred_check
      _
    $region23: #{custom_clip_forward.1} parent=1 // pred_check_branch
      %44 = sbr.rel (0) target = $region25
    $region24: #{custom_clip_forward.1} parent=1 // pred_region
      _
    $region25: #{custom_clip_forward.1} parent=1 // pred_fallthru
      _
    // Predicated region
    $region26: #{custom_clip_forward.1} parent=1 // pred_check
      _
    $region27: #{custom_clip_forward.1} parent=1 // pred_check_branch
      %46 = sbr.rel (0) target = $region29
    $region28: #{custom_clip_forward.1} parent=1 // pred_region
      _
    $region29: #{custom_clip_forward.1} parent=1 // pred_fallthru
      _
    // Predicated region
    $region30: #{custom_clip_forward.1} parent=1 // pred_check
      _
    $region31: #{custom_clip_forward.1} parent=1 // pred_check_branch
      %48 = sbr.rel (0) target = $region33
    $region32: #{custom_clip_forward.1} parent=1 // pred_region
      _
    $region33: #{custom_clip_forward.1} parent=1 // pred_fallthru
      _
    // Predicated region
    $region34: #{custom_clip_forward.1} parent=1 // pred_check
      _
    $region35: #{custom_clip_forward.1} parent=1 // pred_check_branch
      %50 = sbr.rel (0) target = $region37
    $region36: #{custom_clip_forward.1} parent=1 // pred_region
      _
    $region37: #{custom_clip_forward.1} parent=1 // pred_fallthru
      _
    // Predicated region
    $region38: #{custom_clip_forward.1} parent=1 // pred_check
      _
    $region39: #{custom_clip_forward.1} parent=1 // pred_check_branch
      %52 = sbr.rel (0) target = $region41
    $region40: #{custom_clip_forward.1} parent=1 // pred_region
      _
    $region41: #{custom_clip_forward.1} parent=1 // pred_fallthru
      _
    // Predicated region
    $region42: #{custom_clip_forward.1} parent=1 // pred_check
      _
    $region43: #{custom_clip_forward.1} parent=1 // pred_check_branch
      %54 = sbr.rel (0) target = $region45
    $region44: #{custom_clip_forward.1} parent=1 // pred_region
      _
    $region45: #{custom_clip_forward.1} parent=1 // pred_fallthru
      _
    // Predicated region
    $region46: #{custom_clip_forward.1} parent=1 // pred_check
      _
    $region47: #{custom_clip_forward.1} parent=1 // pred_check_branch
      %56 = sbr.rel (0) target = $region49
    $region48: #{custom_clip_forward.1} parent=1 // pred_region
      _
    $region49: #{custom_clip_forward.1} parent=1 // pred_fallthru
      _
    // Predicated region
    $region50: #{custom_clip_forward.1} parent=1 // pred_check
      _
    $region51: #{custom_clip_forward.1} parent=1 // pred_check_branch
      %58 = sbr.rel (0) target = $region53
    $region52: #{custom_clip_forward.1} parent=1 // pred_region
      _
    $region53: #{custom_clip_forward.1} parent=1 // pred_fallthru
      _
    // Predicated region
    $region54: #{custom_clip_forward.1} parent=1 // pred_check
      _
    $region55: #{custom_clip_forward.1} parent=1 // pred_check_branch
      %60 = sbr.rel (0) target = $region57
    $region56: #{custom_clip_forward.1} parent=1 // pred_region
      _
    $region57: #{custom_clip_forward.1} parent=1 // pred_fallthru
      _
    // Predicated region
    $region58: #{custom_clip_forward.1} parent=1 // pred_check
      _
    $region59: #{custom_clip_forward.1} parent=1 // pred_check_branch
      %62 = sbr.rel (0) target = $region61
    $region60: #{custom_clip_forward.1} parent=1 // pred_region
      _
    $region61: #{custom_clip_forward.1} parent=1 // pred_fallthru
      _
    // Predicated region
    $region62: #{custom_clip_forward.1} parent=1 // pred_check
      _
    $region63: #{custom_clip_forward.1} parent=1 // pred_check_branch
      %64 = sbr.rel (0) target = $region65
    $region64: #{custom_clip_forward.1} parent=1 // pred_region
      _
    $region65: #{custom_clip_forward.1} parent=1 // pred_fallthru
      _
    // Predicated region
    $region66: #{custom_clip_forward.1} parent=1 // pred_check
      _
    $region67: #{custom_clip_forward.1} parent=1 // pred_check_branch
      %66 = sbr.rel (0) target = $region69
    $region68: #{custom_clip_forward.1} parent=1 // pred_region
      _
    $region69: #{custom_clip_forward.1} parent=1 // pred_fallthru
      _
    // Predicated region
    $region70: #{custom_clip_forward.1} parent=1 // pred_check
      _
    $region71: #{custom_clip_forward.1} parent=1 // pred_check_branch
      %68 = sbr.rel (0) target = $region73
    $region72: #{custom_clip_forward.1} parent=1 // pred_region
      _
    $region73: #{custom_clip_forward.1} parent=1 // pred_fallthru
      _
    // Predicated region
    $region74: #{custom_clip_forward.1} parent=1 // pred_check
      _
    $region75: #{custom_clip_forward.1} parent=1 // pred_check_branch
      %70 = sbr.rel (0) target = $region77
    $region76: #{custom_clip_forward.1} parent=1 // pred_region
      _
    $region77: #{custom_clip_forward.1} parent=1 // pred_fallthru
      _
    // Predicated region
    $region78: #{custom_clip_forward.1} parent=1 // pred_check
      _
    $region79: #{custom_clip_forward.1} parent=1 // pred_check_branch
      %72 = sbr.rel (0) target = $region81
    $region80: #{custom_clip_forward.1} parent=1 // pred_region
      _
    $region81: #{custom_clip_forward.1} parent=1 // pred_fallthru
      _
    // Predicated region
    $region82: #{custom_clip_forward.1} parent=1 // pred_check
      _
    $region83: #{custom_clip_forward.1} parent=1 // pred_check_branch
      %74 = sbr.rel (0) target = $region85
    $region84: #{custom_clip_forward.1} parent=1 // pred_region
      _
    $region85: #{custom_clip_forward.1} parent=1 // pred_fallthru
      _
    // Predicated region
    $region86: #{custom_clip_forward.1} parent=1 // pred_check
      _
    $region87: #{custom_clip_forward.1} parent=1 // pred_check_branch
      %76 = sbr.rel (0) target = $region89
    $region88: #{custom_clip_forward.1} parent=1 // pred_region
      _
    $region89: #{custom_clip_forward.1} parent=1 // pred_fallthru
      _
    // Predicated region
    $region90: #{custom_clip_forward.1} parent=1 // pred_check
      _
    $region91: #{custom_clip_forward.1} parent=1 // pred_check_branch
      %78 = sbr.rel (0) target = $region93
    $region92: #{custom_clip_forward.1} parent=1 // pred_region
      _
    $region93: #{custom_clip_forward.1} parent=1 // pred_fallthru
      _
    // Predicated region
    $region94: #{custom_clip_forward.1} parent=1 // pred_check
      _
    $region95: #{custom_clip_forward.1} parent=1 // pred_check_branch
      %80 = sbr.rel (0) target = $region97
    $region96: #{custom_clip_forward.1} parent=1 // pred_region
      _
    $region97: #{custom_clip_forward.1} parent=1 // pred_fallthru
      _
    // Predicated region
    $region98: #{custom_clip_forward.1} parent=1 // pred_check
      _
    $region99: #{custom_clip_forward.1} parent=1 // pred_check_branch
      %82 = sbr.rel (0) target = $region101
    $region100: #{custom_clip_forward.1} parent=1 // pred_region
      _
    $region101: #{custom_clip_forward.1} parent=1 // pred_fallthru
      _
    // Predicated region
    $region102: #{custom_clip_forward.1} parent=1 // pred_check
      _
    $region103: #{custom_clip_forward.1} parent=1 // pred_check_branch
      %84 = sbr.rel (0) target = $region105
    $region104: #{custom_clip_forward.1} parent=1 // pred_region
      _
    $region105: #{custom_clip_forward.1} parent=1 // pred_fallthru
      _
    %v86 = vld [vmem:[%s0] sm:$0xff]
    %v87 = vld [vmem:[%s0 + $0x8] sm:$0xff]
    %v88 = vld [vmem:[%s0 + $0x10] sm:$0xff]
    %v89 = vld [vmem:[%s0 + $0x18] sm:$0xff]
    %v90 = vld [vmem:[%s0 + $0x20] sm:$0xff]
    %v91 = vld [vmem:[%s0 + $0x28] sm:$0xff]
    %v92 = vld [vmem:[%s0 + $0x30] sm:$0xff]
    %v93 = vld [vmem:[%s0 + $0x38] sm:$0xff]
    %v94 = vld [vmem:[%s1] sm:$0xff]
    %v95 = vld [vmem:[%s1 + $0x8] sm:$0xff]
    %v96 = vadd.f32 %v86, %v94
    %v97 = vadd.f32 %v87, %v95
    %v98 = vadd.f32 %v88, %v94
    %v99 = vadd.f32 %v89, %v95
    %v100 = vadd.f32 %v90, %v94
    %v101 = vadd.f32 %v91, %v95
    %v102 = vadd.f32 %v92, %v94
    %v103 = vadd.f32 %v93, %v95
    %104 = vadd.xlane.f32.xlu0 %v96
    %v105 = vpop.xlane.xlu0 %104
    %106 = vadd.xlane.f32.xlu0 %v97
    %v107 = vpop.xlane.xlu0 %106
    %108 = vadd.xlane.f32.xlu0 %v98
    %v109 = vpop.xlane.xlu0 %108
    %110 = vadd.xlane.f32.xlu0 %v99
    %v111 = vpop.xlane.xlu0 %110
    %112 = vadd.xlane.f32.xlu0 %v100
    %v113 = vpop.xlane.xlu0 %112
    %114 = vadd.xlane.f32.xlu0 %v101
    %v115 = vpop.xlane.xlu0 %114
    %116 = vadd.xlane.f32.xlu0 %v102
    %v117 = vpop.xlane.xlu0 %116
    %118 = vadd.xlane.f32.xlu0 %v103
    %v119 = vpop.xlane.xlu0 %118
    %v120 = vrcp.pop 128.0
    %v121 = vmul.f32 %v105, %v120
    %v122 = vmul.f32 %v107, %v120
    %v123 = vmul.f32 %v109, %v120
    %v124 = vmul.f32 %v111, %v120
    %v125 = vmul.f32 %v113, %v120
    %v126 = vmul.f32 %v115, %v120
    %v127 = vmul.f32 %v117, %v120
    %v128 = vmul.f32 %v119, %v120
    %v129 = vsub.f32 %v96, %v121
    %v130 = vsub.f32 %v97, %v122
    %v131 = vsub.f32 %v98, %v123
    %v132 = vsub.f32 %v99, %v124
    %v133 = vsub.f32 %v100, %v125
    %v134 = vsub.f32 %v101, %v126
    %v135 = vsub.f32 %v102, %v127
    %v136 = vsub.f32 %v103, %v128
    %v137 = vmul.f32 %v129, %v129
    %v138 = vmul.f32 %v130, %v130
    %v139 = vmul.f32 %v131, %v131
    %v140 = vmul.f32 %v132, %v132
    %v141 = vmul.f32 %v133, %v133
    %v142 = vmul.f32 %v134, %v134
    %v143 = vmul.f32 %v135, %v135
    %v144 = vmul.f32 %v136, %v136
    %145 = vadd.xlane.f32.xlu0 %v137
    %v146 = vpop.xlane.xlu0 %145
    %147 = vadd.xlane.f32.xlu0 %v138
    %v148 = vpop.xlane.xlu0 %147
    %149 = vadd.xlane.f32.xlu0 %v139
    %v150 = vpop.xlane.xlu0 %149
    %151 = vadd.xlane.f32.xlu0 %v140
    %v152 = vpop.xlane.xlu0 %151
    %153 = vadd.xlane.f32.xlu0 %v141
    %v154 = vpop.xlane.xlu0 %153
    %155 = vadd.xlane.f32.xlu0 %v142
    %v156 = vpop.xlane.xlu0 %155
    %157 = vadd.xlane.f32.xlu0 %v143
    %v158 = vpop.xlane.xlu0 %157
    %159 = vadd.xlane.f32.xlu0 %v144
    %v160 = vpop.xlane.xlu0 %159
    %v161 = vmul.f32 %v146, %v120
    %v162 = vmul.f32 %v148, %v120
    %v163 = vmul.f32 %v150, %v120
    %v164 = vmul.f32 %v152, %v120
    %v165 = vmul.f32 %v154, %v120
    %v166 = vmul.f32 %v156, %v120
    %v167 = vmul.f32 %v158, %v120
    %v168 = vmul.f32 %v160, %v120
    %v169 = vadd.f32 %v161, 1e-05
    %v170 = vadd.f32 %v162, 1e-05
    %v171 = vadd.f32 %v163, 1e-05
    %v172 = vadd.f32 %v164, 1e-05
    %v173 = vadd.f32 %v165, 1e-05
    %v174 = vadd.f32 %v166, 1e-05
    %v175 = vadd.f32 %v167, 1e-05
    %v176 = vadd.f32 %v168, 1e-05
    %v177 = vrsqrt.pop %v169
    %v178 = vrsqrt.pop %v170
    %v179 = vrsqrt.pop %v171
    %v180 = vrsqrt.pop %v172
    %v181 = vrsqrt.pop %v173
    %v182 = vrsqrt.pop %v174
    %v183 = vrsqrt.pop %v175
    %v184 = vrsqrt.pop %v176
    %v185 = vmul.f32 %v129, %v177
    %v186 = vmul.f32 %v130, %v178
    %v187 = vmul.f32 %v131, %v179
    %v188 = vmul.f32 %v132, %v180
    %v189 = vmul.f32 %v133, %v181
    %v190 = vmul.f32 %v134, %v182
    %v191 = vmul.f32 %v135, %v183
    %v192 = vmul.f32 %v136, %v184
    %v193 = vld [vmem:[%s2] sm:$0x1]
    %v195 = vlaneseq
    %v196 = vshrl.u32 %v195, 7
    %v197 = vsub.s32 0, %v196
    %v198 = vrot.slane %v193, %v197
    %v200 = vmul.f32 %v185, %v198
    %v201 = vmul.f32 %v186, %v198
    %v202 = vmul.f32 %v187, %v198
    %v203 = vmul.f32 %v188, %v198
    %v204 = vmul.f32 %v189, %v198
    %v205 = vmul.f32 %v190, %v198
    %v206 = vmul.f32 %v191, %v198
    %v207 = vmul.f32 %v192, %v198
    %v208 = vld [vmem:[%s3] sm:$0x1]
    %v210 = vlaneseq
    %v211 = vshrl.u32 %v210, 7
    %v212 = vsub.s32 0, %v211
    %v213 = vrot.slane %v208, %v212
    %v215 = vadd.f32 %v200, %v213
    %v216 = vadd.f32 %v201, %v213
    %v217 = vadd.f32 %v202, %v213
    %v218 = vadd.f32 %v203, %v213
    %v219 = vadd.f32 %v204, %v213
    %v220 = vadd.f32 %v205, %v213
    %v221 = vadd.f32 %v206, %v213
    %v222 = vadd.f32 %v207, %v213
    %v223 = vld [vmem:[%s4] sm:$0xff]
    %v224 = vld [vmem:[%s4 + $0x8] sm:$0xf]
    %v225 = vld [vmem:[%s4 + $0xc] sm:$0xff]
    %v226 = vld [vmem:[%s4 + $0x14] sm:$0xf]
    %v227 = vld [vmem:[%s4 + $0x18] sm:$0xff]
    %v228 = vld [vmem:[%s4 + $0x20] sm:$0xf]
    %v229 = vld [vmem:[%s4 + $0x24] sm:$0xff]
    %v230 = vld [vmem:[%s4 + $0x2c] sm:$0xf]
    %v231 = vld [vmem:[%s4 + $0x30] sm:$0xff]
    %v232 = vld [vmem:[%s4 + $0x38] sm:$0xf]
    %v233 = vld [vmem:[%s4 + $0x3c] sm:$0xff]
    %v234 = vld [vmem:[%s4 + $0x44] sm:$0xf]
    %v235 = vld [vmem:[%s4 + $0x48] sm:$0xff]
    %v236 = vld [vmem:[%s4 + $0x50] sm:$0xf]
    %v237 = vld [vmem:[%s4 + $0x54] sm:$0xff]
    %v238 = vld [vmem:[%s4 + $0x5c] sm:$0xf]
    %v239 = vld [vmem:[%s4 + $0x60] sm:$0xff]
    %v240 = vld [vmem:[%s4 + $0x68] sm:$0xf]
    %v241 = vld [vmem:[%s4 + $0x6c] sm:$0xff]
    %v242 = vld [vmem:[%s4 + $0x74] sm:$0xf]
    %v243 = vld [vmem:[%s4 + $0x78] sm:$0xff]
    %v244 = vld [vmem:[%s4 + $0x80] sm:$0xf]
    %v245 = vld [vmem:[%s4 + $0x84] sm:$0xff]
    %v246 = vld [vmem:[%s4 + $0x8c] sm:$0xf]
    %v247 = vld [vmem:[%s4 + $0x90] sm:$0xff]
    %v248 = vld [vmem:[%s4 + $0x98] sm:$0xf]
    %v249 = vld [vmem:[%s4 + $0x9c] sm:$0xff]
    %v250 = vld [vmem:[%s4 + $0xa4] sm:$0xf]
    %v251 = vld [vmem:[%s4 + $0xa8] sm:$0xff]
    %v252 = vld [vmem:[%s4 + $0xb0] sm:$0xf]
    %v253 = vld [vmem:[%s4 + $0xb4] sm:$0xff]
    %v254 = vld [vmem:[%s4 + $0xbc] sm:$0xf]
    %v255 = vpack.c.bf16 %v216, %v215
    %v256 = vpack.c.bf16 %v218, %v217
    %v257 = vpack.c.bf16 %v220, %v219
    %v258 = vpack.c.bf16 %v222, %v221
    %v259 = vld [vmem:[%s5] sm:$0x7]
    %v261 = vlaneseq
    %v262 = vshrl.u32 %v261, 7
    %v263 = vsub.s32 0, %v262
    %v264 = vrot.slane %v259, %v263
    %v265 = vlaneseq
    %v266 = vshrl.u32 %v265, 7
    %v267 = vsub.s32 1, %v266
    %v268 = vrot.slane %v259, %v267
    %v269 = vlaneseq
    %v270 = vshrl.u32 %v269, 7
    %v271 = vsub.s32 2, %v270
    %v272 = vrot.slane %v259, %v271
    %v308 = vunpack.c.l.b16 %v223
    %v309 = vunpack.c.h.b16 %v223
    %v310 = vunpack.c.l.b16 %v224
    %v311 = vunpack.c.l.b16 %v225
    %v312 = vunpack.c.h.b16 %v225
    %v313 = vunpack.c.l.b16 %v226
    %v314 = vunpack.c.l.b16 %v227
    %v315 = vunpack.c.h.b16 %v227
    %v316 = vunpack.c.l.b16 %v228
    %v317 = vunpack.c.l.b16 %v229
    %v318 = vunpack.c.h.b16 %v229
    %v319 = vunpack.c.l.b16 %v230
    %v320 = vunpack.c.l.b16 %v231
    %v321 = vunpack.c.h.b16 %v231
    %v322 = vunpack.c.l.b16 %v232
    %v323 = vunpack.c.l.b16 %v233
    %v324 = vunpack.c.h.b16 %v233
    %v325 = vunpack.c.l.b16 %v234
    %v326 = vunpack.c.l.b16 %v235
    %v327 = vunpack.c.h.b16 %v235
    %v328 = vunpack.c.l.b16 %v236
    %v329 = vunpack.c.l.b16 %v237
    %v330 = vunpack.c.h.b16 %v237
    %v331 = vunpack.c.l.b16 %v238
    %v332 = vunpack.c.l.b16 %v239
    %v333 = vunpack.c.h.b16 %v239
    %v334 = vunpack.c.l.b16 %v240
    %v335 = vunpack.c.l.b16 %v241
    %v336 = vunpack.c.h.b16 %v241
    %v337 = vunpack.c.l.b16 %v242
    %v338 = vunpack.c.l.b16 %v243
    %v339 = vunpack.c.h.b16 %v243
    %v340 = vunpack.c.l.b16 %v244
    %v341 = vunpack.c.l.b16 %v245
    %v342 = vunpack.c.h.b16 %v245
    %v343 = vunpack.c.l.b16 %v246
    %v344 = vunpack.c.l.b16 %v247
    %v345 = vunpack.c.h.b16 %v247
    %v346 = vunpack.c.l.b16 %v248
    %v347 = vunpack.c.l.b16 %v249
    %v348 = vunpack.c.h.b16 %v249
    %v349 = vunpack.c.l.b16 %v250
    %v350 = vunpack.c.l.b16 %v251
    %v351 = vunpack.c.h.b16 %v251
    %v352 = vunpack.c.l.b16 %v252
    %v353 = vunpack.c.l.b16 %v253
    %v354 = vunpack.c.h.b16 %v253
    %v355 = vunpack.c.l.b16 %v254
    %v356 = vpack.c.b16 %v311, %v308
    %v357 = vpack.c.b16 %v312, %v309
    %v358 = vpack.c.b16 %v313, %v310
    %v359 = vpack.c.b16 %v317, %v314
    %v360 = vpack.c.b16 %v318, %v315
    %v361 = vpack.c.b16 %v319, %v316
    %v362 = vpack.c.b16 %v323, %v320
    %v363 = vpack.c.b16 %v324, %v321
    %v364 = vpack.c.b16 %v325, %v322
    %v365 = vpack.c.b16 %v329, %v326
    %v366 = vpack.c.b16 %v330, %v327
    %v367 = vpack.c.b16 %v331, %v328
    %v368 = vpack.c.b16 %v335, %v332
    %v369 = vpack.c.b16 %v336, %v333
    %v370 = vpack.c.b16 %v337, %v334
    %v371 = vpack.c.b16 %v341, %v338
    %v372 = vpack.c.b16 %v342, %v339
    %v373 = vpack.c.b16 %v343, %v340
    %v374 = vpack.c.b16 %v347, %v344
    %v375 = vpack.c.b16 %v348, %v345
    %v376 = vpack.c.b16 %v349, %v346
    %v377 = vpack.c.b16 %v353, %v350
    %v378 = vpack.c.b16 %v354, %v351
    %v379 = vpack.c.b16 %v355, %v352
    %404 = vmatprep.subr.bf16.mxu0 %v378
    %405 = vmatpush1.bf16.msra.mxu0 %v377
    %406 = vmatprep.subr.bf16.mxu0 %v375
    %407 = vmatpush1.bf16.msra.mxu0 %v374
    %408 = vmatprep.subr.bf16.mxu0 %v372
    %409 = vmatpush1.bf16.msra.mxu0 %v371
    %410 = vmatprep.subr.bf16.mxu0 %v369
    %411 = vmatpush1.bf16.msra.mxu0 %v368
    %412 = vmatprep.subr.bf16.mxu0 %v366
    %413 = vmatpush1.bf16.msra.mxu0 %v365
    %414 = vmatprep.subr.bf16.mxu0 %v363
    %415 = vmatpush1.bf16.msra.mxu0 %v362
    %416 = vmatprep.subr.bf16.mxu0 %v360
    %417 = vmatpush1.bf16.msra.mxu0 %v359
    %418 = vmatprep.subr.bf16.mxu0 %v357
    %419 = vmatpush1.bf16.msra.mxu0 %v356
    %420 = vmatprep.subr.bf16.mxu0 0
    %421 = vmatpush2.bf16.msra.mxu0 0
    %422 = vmatprep.subr.bf16.mxu0 0
    %423 = vmatpush2.bf16.msra.mxu0 0
    %424 = vmatprep.subr.bf16.mxu0 0
    %425 = vmatpush2.bf16.msra.mxu0 0
    %426 = vmatprep.subr.bf16.mxu0 0
    %427 = vmatpush2.bf16.msra.mxu0 0
    %428 = vmatprep.subr.bf16.mxu0 0
    %429 = vmatpush2.bf16.msra.mxu0 0
    %430 = vmatprep.subr.bf16.mxu0 0
    %431 = vmatpush2.bf16.msra.mxu0 0
    %432 = vmatprep.subr.bf16.mxu0 0
    %433 = vmatpush2.bf16.msra.mxu0 0
    %434 = vmatprep.subr.bf16.mxu0 0
    %435 = vmatpush2.bf16.msra.mxu0 0
    %436 = vmatprep.mubr.bf16.mxu0 0
    %437 = vmatmul.mubr.bf16.gmra.mxu0 %v255
    %v438 = vpop.f32.mrf.mxu0
    %v439 = vadd.f32 %v264, %v438
    %v440 = vpop.f32.mrf.mxu0
    %v441 = vadd.f32 %v268, %v440
    %v442 = vpop.f32.mrf.mxu0
    %v443 = vadd.f32 %v264, %v442
    %v444 = vpop.f32.mrf.mxu0
    %v445 = vadd.f32 %v268, %v444
    %446 = vmatprep.mubr.bf16.mxu0 0
    %447 = vmatmul.mubr.bf16.gmra.mxu0 %v256
    %v448 = vpop.f32.mrf.mxu0
    %v449 = vadd.f32 %v264, %v448
    %v450 = vpop.f32.mrf.mxu0
    %v451 = vadd.f32 %v268, %v450
    %v452 = vpop.f32.mrf.mxu0
    %v453 = vadd.f32 %v264, %v452
    %v454 = vpop.f32.mrf.mxu0
    %v455 = vadd.f32 %v268, %v454
    %456 = vmatprep.mubr.bf16.mxu0 0
    %457 = vmatmul.mubr.bf16.gmra.mxu0 %v257
    %v458 = vpop.f32.mrf.mxu0
    %v459 = vadd.f32 %v264, %v458
    %v460 = vpop.f32.mrf.mxu0
    %v461 = vadd.f32 %v268, %v460
    %v462 = vpop.f32.mrf.mxu0
    %v463 = vadd.f32 %v264, %v462
    %v464 = vpop.f32.mrf.mxu0
    %v465 = vadd.f32 %v268, %v464
    %466 = vmatprep.mubr.bf16.mxu0 0
    %467 = vmatmul.mubr.bf16.gmra.mxu0 %v258
    %v468 = vpop.f32.mrf.mxu0
    %v469 = vadd.f32 %v264, %v468
    %v470 = vpop.f32.mrf.mxu0
    %v471 = vadd.f32 %v268, %v470
    %v472 = vpop.f32.mrf.mxu0
    %v473 = vadd.f32 %v264, %v472
    %v474 = vpop.f32.mrf.mxu0
    %v475 = vadd.f32 %v268, %v474
    %476 = vdwg.mxu0
    %477 = vmatprep.subr.bf16.mxu0 0
    %478 = vmatpush1.bf16.msra.mxu0 %v379
    %479 = vmatprep.subr.bf16.mxu0 0
    %480 = vmatpush1.bf16.msra.mxu0 %v376
    %481 = vmatprep.subr.bf16.mxu0 0
    %482 = vmatpush1.bf16.msra.mxu0 %v373
    %483 = vmatprep.subr.bf16.mxu0 0
    %484 = vmatpush1.bf16.msra.mxu0 %v370
    %485 = vmatprep.subr.bf16.mxu0 0
    %486 = vmatpush1.bf16.msra.mxu0 %v367
    %487 = vmatprep.subr.bf16.mxu0 0
    %488 = vmatpush1.bf16.msra.mxu0 %v364
    %489 = vmatprep.subr.bf16.mxu0 0
    %490 = vmatpush1.bf16.msra.mxu0 %v361
    %491 = vmatprep.subr.bf16.mxu0 0
    %492 = vmatpush1.bf16.msra.mxu0 %v358
    %493 = vmatprep.subr.bf16.mxu0 0
    %494 = vmatpush2.bf16.msra.mxu0 0
    %495 = vmatprep.subr.bf16.mxu0 0
    %496 = vmatpush2.bf16.msra.mxu0 0
    %497 = vmatprep.subr.bf16.mxu0 0
    %498 = vmatpush2.bf16.msra.mxu0 0
    %499 = vmatprep.subr.bf16.mxu0 0
    %500 = vmatpush2.bf16.msra.mxu0 0
    %501 = vmatprep.subr.bf16.mxu0 0
    %502 = vmatpush2.bf16.msra.mxu0 0
    %503 = vmatprep.subr.bf16.mxu0 0
    %504 = vmatpush2.bf16.msra.mxu0 0
    %505 = vmatprep.subr.bf16.mxu0 0
    %506 = vmatpush2.bf16.msra.mxu0 0
    %507 = vmatprep.subr.bf16.mxu0 0
    %508 = vmatpush2.bf16.msra.mxu0 0
    %509 = vmatprep.mubr.bf16.mxu0 0
    %510 = vmatmul.mubr.bf16.gmra.mxu0 %v255
    %v511 = vpop.f32.mrf.mxu0
    %v512 = vadd.f32 %v272, %v511
    %v513 = vpop.f32.mrf.mxu0
    %v514 = vpop.f32.mrf.mxu0
    %v515 = vadd.f32 %v272, %v514
    %v516 = vpop.f32.mrf.mxu0
    %517 = vmatprep.mubr.bf16.mxu0 0
    %518 = vmatmul.mubr.bf16.gmra.mxu0 %v256
    %v519 = vpop.f32.mrf.mxu0
    %v520 = vadd.f32 %v272, %v519
    %v521 = vpop.f32.mrf.mxu0
    %v522 = vpop.f32.mrf.mxu0
    %v523 = vadd.f32 %v272, %v522
    %v524 = vpop.f32.mrf.mxu0
    %525 = vmatprep.mubr.bf16.mxu0 0
    %526 = vmatmul.mubr.bf16.gmra.mxu0 %v257
    %v527 = vpop.f32.mrf.mxu0
    %v528 = vadd.f32 %v272, %v527
    %v529 = vpop.f32.mrf.mxu0
    %v530 = vpop.f32.mrf.mxu0
    %v531 = vadd.f32 %v272, %v530
    %v532 = vpop.f32.mrf.mxu0
    %533 = vmatprep.mubr.bf16.mxu0 0
    %534 = vmatmul.mubr.bf16.gmra.mxu0 %v258
    %v535 = vpop.f32.mrf.mxu0
    %v536 = vadd.f32 %v272, %v535
    %v537 = vpop.f32.mrf.mxu0
    %v538 = vpop.f32.mrf.mxu0
    %v539 = vadd.f32 %v272, %v538
    %v540 = vpop.f32.mrf.mxu0
    %541 = vdwg.mxu0
    %v542 = vlaneseq
    %v543 = vshrl.u32 %v542, 7
    %v544 = vadd.s32 %v543, 8
    %v545 = vlaneseq
    %v546 = vand.u32 %v545, 127
    %vm547 = vcmp.le.s32.totalorder %v546, %v543
    %vm548 = vcmp.le.s32.totalorder %v546, %v544
    %v549 = vld [vmem:[%s6] sm:$0xf]
    %v550 = vld [vmem:[%s6 + $0x4] sm:$0xf]
    %v551 = vld [vmem:[%s6 + $0x8] sm:$0xf]
    %v552 = vld [vmem:[%s6 + $0xc] sm:$0xf]
    %v553 = vld [vmem:[%s6 + $0x10] sm:$0xf]
    %v554 = vld [vmem:[%s6 + $0x14] sm:$0xf]
    %v555 = vld [vmem:[%s6 + $0x18] sm:$0xf]
    %v556 = vld [vmem:[%s6 + $0x1c] sm:$0xf]
    %v557 = vld [vmem:[%s6 + $0x20] sm:$0xf]
    %v558 = vld [vmem:[%s6 + $0x24] sm:$0xf]
    %v559 = vld [vmem:[%s6 + $0x28] sm:$0xf]
    %v560 = vld [vmem:[%s6 + $0x2c] sm:$0xf]
    %v561 = vld [vmem:[%s6 + $0x30] sm:$0xf]
    %v562 = vld [vmem:[%s6 + $0x34] sm:$0xf]
    %v563 = vld [vmem:[%s6 + $0x38] sm:$0xf]
    %v564 = vld [vmem:[%s6 + $0x3c] sm:$0xf]
    %v565 = vpack.c.bf16 %v443, %v439
    %v566 = vpack.c.bf16 %v453, %v449
    %v567 = vpack.c.bf16 %v463, %v459
    %v568 = vpack.c.bf16 %v473, %v469
    %v569 = vpack.c.bf16 %v445, %v441
    %v570 = vpack.c.bf16 %v455, %v451
    %v571 = vpack.c.bf16 %v465, %v461
    %v572 = vpack.c.bf16 %v475, %v471
    %vm573 = vcmask 523264
    %v575 = vsel %vm573, %v565, 0
    %v578 = vsel %vm573, %v569, 0
    %580 = vmatprep.subr.bf16.mxu0 0
    %581 = vmatpush1.bf16.xpose.msra.mxu0 0
    %582 = vmatprep.subr.bf16.mxu0 0
    %583 = vmatpush1.bf16.xpose.msra.mxu0 0
    %584 = vmatprep.subr.bf16.mxu0 0
    %585 = vmatpush1.bf16.xpose.msra.mxu0 0
    %586 = vmatprep.subr.bf16.mxu0 0
    %587 = vmatpush1.bf16.xpose.msra.mxu0 0
    %588 = vmatprep.subr.bf16.mxu0 0
    %589 = vmatpush1.bf16.xpose.msra.mxu0 0
    %590 = vmatprep.subr.bf16.mxu0 0
    %591 = vmatpush1.bf16.xpose.msra.mxu0 0
    %592 = vmatprep.subr.bf16.mxu0 0
    %593 = vmatpush1.bf16.xpose.msra.mxu0 0
    %594 = vmatprep.subr.bf16.mxu0 0
    %595 = vmatpush1.bf16.xpose.msra.mxu0 %v578
    %596 = vmatprep.subr.bf16.mxu0 0
    %597 = vmatpush2.bf16.xpose.msra.mxu0 0
    %598 = vmatprep.subr.bf16.mxu0 0
    %599 = vmatpush2.bf16.xpose.msra.mxu0 0
    %600 = vmatprep.subr.bf16.mxu0 0
    %601 = vmatpush2.bf16.xpose.msra.mxu0 0
    %602 = vmatprep.subr.bf16.mxu0 0
    %603 = vmatpush2.bf16.xpose.msra.mxu0 0
    %604 = vmatprep.subr.bf16.mxu0 0
    %605 = vmatpush2.bf16.xpose.msra.mxu0 0
    %606 = vmatprep.subr.bf16.mxu0 0
    %607 = vmatpush2.bf16.xpose.msra.mxu0 0
    %608 = vmatprep.subr.bf16.mxu0 0
    %609 = vmatpush2.bf16.xpose.msra.mxu0 0
    %610 = vmatprep.subr.bf16.mxu0 0
    %611 = vmatpush2.bf16.xpose.msra.mxu0 0
    %612 = vmatprep.mubr.bf16.mxu0 0
    %613 = vmatmul.mubr.bf16.gmra.mxu0 %v575
    %v614 = vpop.f32.mrf.mxu0
    %v615 = vadd.f32 0.0, %v614
    %v616 = vpop.f32.mrf.mxu0
    %v617 = vpop.f32.mrf.mxu0
    %v618 = vadd.f32 0.0, %v617
    %v619 = vpop.f32.mrf.mxu0
    %620 = vdwg.mxu0
    %v622 = vsel %vm573, %v566, 0
    %v625 = vsel %vm573, %v570, 0
    %627 = vmatprep.subr.bf16.mxu0 0
    %628 = vmatpush1.bf16.xpose.msra.mxu0 0
    %629 = vmatprep.subr.bf16.mxu0 0
    %630 = vmatpush1.bf16.xpose.msra.mxu0 0
    %631 = vmatprep.subr.bf16.mxu0 0
    %632 = vmatpush1.bf16.xpose.msra.mxu0 0
    %633 = vmatprep.subr.bf16.mxu0 0
    %634 = vmatpush1.bf16.xpose.msra.mxu0 0
    %635 = vmatprep.subr.bf16.mxu0 0
    %636 = vmatpush1.bf16.xpose.msra.mxu0 0
    %637 = vmatprep.subr.bf16.mxu0 0
    %638 = vmatpush1.bf16.xpose.msra.mxu0 0
    %639 = vmatprep.subr.bf16.mxu0 0
    %640 = vmatpush1.bf16.xpose.msra.mxu0 0
    %641 = vmatprep.subr.bf16.mxu0 0
    %642 = vmatpush1.bf16.xpose.msra.mxu0 %v625
    %643 = vmatprep.subr.bf16.mxu0 0
    %644 = vmatpush2.bf16.xpose.msra.mxu0 0
    %645 = vmatprep.subr.bf16.mxu0 0
    %646 = vmatpush2.bf16.xpose.msra.mxu0 0
    %647 = vmatprep.subr.bf16.mxu0 0
    %648 = vmatpush2.bf16.xpose.msra.mxu0 0
    %649 = vmatprep.subr.bf16.mxu0 0
    %650 = vmatpush2.bf16.xpose.msra.mxu0 0
    %651 = vmatprep.subr.bf16.mxu0 0
    %652 = vmatpush2.bf16.xpose.msra.mxu0 0
    %653 = vmatprep.subr.bf16.mxu0 0
    %654 = vmatpush2.bf16.xpose.msra.mxu0 0
    %655 = vmatprep.subr.bf16.mxu0 0
    %656 = vmatpush2.bf16.xpose.msra.mxu0 0
    %657 = vmatprep.subr.bf16.mxu0 0
    %658 = vmatpush2.bf16.xpose.msra.mxu0 0
    %659 = vmatprep.mubr.bf16.mxu0 0
    %660 = vmatmul.mubr.bf16.gmra.mxu0 %v622
    %v661 = vpop.f32.mrf.mxu0
    %v662 = vadd.f32 0.0, %v661
    %v663 = vpop.f32.mrf.mxu0
    %v664 = vpop.f32.mrf.mxu0
    %v665 = vadd.f32 0.0, %v664
    %v666 = vpop.f32.mrf.mxu0
    %667 = vdwg.mxu0
    %v669 = vsel %vm573, %v567, 0
    %v672 = vsel %vm573, %v571, 0
    %674 = vmatprep.subr.bf16.mxu0 0
    %675 = vmatpush1.bf16.xpose.msra.mxu0 0
    %676 = vmatprep.subr.bf16.mxu0 0
    %677 = vmatpush1.bf16.xpose.msra.mxu0 0
    %678 = vmatprep.subr.bf16.mxu0 0
    %679 = vmatpush1.bf16.xpose.msra.mxu0 0
    %680 = vmatprep.subr.bf16.mxu0 0
    %681 = vmatpush1.bf16.xpose.msra.mxu0 0
    %682 = vmatprep.subr.bf16.mxu0 0
    %683 = vmatpush1.bf16.xpose.msra.mxu0 0
    %684 = vmatprep.subr.bf16.mxu0 0
    %685 = vmatpush1.bf16.xpose.msra.mxu0 0
    %686 = vmatprep.subr.bf16.mxu0 0
    %687 = vmatpush1.bf16.xpose.msra.mxu0 0
    %688 = vmatprep.subr.bf16.mxu0 0
    %689 = vmatpush1.bf16.xpose.msra.mxu0 %v672
    %690 = vmatprep.subr.bf16.mxu0 0
    %691 = vmatpush2.bf16.xpose.msra.mxu0 0
    %692 = vmatprep.subr.bf16.mxu0 0
    %693 = vmatpush2.bf16.xpose.msra.mxu0 0
    %694 = vmatprep.subr.bf16.mxu0 0
    %695 = vmatpush2.bf16.xpose.msra.mxu0 0
    %696 = vmatprep.subr.bf16.mxu0 0
    %697 = vmatpush2.bf16.xpose.msra.mxu0 0
    %698 = vmatprep.subr.bf16.mxu0 0
    %699 = vmatpush2.bf16.xpose.msra.mxu0 0
    %700 = vmatprep.subr.bf16.mxu0 0
    %701 = vmatpush2.bf16.xpose.msra.mxu0 0
    %702 = vmatprep.subr.bf16.mxu0 0
    %703 = vmatpush2.bf16.xpose.msra.mxu0 0
    %704 = vmatprep.subr.bf16.mxu0 0
    %705 = vmatpush2.bf16.xpose.msra.mxu0 0
    %706 = vmatprep.mubr.bf16.mxu0 0
    %707 = vmatmul.mubr.bf16.gmra.mxu0 %v669
    %v708 = vpop.f32.mrf.mxu0
    %v709 = vadd.f32 0.0, %v708
    %v710 = vpop.f32.mrf.mxu0
    %v711 = vpop.f32.mrf.mxu0
    %v712 = vadd.f32 0.0, %v711
    %v713 = vpop.f32.mrf.mxu0
    %714 = vdwg.mxu0
    %v716 = vsel %vm573, %v568, 0
    %v719 = vsel %vm573, %v572, 0
    %721 = vmatprep.subr.bf16.mxu0 0
    %722 = vmatpush1.bf16.xpose.msra.mxu0 0
    %723 = vmatprep.subr.bf16.mxu0 0
    %724 = vmatpush1.bf16.xpose.msra.mxu0 0
    %725 = vmatprep.subr.bf16.mxu0 0
    %726 = vmatpush1.bf16.xpose.msra.mxu0 0
    %727 = vmatprep.subr.bf16.mxu0 0
    %728 = vmatpush1.bf16.xpose.msra.mxu0 0
    %729 = vmatprep.subr.bf16.mxu0 0
    %730 = vmatpush1.bf16.xpose.msra.mxu0 0
    %731 = vmatprep.subr.bf16.mxu0 0
    %732 = vmatpush1.bf16.xpose.msra.mxu0 0
    %733 = vmatprep.subr.bf16.mxu0 0
    %734 = vmatpush1.bf16.xpose.msra.mxu0 0
    %735 = vmatprep.subr.bf16.mxu0 0
    %736 = vmatpush1.bf16.xpose.msra.mxu0 %v719
    %737 = vmatprep.subr.bf16.mxu0 0
    %738 = vmatpush2.bf16.xpose.msra.mxu0 0
    %739 = vmatprep.subr.bf16.mxu0 0
    %740 = vmatpush2.bf16.xpose.msra.mxu0 0
    %741 = vmatprep.subr.bf16.mxu0 0
    %742 = vmatpush2.bf16.xpose.msra.mxu0 0
    %743 = vmatprep.subr.bf16.mxu0 0
    %744 = vmatpush2.bf16.xpose.msra.mxu0 0
    %745 = vmatprep.subr.bf16.mxu0 0
    %746 = vmatpush2.bf16.xpose.msra.mxu0 0
    %747 = vmatprep.subr.bf16.mxu0 0
    %748 = vmatpush2.bf16.xpose.msra.mxu0 0
    %749 = vmatprep.subr.bf16.mxu0 0
    %750 = vmatpush2.bf16.xpose.msra.mxu0 0
    %751 = vmatprep.subr.bf16.mxu0 0
    %752 = vmatpush2.bf16.xpose.msra.mxu0 0
    %753 = vmatprep.mubr.bf16.mxu0 0
    %754 = vmatmul.mubr.bf16.gmra.mxu0 %v716
    %v755 = vpop.f32.mrf.mxu0
    %v756 = vadd.f32 0.0, %v755
    %v757 = vpop.f32.mrf.mxu0
    %v758 = vpop.f32.mrf.mxu0
    %v759 = vadd.f32 0.0, %v758
    %v760 = vpop.f32.mrf.mxu0
    %761 = vdwg.mxu0
    %v762 = vmul.f32 %v615, 0.125
    %v763 = vmul.f32 %v618, 0.125
    %v764 = vmul.f32 %v662, 0.125
    %v765 = vmul.f32 %v665, 0.125
    %v766 = vmul.f32 %v709, 0.125
    %v767 = vmul.f32 %v712, 0.125
    %v768 = vmul.f32 %v756, 0.125
    %v769 = vmul.f32 %v759, 0.125
    %v770 = vsel %vm547, 1, 0
    %v771 = vsel %vm548, 1, 0
    %vm772 = vcmp.eq.s32.totalorder %v770, 1
    %vm773 = vcmp.eq.s32.totalorder %v771, 1
    %v774 = vsel %vm772, %v762, -1e+09
    %v775 = vsel %vm773, %v763, -1e+09
    %v776 = vsel %vm772, %v764, -1e+09
    %v777 = vsel %vm773, %v765, -1e+09
    %v778 = vsel %vm772, %v766, -1e+09
    %v779 = vsel %vm773, %v767, -1e+09
    %v780 = vsel %vm772, %v768, -1e+09
    %v781 = vsel %vm773, %v769, -1e+09
    %vm782 = vcmask 130048
    %v783 = vsel %vm782, %v774, -inf
    %784 = vmax.xlane.f32.xlu0 %v783
    %v785 = vpop.xlane.xlu0 %784
    %v786 = vsel %vm782, %v775, -inf
    %787 = vmax.xlane.f32.xlu0 %v786
    %v788 = vpop.xlane.xlu0 %787
    %v789 = vsel %vm782, %v776, -inf
    %790 = vmax.xlane.f32.xlu0 %v789
    %v791 = vpop.xlane.xlu0 %790
    %v792 = vsel %vm782, %v777, -inf
    %793 = vmax.xlane.f32.xlu0 %v792
    %v794 = vpop.xlane.xlu0 %793
    %v795 = vsel %vm782, %v778, -inf
    %796 = vmax.xlane.f32.xlu0 %v795
    %v797 = vpop.xlane.xlu0 %796
    %v798 = vsel %vm782, %v779, -inf
    %799 = vmax.xlane.f32.xlu0 %v798
    %v800 = vpop.xlane.xlu0 %799
    %v801 = vsel %vm782, %v780, -inf
    %802 = vmax.xlane.f32.xlu0 %v801
    %v803 = vpop.xlane.xlu0 %802
    %v804 = vsel %vm782, %v781, -inf
    %805 = vmax.xlane.f32.xlu0 %v804
    %v806 = vpop.xlane.xlu0 %805
    %v807 = vsub.f32 %v774, %v785
    %v808 = vsub.f32 %v775, %v788
    %v809 = vsub.f32 %v776, %v791
    %v810 = vsub.f32 %v777, %v794
    %v811 = vsub.f32 %v778, %v797
    %v812 = vsub.f32 %v779, %v800
    %v813 = vsub.f32 %v780, %v803
    %v814 = vsub.f32 %v781, %v806
    %v815 = vmul.f32 %v807, 1.442695
    %v816 = vpow.pop %v815
    %v817 = vmul.f32 %v808, 1.442695
    %v818 = vpow.pop %v817
    %v819 = vmul.f32 %v809, 1.442695
    %v820 = vpow.pop %v819
    %v821 = vmul.f32 %v810, 1.442695
    %v822 = vpow.pop %v821
    %v823 = vmul.f32 %v811, 1.442695
    %v824 = vpow.pop %v823
    %v825 = vmul.f32 %v812, 1.442695
    %v826 = vpow.pop %v825
    %v827 = vmul.f32 %v813, 1.442695
    %v828 = vpow.pop %v827
    %v829 = vmul.f32 %v814, 1.442695
    %v830 = vpow.pop %v829
    %v831 = vsel %vm782, %v816, 0.0
    %832 = vadd.xlane.f32.xlu0 %v831
    %v833 = vpop.xlane.xlu0 %832
    %v834 = vsel %vm782, %v818, 0.0
    %835 = vadd.xlane.f32.xlu0 %v834
    %v836 = vpop.xlane.xlu0 %835
    %v837 = vsel %vm782, %v820, 0.0
    %838 = vadd.xlane.f32.xlu0 %v837
    %v839 = vpop.xlane.xlu0 %838
    %v840 = vsel %vm782, %v822, 0.0
    %841 = vadd.xlane.f32.xlu0 %v840
    %v842 = vpop.xlane.xlu0 %841
    %v843 = vsel %vm782, %v824, 0.0
    %844 = vadd.xlane.f32.xlu0 %v843
    %v845 = vpop.xlane.xlu0 %844
    %v846 = vsel %vm782, %v826, 0.0
    %847 = vadd.xlane.f32.xlu0 %v846
    %v848 = vpop.xlane.xlu0 %847
    %v849 = vsel %vm782, %v828, 0.0
    %850 = vadd.xlane.f32.xlu0 %v849
    %v851 = vpop.xlane.xlu0 %850
    %v852 = vsel %vm782, %v830, 0.0
    %853 = vadd.xlane.f32.xlu0 %v852
    %v854 = vpop.xlane.xlu0 %853
    %v855 = vrcp.pop %v833
    %v856 = vmul.f32 %v816, %v855
    %v857 = vrcp.pop %v836
    %v858 = vmul.f32 %v818, %v857
    %v859 = vrcp.pop %v839
    %v860 = vmul.f32 %v820, %v859
    %v861 = vrcp.pop %v842
    %v862 = vmul.f32 %v822, %v861
    %v863 = vrcp.pop %v845
    %v864 = vmul.f32 %v824, %v863
    %v865 = vrcp.pop %v848
    %v866 = vmul.f32 %v826, %v865
    %v867 = vrcp.pop %v851
    %v868 = vmul.f32 %v828, %v867
    %v869 = vrcp.pop %v854
    %v870 = vmul.f32 %v830, %v869
    %v871 = vpack.c.bf16 %v858, %v856
    %v872 = vpack.c.bf16 %v862, %v860
    %v873 = vpack.c.bf16 %v866, %v864
    %v874 = vpack.c.bf16 %v870, %v868
    %v875 = vpack.c.bf16 %v515, %v512
    %v876 = vpack.c.bf16 %v523, %v520
    %v877 = vpack.c.bf16 %v531, %v528
    %v878 = vpack.c.bf16 %v539, %v536
    %v880 = vsel %vm782, %v871, 0
    %882 = vmatprep.subr.bf16.mxu0 0
    %883 = vmatpush1.bf16.msra.mxu0 0
    %884 = vmatprep.subr.bf16.mxu0 0
    %885 = vmatpush1.bf16.msra.mxu0 0
    %886 = vmatprep.subr.bf16.mxu0 0
    %887 = vmatpush1.bf16.msra.mxu0 0
    %888 = vmatprep.subr.bf16.mxu0 0
    %889 = vmatpush1.bf16.msra.mxu0 0
    %890 = vmatprep.subr.bf16.mxu0 0
    %891 = vmatpush1.bf16.msra.mxu0 0
    %892 = vmatprep.subr.bf16.mxu0 0
    %893 = vmatpush1.bf16.msra.mxu0 0
    %894 = vmatprep.subr.bf16.mxu0 0
    %895 = vmatpush1.bf16.msra.mxu0 0
    %896 = vmatprep.subr.bf16.mxu0 0
    %897 = vmatpush1.bf16.msra.mxu0 %v875
    %898 = vmatprep.subr.bf16.mxu0 0
    %899 = vmatpush2.bf16.msra.mxu0 0
    %900 = vmatprep.subr.bf16.mxu0 0
    %901 = vmatpush2.bf16.msra.mxu0 0
    %902 = vmatprep.subr.bf16.mxu0 0
    %903 = vmatpush2.bf16.msra.mxu0 0
    %904 = vmatprep.subr.bf16.mxu0 0
    %905 = vmatpush2.bf16.msra.mxu0 0
    %906 = vmatprep.subr.bf16.mxu0 0
    %907 = vmatpush2.bf16.msra.mxu0 0
    %908 = vmatprep.subr.bf16.mxu0 0
    %909 = vmatpush2.bf16.msra.mxu0 0
    %910 = vmatprep.subr.bf16.mxu0 0
    %911 = vmatpush2.bf16.msra.mxu0 0
    %912 = vmatprep.subr.bf16.mxu0 0
    %913 = vmatpush2.bf16.msra.mxu0 0
    %914 = vmatprep.mubr.bf16.mxu0 0
    %915 = vmatmul.mubr.bf16.gmra.mxu0 %v880
    %v916 = vpop.f32.mrf.mxu0
    %v917 = vadd.f32 0.0, %v916
    %v918 = vpop.f32.mrf.mxu0
    %v919 = vpop.f32.mrf.mxu0
    %v920 = vadd.f32 0.0, %v919
    %v921 = vpop.f32.mrf.mxu0
    %922 = vdwg.mxu0
    %v924 = vsel %vm782, %v872, 0
    %926 = vmatprep.subr.bf16.mxu0 0
    %927 = vmatpush1.bf16.msra.mxu0 0
    %928 = vmatprep.subr.bf16.mxu0 0
    %929 = vmatpush1.bf16.msra.mxu0 0
    %930 = vmatprep.subr.bf16.mxu0 0
    %931 = vmatpush1.bf16.msra.mxu0 0
    %932 = vmatprep.subr.bf16.mxu0 0
    %933 = vmatpush1.bf16.msra.mxu0 0
    %934 = vmatprep.subr.bf16.mxu0 0
    %935 = vmatpush1.bf16.msra.mxu0 0
    %936 = vmatprep.subr.bf16.mxu0 0
    %937 = vmatpush1.bf16.msra.mxu0 0
    %938 = vmatprep.subr.bf16.mxu0 0
    %939 = vmatpush1.bf16.msra.mxu0 0
    %940 = vmatprep.subr.bf16.mxu0 0
    %941 = vmatpush1.bf16.msra.mxu0 %v876
    %942 = vmatprep.subr.bf16.mxu0 0
    %943 = vmatpush2.bf16.msra.mxu0 0
    %944 = vmatprep.subr.bf16.mxu0 0
    %945 = vmatpush2.bf16.msra.mxu0 0
    %946 = vmatprep.subr.bf16.mxu0 0
    %947 = vmatpush2.bf16.msra.mxu0 0
    %948 = vmatprep.subr.bf16.mxu0 0
    %949 = vmatpush2.bf16.msra.mxu0 0
    %950 = vmatprep.subr.bf16.mxu0 0
    %951 = vmatpush2.bf16.msra.mxu0 0
    %952 = vmatprep.subr.bf16.mxu0 0
    %953 = vmatpush2.bf16.msra.mxu0 0
    %954 = vmatprep.subr.bf16.mxu0 0
    %955 = vmatpush2.bf16.msra.mxu0 0
    %956 = vmatprep.subr.bf16.mxu0 0
    %957 = vmatpush2.bf16.msra.mxu0 0
    %958 = vmatprep.mubr.bf16.mxu0 0
    %959 = vmatmul.mubr.bf16.gmra.mxu0 %v924
    %v960 = vpop.f32.mrf.mxu0
    %v961 = vadd.f32 0.0, %v960
    %v962 = vpop.f32.mrf.mxu0
    %v963 = vpop.f32.mrf.mxu0
    %v964 = vadd.f32 0.0, %v963
    %v965 = vpop.f32.mrf.mxu0
    %966 = vdwg.mxu0
    %v968 = vsel %vm782, %v873, 0
    %970 = vmatprep.subr.bf16.mxu0 0
    %971 = vmatpush1.bf16.msra.mxu0 0
    %972 = vmatprep.subr.bf16.mxu0 0
    %973 = vmatpush1.bf16.msra.mxu0 0
    %974 = vmatprep.subr.bf16.mxu0 0
    %975 = vmatpush1.bf16.msra.mxu0 0
    %976 = vmatprep.subr.bf16.mxu0 0
    %977 = vmatpush1.bf16.msra.mxu0 0
    %978 = vmatprep.subr.bf16.mxu0 0
    %979 = vmatpush1.bf16.msra.mxu0 0
    %980 = vmatprep.subr.bf16.mxu0 0
    %981 = vmatpush1.bf16.msra.mxu0 0
    %982 = vmatprep.subr.bf16.mxu0 0
    %983 = vmatpush1.bf16.msra.mxu0 0
    %984 = vmatprep.subr.bf16.mxu0 0
    %985 = vmatpush1.bf16.msra.mxu0 %v877
    %986 = vmatprep.subr.bf16.mxu0 0
    %987 = vmatpush2.bf16.msra.mxu0 0
    %988 = vmatprep.subr.bf16.mxu0 0
    %989 = vmatpush2.bf16.msra.mxu0 0
    %990 = vmatprep.subr.bf16.mxu0 0
    %991 = vmatpush2.bf16.msra.mxu0 0
    %992 = vmatprep.subr.bf16.mxu0 0
    %993 = vmatpush2.bf16.msra.mxu0 0
    %994 = vmatprep.subr.bf16.mxu0 0
    %995 = vmatpush2.bf16.msra.mxu0 0
    %996 = vmatprep.subr.bf16.mxu0 0
    %997 = vmatpush2.bf16.msra.mxu0 0
    %998 = vmatprep.subr.bf16.mxu0 0
    %999 = vmatpush2.bf16.msra.mxu0 0
    %1000 = vmatprep.subr.bf16.mxu0 0
    %1001 = vmatpush2.bf16.msra.mxu0 0
    %1002 = vmatprep.mubr.bf16.mxu0 0
    %1003 = vmatmul.mubr.bf16.gmra.mxu0 %v968
    %v1004 = vpop.f32.mrf.mxu0
    %v1005 = vadd.f32 0.0, %v1004
    %v1006 = vpop.f32.mrf.mxu0
    %v1007 = vpop.f32.mrf.mxu0
    %v1008 = vadd.f32 0.0, %v1007
    %v1009 = vpop.f32.mrf.mxu0
    %1010 = vdwg.mxu0
    %v1012 = vsel %vm782, %v874, 0
    %1014 = vmatprep.subr.bf16.mxu0 0
    %1015 = vmatpush1.bf16.msra.mxu0 0
    %1016 = vmatprep.subr.bf16.mxu0 0
    %1017 = vmatpush1.bf16.msra.mxu0 0
    %1018 = vmatprep.subr.bf16.mxu0 0
    %1019 = vmatpush1.bf16.msra.mxu0 0
    %1020 = vmatprep.subr.bf16.mxu0 0
    %1021 = vmatpush1.bf16.msra.mxu0 0
    %1022 = vmatprep.subr.bf16.mxu0 0
    %1023 = vmatpush1.bf16.msra.mxu0 0
    %1024 = vmatprep.subr.bf16.mxu0 0
    %1025 = vmatpush1.bf16.msra.mxu0 0
    %1026 = vmatprep.subr.bf16.mxu0 0
    %1027 = vmatpush1.bf16.msra.mxu0 0
    %1028 = vmatprep.subr.bf16.mxu0 0
    %1029 = vmatpush1.bf16.msra.mxu0 %v878
    %1030 = vmatprep.subr.bf16.mxu0 0
    %1031 = vmatpush2.bf16.msra.mxu0 0
    %1032 = vmatprep.subr.bf16.mxu0 0
    %1033 = vmatpush2.bf16.msra.mxu0 0
    %1034 = vmatprep.subr.bf16.mxu0 0
    %1035 = vmatpush2.bf16.msra.mxu0 0
    %1036 = vmatprep.subr.bf16.mxu0 0
    %1037 = vmatpush2.bf16.msra.mxu0 0
    %1038 = vmatprep.subr.bf16.mxu0 0
    %1039 = vmatpush2.bf16.msra.mxu0 0
    %1040 = vmatprep.subr.bf16.mxu0 0
    %1041 = vmatpush2.bf16.msra.mxu0 0
    %1042 = vmatprep.subr.bf16.mxu0 0
    %1043 = vmatpush2.bf16.msra.mxu0 0
    %1044 = vmatprep.subr.bf16.mxu0 0
    %1045 = vmatpush2.bf16.msra.mxu0 0
    %1046 = vmatprep.mubr.bf16.mxu0 0
    %1047 = vmatmul.mubr.bf16.gmra.mxu0 %v1012
    %v1048 = vpop.f32.mrf.mxu0
    %v1049 = vadd.f32 0.0, %v1048
    %v1050 = vpop.f32.mrf.mxu0
    %v1051 = vpop.f32.mrf.mxu0
    %v1052 = vadd.f32 0.0, %v1051
    %v1053 = vpop.f32.mrf.mxu0
    %1054 = vdwg.mxu0
    %v1055 = vpack.c.bf16 %v920, %v917
    %v1056 = vpack.c.bf16 %v964, %v961
    %v1057 = vpack.c.bf16 %v1008, %v1005
    %v1058 = vpack.c.bf16 %v1052, %v1049
    %1060 = vrot.lane.b32.xlu0 %v565, 64
    %v1061 = vpop.permute.xlu0 %1060
    %1063 = vrot.lane.b32.xlu0 %v569, 64
    %v1064 = vpop.permute.xlu0 %1063
    %v1066 = vsel %vm573, %v1061, 0
    %v1069 = vsel %vm573, %v1064, 0
    %1071 = vmatprep.subr.bf16.mxu0 0
    %1072 = vmatpush1.bf16.xpose.msra.mxu0 0
    %1073 = vmatprep.subr.bf16.mxu0 0
    %1074 = vmatpush1.bf16.xpose.msra.mxu0 0
    %1075 = vmatprep.subr.bf16.mxu0 0
    %1076 = vmatpush1.bf16.xpose.msra.mxu0 0
    %1077 = vmatprep.subr.bf16.mxu0 0
    %1078 = vmatpush1.bf16.xpose.msra.mxu0 0
    %1079 = vmatprep.subr.bf16.mxu0 0
    %1080 = vmatpush1.bf16.xpose.msra.mxu0 0
    %1081 = vmatprep.subr.bf16.mxu0 0
    %1082 = vmatpush1.bf16.xpose.msra.mxu0 0
    %1083 = vmatprep.subr.bf16.mxu0 0
    %1084 = vmatpush1.bf16.xpose.msra.mxu0 0
    %1085 = vmatprep.subr.bf16.mxu0 0
    %1086 = vmatpush1.bf16.xpose.msra.mxu0 %v1069
    %1087 = vmatprep.subr.bf16.mxu0 0
    %1088 = vmatpush2.bf16.xpose.msra.mxu0 0
    %1089 = vmatprep.subr.bf16.mxu0 0
    %1090 = vmatpush2.bf16.xpose.msra.mxu0 0
    %1091 = vmatprep.subr.bf16.mxu0 0
    %1092 = vmatpush2.bf16.xpose.msra.mxu0 0
    %1093 = vmatprep.subr.bf16.mxu0 0
    %1094 = vmatpush2.bf16.xpose.msra.mxu0 0
    %1095 = vmatprep.subr.bf16.mxu0 0
    %1096 = vmatpush2.bf16.xpose.msra.mxu0 0
    %1097 = vmatprep.subr.bf16.mxu0 0
    %1098 = vmatpush2.bf16.xpose.msra.mxu0 0
    %1099 = vmatprep.subr.bf16.mxu0 0
    %1100 = vmatpush2.bf16.xpose.msra.mxu0 0
    %1101 = vmatprep.subr.bf16.mxu0 0
    %1102 = vmatpush2.bf16.xpose.msra.mxu0 0
    %1103 = vmatprep.mubr.bf16.mxu0 0
    %1104 = vmatmul.mubr.bf16.gmra.mxu0 %v1066
    %v1105 = vpop.f32.mrf.mxu0
    %v1106 = vadd.f32 0.0, %v1105
    %v1107 = vpop.f32.mrf.mxu0
    %v1108 = vpop.f32.mrf.mxu0
    %v1109 = vadd.f32 0.0, %v1108
    %v1110 = vpop.f32.mrf.mxu0
    %1111 = vdwg.mxu0
    %1113 = vrot.lane.b32.xlu0 %v566, 64
    %v1114 = vpop.permute.xlu0 %1113
    %1116 = vrot.lane.b32.xlu0 %v570, 64
    %v1117 = vpop.permute.xlu0 %1116
    %v1119 = vsel %vm573, %v1114, 0
    %v1122 = vsel %vm573, %v1117, 0
    %1124 = vmatprep.subr.bf16.mxu0 0
    %1125 = vmatpush1.bf16.xpose.msra.mxu0 0
    %1126 = vmatprep.subr.bf16.mxu0 0
    %1127 = vmatpush1.bf16.xpose.msra.mxu0 0
    %1128 = vmatprep.subr.bf16.mxu0 0
    %1129 = vmatpush1.bf16.xpose.msra.mxu0 0
    %1130 = vmatprep.subr.bf16.mxu0 0
    %1131 = vmatpush1.bf16.xpose.msra.mxu0 0
    %1132 = vmatprep.subr.bf16.mxu0 0
    %1133 = vmatpush1.bf16.xpose.msra.mxu0 0
    %1134 = vmatprep.subr.bf16.mxu0 0
    %1135 = vmatpush1.bf16.xpose.msra.mxu0 0
    %1136 = vmatprep.subr.bf16.mxu0 0
    %1137 = vmatpush1.bf16.xpose.msra.mxu0 0
    %1138 = vmatprep.subr.bf16.mxu0 0
    %1139 = vmatpush1.bf16.xpose.msra.mxu0 %v1122
    %1140 = vmatprep.subr.bf16.mxu0 0
    %1141 = vmatpush2.bf16.xpose.msra.mxu0 0
    %1142 = vmatprep.subr.bf16.mxu0 0
    %1143 = vmatpush2.bf16.xpose.msra.mxu0 0
    %1144 = vmatprep.subr.bf16.mxu0 0
    %1145 = vmatpush2.bf16.xpose.msra.mxu0 0
    %1146 = vmatprep.subr.bf16.mxu0 0
    %1147 = vmatpush2.bf16.xpose.msra.mxu0 0
    %1148 = vmatprep.subr.bf16.mxu0 0
    %1149 = vmatpush2.bf16.xpose.msra.mxu0 0
    %1150 = vmatprep.subr.bf16.mxu0 0
    %1151 = vmatpush2.bf16.xpose.msra.mxu0 0
    %1152 = vmatprep.subr.bf16.mxu0 0
    %1153 = vmatpush2.bf16.xpose.msra.mxu0 0
    %1154 = vmatprep.subr.bf16.mxu0 0
    %1155 = vmatpush2.bf16.xpose.msra.mxu0 0
    %1156 = vmatprep.mubr.bf16.mxu0 0
    %1157 = vmatmul.mubr.bf16.gmra.mxu0 %v1119
    %v1158 = vpop.f32.mrf.mxu0
    %v1159 = vadd.f32 0.0, %v1158
    %v1160 = vpop.f32.mrf.mxu0
    %v1161 = vpop.f32.mrf.mxu0
    %v1162 = vadd.f32 0.0, %v1161
    %v1163 = vpop.f32.mrf.mxu0
    %1164 = vdwg.mxu0
    %1166 = vrot.lane.b32.xlu0 %v567, 64
    %v1167 = vpop.permute.xlu0 %1166
    %1169 = vrot.lane.b32.xlu0 %v571, 64
    %v1170 = vpop.permute.xlu0 %1169
    %v1172 = vsel %vm573, %v1167, 0
    %v1175 = vsel %vm573, %v1170, 0
    %1177 = vmatprep.subr.bf16.mxu0 0
    %1178 = vmatpush1.bf16.xpose.msra.mxu0 0
    %1179 = vmatprep.subr.bf16.mxu0 0
    %1180 = vmatpush1.bf16.xpose.msra.mxu0 0
    %1181 = vmatprep.subr.bf16.mxu0 0
    %1182 = vmatpush1.bf16.xpose.msra.mxu0 0
    %1183 = vmatprep.subr.bf16.mxu0 0
    %1184 = vmatpush1.bf16.xpose.msra.mxu0 0
    %1185 = vmatprep.subr.bf16.mxu0 0
    %1186 = vmatpush1.bf16.xpose.msra.mxu0 0
    %1187 = vmatprep.subr.bf16.mxu0 0
    %1188 = vmatpush1.bf16.xpose.msra.mxu0 0
    %1189 = vmatprep.subr.bf16.mxu0 0
    %1190 = vmatpush1.bf16.xpose.msra.mxu0 0
    %1191 = vmatprep.subr.bf16.mxu0 0
    %1192 = vmatpush1.bf16.xpose.msra.mxu0 %v1175
    %1193 = vmatprep.subr.bf16.mxu0 0
    %1194 = vmatpush2.bf16.xpose.msra.mxu0 0
    %1195 = vmatprep.subr.bf16.mxu0 0
    %1196 = vmatpush2.bf16.xpose.msra.mxu0 0
    %1197 = vmatprep.subr.bf16.mxu0 0
    %1198 = vmatpush2.bf16.xpose.msra.mxu0 0
    %1199 = vmatprep.subr.bf16.mxu0 0
    %1200 = vmatpush2.bf16.xpose.msra.mxu0 0
    %1201 = vmatprep.subr.bf16.mxu0 0
    %1202 = vmatpush2.bf16.xpose.msra.mxu0 0
    %1203 = vmatprep.subr.bf16.mxu0 0
    %1204 = vmatpush2.bf16.xpose.msra.mxu0 0
    %1205 = vmatprep.subr.bf16.mxu0 0
    %1206 = vmatpush2.bf16.xpose.msra.mxu0 0
    %1207 = vmatprep.subr.bf16.mxu0 0
    %1208 = vmatpush2.bf16.xpose.msra.mxu0 0
    %1209 = vmatprep.mubr.bf16.mxu0 0
    %1210 = vmatmul.mubr.bf16.gmra.mxu0 %v1172
    %v1211 = vpop.f32.mrf.mxu0
    %v1212 = vadd.f32 0.0, %v1211
    %v1213 = vpop.f32.mrf.mxu0
    %v1214 = vpop.f32.mrf.mxu0
    %v1215 = vadd.f32 0.0, %v1214
    %v1216 = vpop.f32.mrf.mxu0
    %1217 = vdwg.mxu0
    %1219 = vrot.lane.b32.xlu0 %v568, 64
    %v1220 = vpop.permute.xlu0 %1219
    %1222 = vrot.lane.b32.xlu0 %v572, 64
    %v1223 = vpop.permute.xlu0 %1222
    %v1225 = vsel %vm573, %v1220, 0
    %v1228 = vsel %vm573, %v1223, 0
    %1230 = vmatprep.subr.bf16.mxu0 0
    %1231 = vmatpush1.bf16.xpose.msra.mxu0 0
    %1232 = vmatprep.subr.bf16.mxu0 0
    %1233 = vmatpush1.bf16.xpose.msra.mxu0 0
    %1234 = vmatprep.subr.bf16.mxu0 0
    %1235 = vmatpush1.bf16.xpose.msra.mxu0 0
    %1236 = vmatprep.subr.bf16.mxu0 0
    %1237 = vmatpush1.bf16.xpose.msra.mxu0 0
    %1238 = vmatprep.subr.bf16.mxu0 0
    %1239 = vmatpush1.bf16.xpose.msra.mxu0 0
    %1240 = vmatprep.subr.bf16.mxu0 0
    %1241 = vmatpush1.bf16.xpose.msra.mxu0 0
    %1242 = vmatprep.subr.bf16.mxu0 0
    %1243 = vmatpush1.bf16.xpose.msra.mxu0 0
    %1244 = vmatprep.subr.bf16.mxu0 0
    %1245 = vmatpush1.bf16.xpose.msra.mxu0 %v1228
    %1246 = vmatprep.subr.bf16.mxu0 0
    %1247 = vmatpush2.bf16.xpose.msra.mxu0 0
    %1248 = vmatprep.subr.bf16.mxu0 0
    %1249 = vmatpush2.bf16.xpose.msra.mxu0 0
    %1250 = vmatprep.subr.bf16.mxu0 0
    %1251 = vmatpush2.bf16.xpose.msra.mxu0 0
    %1252 = vmatprep.subr.bf16.mxu0 0
    %1253 = vmatpush2.bf16.xpose.msra.mxu0 0
    %1254 = vmatprep.subr.bf16.mxu0 0
    %1255 = vmatpush2.bf16.xpose.msra.mxu0 0
    %1256 = vmatprep.subr.bf16.mxu0 0
    %1257 = vmatpush2.bf16.xpose.msra.mxu0 0
    %1258 = vmatprep.subr.bf16.mxu0 0
    %1259 = vmatpush2.bf16.xpose.msra.mxu0 0
    %1260 = vmatprep.subr.bf16.mxu0 0
    %1261 = vmatpush2.bf16.xpose.msra.mxu0 0
    %1262 = vmatprep.mubr.bf16.mxu0 0
    %1263 = vmatmul.mubr.bf16.gmra.mxu0 %v1225
    %v1264 = vpop.f32.mrf.mxu0
    %v1265 = vadd.f32 0.0, %v1264
    %v1266 = vpop.f32.mrf.mxu0
    %v1267 = vpop.f32.mrf.mxu0
    %v1268 = vadd.f32 0.0, %v1267
    %v1269 = vpop.f32.mrf.mxu0
    %1270 = vdwg.mxu0
    %v1271 = vmul.f32 %v1106, 0.125
    %v1272 = vmul.f32 %v1109, 0.125
    %v1273 = vmul.f32 %v1159, 0.125
    %v1274 = vmul.f32 %v1162, 0.125
    %v1275 = vmul.f32 %v1212, 0.125
    %v1276 = vmul.f32 %v1215, 0.125
    %v1277 = vmul.f32 %v1265, 0.125
    %v1278 = vmul.f32 %v1268, 0.125
    %v1279 = vsel %vm772, %v1271, -1e+09
    %v1280 = vsel %vm773, %v1272, -1e+09
    %v1281 = vsel %vm772, %v1273, -1e+09
    %v1282 = vsel %vm773, %v1274, -1e+09
    %v1283 = vsel %vm772, %v1275, -1e+09
    %v1284 = vsel %vm773, %v1276, -1e+09
    %v1285 = vsel %vm772, %v1277, -1e+09
    %v1286 = vsel %vm773, %v1278, -1e+09
    %v1287 = vsel %vm782, %v1279, -inf
    %1288 = vmax.xlane.f32.xlu0 %v1287
    %v1289 = vpop.xlane.xlu0 %1288
    %v1290 = vsel %vm782, %v1280, -inf
    %1291 = vmax.xlane.f32.xlu0 %v1290
    %v1292 = vpop.xlane.xlu0 %1291
    %v1293 = vsel %vm782, %v1281, -inf
    %1294 = vmax.xlane.f32.xlu0 %v1293
    %v1295 = vpop.xlane.xlu0 %1294
    %v1296 = vsel %vm782, %v1282, -inf
    %1297 = vmax.xlane.f32.xlu0 %v1296
    %v1298 = vpop.xlane.xlu0 %1297
    %v1299 = vsel %vm782, %v1283, -inf
    %1300 = vmax.xlane.f32.xlu0 %v1299
    %v1301 = vpop.xlane.xlu0 %1300
    %v1302 = vsel %vm782, %v1284, -inf
    %1303 = vmax.xlane.f32.xlu0 %v1302
    %v1304 = vpop.xlane.xlu0 %1303
    %v1305 = vsel %vm782, %v1285, -inf
    %1306 = vmax.xlane.f32.xlu0 %v1305
    %v1307 = vpop.xlane.xlu0 %1306
    %v1308 = vsel %vm782, %v1286, -inf
    %1309 = vmax.xlane.f32.xlu0 %v1308
    %v1310 = vpop.xlane.xlu0 %1309
    %v1311 = vsub.f32 %v1279, %v1289
    %v1312 = vsub.f32 %v1280, %v1292
    %v1313 = vsub.f32 %v1281, %v1295
    %v1314 = vsub.f32 %v1282, %v1298
    %v1315 = vsub.f32 %v1283, %v1301
    %v1316 = vsub.f32 %v1284, %v1304
    %v1317 = vsub.f32 %v1285, %v1307
    %v1318 = vsub.f32 %v1286, %v1310
    %v1319 = vmul.f32 %v1311, 1.442695
    %v1320 = vpow.pop %v1319
    %v1321 = vmul.f32 %v1312, 1.442695
    %v1322 = vpow.pop %v1321
    %v1323 = vmul.f32 %v1313, 1.442695
    %v1324 = vpow.pop %v1323
    %v1325 = vmul.f32 %v1314, 1.442695
    %v1326 = vpow.pop %v1325
    %v1327 = vmul.f32 %v1315, 1.442695
    %v1328 = vpow.pop %v1327
    %v1329 = vmul.f32 %v1316, 1.442695
    %v1330 = vpow.pop %v1329
    %v1331 = vmul.f32 %v1317, 1.442695
    %v1332 = vpow.pop %v1331
    %v1333 = vmul.f32 %v1318, 1.442695
    %v1334 = vpow.pop %v1333
    %v1335 = vsel %vm782, %v1320, 0.0
    %1336 = vadd.xlane.f32.xlu0 %v1335
    %v1337 = vpop.xlane.xlu0 %1336
    %v1338 = vsel %vm782, %v1322, 0.0
    %1339 = vadd.xlane.f32.xlu0 %v1338
    %v1340 = vpop.xlane.xlu0 %1339
    %v1341 = vsel %vm782, %v1324, 0.0
    %1342 = vadd.xlane.f32.xlu0 %v1341
    %v1343 = vpop.xlane.xlu0 %1342
    %v1344 = vsel %vm782, %v1326, 0.0
    %1345 = vadd.xlane.f32.xlu0 %v1344
    %v1346 = vpop.xlane.xlu0 %1345
    %v1347 = vsel %vm782, %v1328, 0.0
    %1348 = vadd.xlane.f32.xlu0 %v1347
    %v1349 = vpop.xlane.xlu0 %1348
    %v1350 = vsel %vm782, %v1330, 0.0
    %1351 = vadd.xlane.f32.xlu0 %v1350
    %v1352 = vpop.xlane.xlu0 %1351
    %v1353 = vsel %vm782, %v1332, 0.0
    %1354 = vadd.xlane.f32.xlu0 %v1353
    %v1355 = vpop.xlane.xlu0 %1354
    %v1356 = vsel %vm782, %v1334, 0.0
    %1357 = vadd.xlane.f32.xlu0 %v1356
    %v1358 = vpop.xlane.xlu0 %1357
    %v1359 = vrcp.pop %v1337
    %v1360 = vmul.f32 %v1320, %v1359
    %v1361 = vrcp.pop %v1340
    %v1362 = vmul.f32 %v1322, %v1361
    %v1363 = vrcp.pop %v1343
    %v1364 = vmul.f32 %v1324, %v1363
    %v1365 = vrcp.pop %v1346
    %v1366 = vmul.f32 %v1326, %v1365
    %v1367 = vrcp.pop %v1349
    %v1368 = vmul.f32 %v1328, %v1367
    %v1369 = vrcp.pop %v1352
    %v1370 = vmul.f32 %v1330, %v1369
    %v1371 = vrcp.pop %v1355
    %v1372 = vmul.f32 %v1332, %v1371
    %v1373 = vrcp.pop %v1358
    %v1374 = vmul.f32 %v1334, %v1373
    %v1375 = vpack.c.bf16 %v1362, %v1360
    %v1376 = vpack.c.bf16 %v1366, %v1364
    %v1377 = vpack.c.bf16 %v1370, %v1368
    %v1378 = vpack.c.bf16 %v1374, %v1372
    %1380 = vrot.lane.b32.xlu0 %v875, 64
    %v1381 = vpop.permute.xlu0 %1380
    %v1384 = vsel %vm782, %v1375, 0
    %1386 = vmatprep.subr.bf16.mxu0 0
    %1387 = vmatpush1.bf16.msra.mxu0 0
    %1388 = vmatprep.subr.bf16.mxu0 0
    %1389 = vmatpush1.bf16.msra.mxu0 0
    %1390 = vmatprep.subr.bf16.mxu0 0
    %1391 = vmatpush1.bf16.msra.mxu0 0
    %1392 = vmatprep.subr.bf16.mxu0 0
    %1393 = vmatpush1.bf16.msra.mxu0 0
    %1394 = vmatprep.subr.bf16.mxu0 0
    %1395 = vmatpush1.bf16.msra.mxu0 0
    %1396 = vmatprep.subr.bf16.mxu0 0
    %1397 = vmatpush1.bf16.msra.mxu0 0
    %1398 = vmatprep.subr.bf16.mxu0 0
    %1399 = vmatpush1.bf16.msra.mxu0 0
    %1400 = vmatprep.subr.bf16.mxu0 0
    %1401 = vmatpush1.bf16.msra.mxu0 %v1381
    %1402 = vmatprep.subr.bf16.mxu0 0
    %1403 = vmatpush2.bf16.msra.mxu0 0
    %1404 = vmatprep.subr.bf16.mxu0 0
    %1405 = vmatpush2.bf16.msra.mxu0 0
    %1406 = vmatprep.subr.bf16.mxu0 0
    %1407 = vmatpush2.bf16.msra.mxu0 0
    %1408 = vmatprep.subr.bf16.mxu0 0
    %1409 = vmatpush2.bf16.msra.mxu0 0
    %1410 = vmatprep.subr.bf16.mxu0 0
    %1411 = vmatpush2.bf16.msra.mxu0 0
    %1412 = vmatprep.subr.bf16.mxu0 0
    %1413 = vmatpush2.bf16.msra.mxu0 0
    %1414 = vmatprep.subr.bf16.mxu0 0
    %1415 = vmatpush2.bf16.msra.mxu0 0
    %1416 = vmatprep.subr.bf16.mxu0 0
    %1417 = vmatpush2.bf16.msra.mxu0 0
    %1418 = vmatprep.mubr.bf16.mxu0 0
    %1419 = vmatmul.mubr.bf16.gmra.mxu0 %v1384
    %v1420 = vpop.f32.mrf.mxu0
    %v1421 = vadd.f32 0.0, %v1420
    %v1422 = vpop.f32.mrf.mxu0
    %v1423 = vpop.f32.mrf.mxu0
    %v1424 = vadd.f32 0.0, %v1423
    %v1425 = vpop.f32.mrf.mxu0
    %1426 = vdwg.mxu0
    %1428 = vrot.lane.b32.xlu0 %v876, 64
    %v1429 = vpop.permute.xlu0 %1428
    %v1432 = vsel %vm782, %v1376, 0
    %1434 = vmatprep.subr.bf16.mxu0 0
    %1435 = vmatpush1.bf16.msra.mxu0 0
    %1436 = vmatprep.subr.bf16.mxu0 0
    %1437 = vmatpush1.bf16.msra.mxu0 0
    %1438 = vmatprep.subr.bf16.mxu0 0
    %1439 = vmatpush1.bf16.msra.mxu0 0
    %1440 = vmatprep.subr.bf16.mxu0 0
    %1441 = vmatpush1.bf16.msra.mxu0 0
    %1442 = vmatprep.subr.bf16.mxu0 0
    %1443 = vmatpush1.bf16.msra.mxu0 0
    %1444 = vmatprep.subr.bf16.mxu0 0
    %1445 = vmatpush1.bf16.msra.mxu0 0
    %1446 = vmatprep.subr.bf16.mxu0 0
    %1447 = vmatpush1.bf16.msra.mxu0 0
    %1448 = vmatprep.subr.bf16.mxu0 0
    %1449 = vmatpush1.bf16.msra.mxu0 %v1429
    %1450 = vmatprep.subr.bf16.mxu0 0
    %1451 = vmatpush2.bf16.msra.mxu0 0
    %1452 = vmatprep.subr.bf16.mxu0 0
    %1453 = vmatpush2.bf16.msra.mxu0 0
    %1454 = vmatprep.subr.bf16.mxu0 0
    %1455 = vmatpush2.bf16.msra.mxu0 0
    %1456 = vmatprep.subr.bf16.mxu0 0
    %1457 = vmatpush2.bf16.msra.mxu0 0
    %1458 = vmatprep.subr.bf16.mxu0 0
    %1459 = vmatpush2.bf16.msra.mxu0 0
    %1460 = vmatprep.subr.bf16.mxu0 0
    %1461 = vmatpush2.bf16.msra.mxu0 0
    %1462 = vmatprep.subr.bf16.mxu0 0
    %1463 = vmatpush2.bf16.msra.mxu0 0
    %1464 = vmatprep.subr.bf16.mxu0 0
    %1465 = vmatpush2.bf16.msra.mxu0 0
    %1466 = vmatprep.mubr.bf16.mxu0 0
    %1467 = vmatmul.mubr.bf16.gmra.mxu0 %v1432
    %v1468 = vpop.f32.mrf.mxu0
    %v1469 = vadd.f32 0.0, %v1468
    %v1470 = vpop.f32.mrf.mxu0
    %v1471 = vpop.f32.mrf.mxu0
    %v1472 = vadd.f32 0.0, %v1471
    %v1473 = vpop.f32.mrf.mxu0
    %1474 = vdwg.mxu0
    %1476 = vrot.lane.b32.xlu0 %v877, 64
    %v1477 = vpop.permute.xlu0 %1476
    %v1480 = vsel %vm782, %v1377, 0
    %1482 = vmatprep.subr.bf16.mxu0 0
    %1483 = vmatpush1.bf16.msra.mxu0 0
    %1484 = vmatprep.subr.bf16.mxu0 0
    %1485 = vmatpush1.bf16.msra.mxu0 0
    %1486 = vmatprep.subr.bf16.mxu0 0
    %1487 = vmatpush1.bf16.msra.mxu0 0
    %1488 = vmatprep.subr.bf16.mxu0 0
    %1489 = vmatpush1.bf16.msra.mxu0 0
    %1490 = vmatprep.subr.bf16.mxu0 0
    %1491 = vmatpush1.bf16.msra.mxu0 0
    %1492 = vmatprep.subr.bf16.mxu0 0
    %1493 = vmatpush1.bf16.msra.mxu0 0
    %1494 = vmatprep.subr.bf16.mxu0 0
    %1495 = vmatpush1.bf16.msra.mxu0 0
    %1496 = vmatprep.subr.bf16.mxu0 0
    %1497 = vmatpush1.bf16.msra.mxu0 %v1477
    %1498 = vmatprep.subr.bf16.mxu0 0
    %1499 = vmatpush2.bf16.msra.mxu0 0
    %1500 = vmatprep.subr.bf16.mxu0 0
    %1501 = vmatpush2.bf16.msra.mxu0 0
    %1502 = vmatprep.subr.bf16.mxu0 0
    %1503 = vmatpush2.bf16.msra.mxu0 0
    %1504 = vmatprep.subr.bf16.mxu0 0
    %1505 = vmatpush2.bf16.msra.mxu0 0
    %1506 = vmatprep.subr.bf16.mxu0 0
    %1507 = vmatpush2.bf16.msra.mxu0 0
    %1508 = vmatprep.subr.bf16.mxu0 0
    %1509 = vmatpush2.bf16.msra.mxu0 0
    %1510 = vmatprep.subr.bf16.mxu0 0
    %1511 = vmatpush2.bf16.msra.mxu0 0
    %1512 = vmatprep.subr.bf16.mxu0 0
    %1513 = vmatpush2.bf16.msra.mxu0 0
    %1514 = vmatprep.mubr.bf16.mxu0 0
    %1515 = vmatmul.mubr.bf16.gmra.mxu0 %v1480
    %v1516 = vpop.f32.mrf.mxu0
    %v1517 = vadd.f32 0.0, %v1516
    %v1518 = vpop.f32.mrf.mxu0
    %v1519 = vpop.f32.mrf.mxu0
    %v1520 = vadd.f32 0.0, %v1519
    %v1521 = vpop.f32.mrf.mxu0
    %1522 = vdwg.mxu0
    %1524 = vrot.lane.b32.xlu0 %v878, 64
    %v1525 = vpop.permute.xlu0 %1524
    %v1528 = vsel %vm782, %v1378, 0
    %1530 = vmatprep.subr.bf16.mxu0 0
    %1531 = vmatpush1.bf16.msra.mxu0 0
    %1532 = vmatprep.subr.bf16.mxu0 0
    %1533 = vmatpush1.bf16.msra.mxu0 0
    %1534 = vmatprep.subr.bf16.mxu0 0
    %1535 = vmatpush1.bf16.msra.mxu0 0
    %1536 = vmatprep.subr.bf16.mxu0 0
    %1537 = vmatpush1.bf16.msra.mxu0 0
    %1538 = vmatprep.subr.bf16.mxu0 0
    %1539 = vmatpush1.bf16.msra.mxu0 0
    %1540 = vmatprep.subr.bf16.mxu0 0
    %1541 = vmatpush1.bf16.msra.mxu0 0
    %1542 = vmatprep.subr.bf16.mxu0 0
    %1543 = vmatpush1.bf16.msra.mxu0 0
    %1544 = vmatprep.subr.bf16.mxu0 0
    %1545 = vmatpush1.bf16.msra.mxu0 %v1525
    %1546 = vmatprep.subr.bf16.mxu0 0
    %1547 = vmatpush2.bf16.msra.mxu0 0
    %1548 = vmatprep.subr.bf16.mxu0 0
    %1549 = vmatpush2.bf16.msra.mxu0 0
    %1550 = vmatprep.subr.bf16.mxu0 0
    %1551 = vmatpush2.bf16.msra.mxu0 0
    %1552 = vmatprep.subr.bf16.mxu0 0
    %1553 = vmatpush2.bf16.msra.mxu0 0
    %1554 = vmatprep.subr.bf16.mxu0 0
    %1555 = vmatpush2.bf16.msra.mxu0 0
    %1556 = vmatprep.subr.bf16.mxu0 0
    %1557 = vmatpush2.bf16.msra.mxu0 0
    %1558 = vmatprep.subr.bf16.mxu0 0
    %1559 = vmatpush2.bf16.msra.mxu0 0
    %1560 = vmatprep.subr.bf16.mxu0 0
    %1561 = vmatpush2.bf16.msra.mxu0 0
    %1562 = vmatprep.mubr.bf16.mxu0 0
    %1563 = vmatmul.mubr.bf16.gmra.mxu0 %v1528
    %v1564 = vpop.f32.mrf.mxu0
    %v1565 = vadd.f32 0.0, %v1564
    %v1566 = vpop.f32.mrf.mxu0
    %v1567 = vpop.f32.mrf.mxu0
    %v1568 = vadd.f32 0.0, %v1567
    %v1569 = vpop.f32.mrf.mxu0
    %1570 = vdwg.mxu0
    %v1571 = vpack.c.bf16 %v1424, %v1421
    %v1572 = vpack.c.bf16 %v1472, %v1469
    %v1573 = vpack.c.bf16 %v1520, %v1517
    %v1574 = vpack.c.bf16 %v1568, %v1565
    %v1583 = vunpack.c.l.b16 %v557
    %v1584 = vunpack.c.l.b16 %v558
    %v1585 = vunpack.c.l.b16 %v559
    %v1586 = vunpack.c.l.b16 %v560
    %v1587 = vunpack.c.l.b16 %v561
    %v1588 = vunpack.c.l.b16 %v562
    %v1589 = vunpack.c.l.b16 %v563
    %v1590 = vunpack.c.l.b16 %v564
    %v1591 = vpack.c.b16 %v1584, %v1583
    %v1592 = vpack.c.b16 %v1586, %v1585
    %v1593 = vpack.c.b16 %v1588, %v1587
    %v1594 = vpack.c.b16 %v1590, %v1589
    %v1600 = vsel %vm573, %v1571, 0
    %v1603 = vsel %vm573, %v1572, 0
    %v1606 = vsel %vm573, %v1573, 0
    %v1609 = vsel %vm573, %v1574, 0
    %1611 = vmatprep.subr.bf16.mxu0 0
    %1612 = vmatpush1.bf16.msra.mxu0 0
    %1613 = vmatprep.subr.bf16.mxu0 0
    %1614 = vmatpush1.bf16.msra.mxu0 0
    %1615 = vmatprep.subr.bf16.mxu0 0
    %1616 = vmatpush1.bf16.msra.mxu0 0
    %1617 = vmatprep.subr.bf16.mxu0 0
    %1618 = vmatpush1.bf16.msra.mxu0 0
    %1619 = vmatprep.subr.bf16.mxu0 0
    %1620 = vmatpush1.bf16.msra.mxu0 %v1594
    %1621 = vmatprep.subr.bf16.mxu0 0
    %1622 = vmatpush1.bf16.msra.mxu0 %v1593
    %1623 = vmatprep.subr.bf16.mxu0 0
    %1624 = vmatpush1.bf16.msra.mxu0 %v1592
    %1625 = vmatprep.subr.bf16.mxu0 0
    %1626 = vmatpush1.bf16.msra.mxu0 %v1591
    %1627 = vmatprep.subr.bf16.mxu0 0
    %1628 = vmatpush2.bf16.msra.mxu0 0
    %1629 = vmatprep.subr.bf16.mxu0 0
    %1630 = vmatpush2.bf16.msra.mxu0 0
    %1631 = vmatprep.subr.bf16.mxu0 0
    %1632 = vmatpush2.bf16.msra.mxu0 0
    %1633 = vmatprep.subr.bf16.mxu0 0
    %1634 = vmatpush2.bf16.msra.mxu0 0
    %1635 = vmatprep.subr.bf16.mxu0 0
    %1636 = vmatpush2.bf16.msra.mxu0 0
    %1637 = vmatprep.subr.bf16.mxu0 0
    %1638 = vmatpush2.bf16.msra.mxu0 0
    %1639 = vmatprep.subr.bf16.mxu0 0
    %1640 = vmatpush2.bf16.msra.mxu0 0
    %1641 = vmatprep.subr.bf16.mxu0 0
    %1642 = vmatpush2.bf16.msra.mxu0 0
    %1643 = vmatprep.mubr.bf16.mxu0 0
    %1644 = vmatmul.mubr.bf16.gmra.mxu0 %v1600
    %v1645 = vpop.f32.mrf.mxu0
    %v1646 = vadd.f32 0.0, %v1645
    %v1647 = vpop.f32.mrf.mxu0
    %v1648 = vpop.f32.mrf.mxu0
    %v1649 = vadd.f32 0.0, %v1648
    %v1650 = vpop.f32.mrf.mxu0
    %1651 = vmatprep.mubr.bf16.mxu0 0
    %1652 = vmatmul.mubr.bf16.gmra.mxu0 %v1603
    %v1653 = vpop.f32.mrf.mxu0
    %v1654 = vadd.f32 0.0, %v1653
    %v1655 = vpop.f32.mrf.mxu0
    %v1656 = vpop.f32.mrf.mxu0
    %v1657 = vadd.f32 0.0, %v1656
    %v1658 = vpop.f32.mrf.mxu0
    %1659 = vmatprep.mubr.bf16.mxu0 0
    %1660 = vmatmul.mubr.bf16.gmra.mxu0 %v1606
    %v1661 = vpop.f32.mrf.mxu0
    %v1662 = vadd.f32 0.0, %v1661
    %v1663 = vpop.f32.mrf.mxu0
    %v1664 = vpop.f32.mrf.mxu0
    %v1665 = vadd.f32 0.0, %v1664
    %v1666 = vpop.f32.mrf.mxu0
    %1667 = vmatprep.mubr.bf16.mxu0 0
    %1668 = vmatmul.mubr.bf16.gmra.mxu0 %v1609
    %v1669 = vpop.f32.mrf.mxu0
    %v1670 = vadd.f32 0.0, %v1669
    %v1671 = vpop.f32.mrf.mxu0
    %v1672 = vpop.f32.mrf.mxu0
    %v1673 = vadd.f32 0.0, %v1672
    %v1674 = vpop.f32.mrf.mxu0
    %1675 = vdwg.mxu0
    %v1684 = vunpack.c.l.b16 %v549
    %v1685 = vunpack.c.l.b16 %v550
    %v1686 = vunpack.c.l.b16 %v551
    %v1687 = vunpack.c.l.b16 %v552
    %v1688 = vunpack.c.l.b16 %v553
    %v1689 = vunpack.c.l.b16 %v554
    %v1690 = vunpack.c.l.b16 %v555
    %v1691 = vunpack.c.l.b16 %v556
    %v1692 = vpack.c.b16 %v1685, %v1684
    %v1693 = vpack.c.b16 %v1687, %v1686
    %v1694 = vpack.c.b16 %v1689, %v1688
    %v1695 = vpack.c.b16 %v1691, %v1690
    %v1701 = vsel %vm573, %v1055, 0
    %v1704 = vsel %vm573, %v1056, 0
    %v1707 = vsel %vm573, %v1057, 0
    %v1710 = vsel %vm573, %v1058, 0
    %1712 = vmatprep.subr.bf16.mxu0 0
    %1713 = vmatpush1.bf16.msra.mxu0 0
    %1714 = vmatprep.subr.bf16.mxu0 0
    %1715 = vmatpush1.bf16.msra.mxu0 0
    %1716 = vmatprep.subr.bf16.mxu0 0
    %1717 = vmatpush1.bf16.msra.mxu0 0
    %1718 = vmatprep.subr.bf16.mxu0 0
    %1719 = vmatpush1.bf16.msra.mxu0 0
    %1720 = vmatprep.subr.bf16.mxu0 0
    %1721 = vmatpush1.bf16.msra.mxu0 %v1695
    %1722 = vmatprep.subr.bf16.mxu0 0
    %1723 = vmatpush1.bf16.msra.mxu0 %v1694
    %1724 = vmatprep.subr.bf16.mxu0 0
    %1725 = vmatpush1.bf16.msra.mxu0 %v1693
    %1726 = vmatprep.subr.bf16.mxu0 0
    %1727 = vmatpush1.bf16.msra.mxu0 %v1692
    %1728 = vmatprep.subr.bf16.mxu0 0
    %1729 = vmatpush2.bf16.msra.mxu0 0
    %1730 = vmatprep.subr.bf16.mxu0 0
    %1731 = vmatpush2.bf16.msra.mxu0 0
    %1732 = vmatprep.subr.bf16.mxu0 0
    %1733 = vmatpush2.bf16.msra.mxu0 0
    %1734 = vmatprep.subr.bf16.mxu0 0
    %1735 = vmatpush2.bf16.msra.mxu0 0
    %1736 = vmatprep.subr.bf16.mxu0 0
    %1737 = vmatpush2.bf16.msra.mxu0 0
    %1738 = vmatprep.subr.bf16.mxu0 0
    %1739 = vmatpush2.bf16.msra.mxu0 0
    %1740 = vmatprep.subr.bf16.mxu0 0
    %1741 = vmatpush2.bf16.msra.mxu0 0
    %1742 = vmatprep.subr.bf16.mxu0 0
    %1743 = vmatpush2.bf16.msra.mxu0 0
    %1744 = vmatprep.mubr.bf16.mxu0 0
    %1745 = vmatmul.mubr.bf16.gmra.mxu0 %v1701
    %v1746 = vpop.f32.mrf.mxu0
    %v1747 = vadd.f32 %v1646, %v1746
    %v1748 = vpop.f32.mrf.mxu0
    %v1749 = vpop.f32.mrf.mxu0
    %v1750 = vadd.f32 %v1649, %v1749
    %v1751 = vpop.f32.mrf.mxu0
    %1752 = vmatprep.mubr.bf16.mxu0 0
    %1753 = vmatmul.mubr.bf16.gmra.mxu0 %v1704
    %v1754 = vpop.f32.mrf.mxu0
    %v1755 = vadd.f32 %v1654, %v1754
    %v1756 = vpop.f32.mrf.mxu0
    %v1757 = vpop.f32.mrf.mxu0
    %v1758 = vadd.f32 %v1657, %v1757
    %v1759 = vpop.f32.mrf.mxu0
    %1760 = vmatprep.mubr.bf16.mxu0 0
    %1761 = vmatmul.mubr.bf16.gmra.mxu0 %v1707
    %v1762 = vpop.f32.mrf.mxu0
    %v1763 = vadd.f32 %v1662, %v1762
    %v1764 = vpop.f32.mrf.mxu0
    %v1765 = vpop.f32.mrf.mxu0
    %v1766 = vadd.f32 %v1665, %v1765
    %v1767 = vpop.f32.mrf.mxu0
    %1768 = vmatprep.mubr.bf16.mxu0 0
    %1769 = vmatmul.mubr.bf16.gmra.mxu0 %v1710
    %v1770 = vpop.f32.mrf.mxu0
    %v1771 = vadd.f32 %v1670, %v1770
    %v1772 = vpop.f32.mrf.mxu0
    %v1773 = vpop.f32.mrf.mxu0
    %v1774 = vadd.f32 %v1673, %v1773
    %v1775 = vpop.f32.mrf.mxu0
    %1776 = vdwg.mxu0
    %v1777 = vadd.f32 %v96, %v1747
    %v1778 = vadd.f32 %v97, %v1750
    %v1779 = vadd.f32 %v98, %v1755
    %v1780 = vadd.f32 %v99, %v1758
    %v1781 = vadd.f32 %v100, %v1763
    %v1782 = vadd.f32 %v101, %v1766
    %v1783 = vadd.f32 %v102, %v1771
    %v1784 = vadd.f32 %v103, %v1774
    %v1785 = vld [vmem:[%s7] sm:$0x1]
    %v1787 = vlaneseq
    %v1788 = vshrl.u32 %v1787, 7
    %v1789 = vsub.s32 0, %v1788
    %v1790 = vrot.slane %v1785, %v1789
    %v1792 = vadd.f32 %v1777, %v1790
    %v1793 = vadd.f32 %v1778, %v1790
    %v1794 = vadd.f32 %v1779, %v1790
    %v1795 = vadd.f32 %v1780, %v1790
    %v1796 = vadd.f32 %v1781, %v1790
    %v1797 = vadd.f32 %v1782, %v1790
    %v1798 = vadd.f32 %v1783, %v1790
    %v1799 = vadd.f32 %v1784, %v1790
    %1800 = vadd.xlane.f32.xlu0 %v1792
    %v1801 = vpop.xlane.xlu0 %1800
    %1802 = vadd.xlane.f32.xlu0 %v1793
    %v1803 = vpop.xlane.xlu0 %1802
    %1804 = vadd.xlane.f32.xlu0 %v1794
    %v1805 = vpop.xlane.xlu0 %1804
    %1806 = vadd.xlane.f32.xlu0 %v1795
    %v1807 = vpop.xlane.xlu0 %1806
    %1808 = vadd.xlane.f32.xlu0 %v1796
    %v1809 = vpop.xlane.xlu0 %1808
    %1810 = vadd.xlane.f32.xlu0 %v1797
    %v1811 = vpop.xlane.xlu0 %1810
    %1812 = vadd.xlane.f32.xlu0 %v1798
    %v1813 = vpop.xlane.xlu0 %1812
    %1814 = vadd.xlane.f32.xlu0 %v1799
    %v1815 = vpop.xlane.xlu0 %1814
    %v1816 = vmul.f32 %v1801, %v120
    %v1817 = vmul.f32 %v1803, %v120
    %v1818 = vmul.f32 %v1805, %v120
    %v1819 = vmul.f32 %v1807, %v120
    %v1820 = vmul.f32 %v1809, %v120
    %v1821 = vmul.f32 %v1811, %v120
    %v1822 = vmul.f32 %v1813, %v120
    %v1823 = vmul.f32 %v1815, %v120
    %v1824 = vsub.f32 %v1792, %v1816
    %v1825 = vsub.f32 %v1793, %v1817
    %v1826 = vsub.f32 %v1794, %v1818
    %v1827 = vsub.f32 %v1795, %v1819
    %v1828 = vsub.f32 %v1796, %v1820
    %v1829 = vsub.f32 %v1797, %v1821
    %v1830 = vsub.f32 %v1798, %v1822
    %v1831 = vsub.f32 %v1799, %v1823
    %v1832 = vmul.f32 %v1824, %v1824
    %v1833 = vmul.f32 %v1825, %v1825
    %v1834 = vmul.f32 %v1826, %v1826
    %v1835 = vmul.f32 %v1827, %v1827
    %v1836 = vmul.f32 %v1828, %v1828
    %v1837 = vmul.f32 %v1829, %v1829
    %v1838 = vmul.f32 %v1830, %v1830
    %v1839 = vmul.f32 %v1831, %v1831
    %1840 = vadd.xlane.f32.xlu0 %v1832
    %v1841 = vpop.xlane.xlu0 %1840
    %1842 = vadd.xlane.f32.xlu0 %v1833
    %v1843 = vpop.xlane.xlu0 %1842
    %1844 = vadd.xlane.f32.xlu0 %v1834
    %v1845 = vpop.xlane.xlu0 %1844
    %1846 = vadd.xlane.f32.xlu0 %v1835
    %v1847 = vpop.xlane.xlu0 %1846
    %1848 = vadd.xlane.f32.xlu0 %v1836
    %v1849 = vpop.xlane.xlu0 %1848
    %1850 = vadd.xlane.f32.xlu0 %v1837
    %v1851 = vpop.xlane.xlu0 %1850
    %1852 = vadd.xlane.f32.xlu0 %v1838
    %v1853 = vpop.xlane.xlu0 %1852
    %1854 = vadd.xlane.f32.xlu0 %v1839
    %v1855 = vpop.xlane.xlu0 %1854
    %v1856 = vmul.f32 %v1841, %v120
    %v1857 = vmul.f32 %v1843, %v120
    %v1858 = vmul.f32 %v1845, %v120
    %v1859 = vmul.f32 %v1847, %v120
    %v1860 = vmul.f32 %v1849, %v120
    %v1861 = vmul.f32 %v1851, %v120
    %v1862 = vmul.f32 %v1853, %v120
    %v1863 = vmul.f32 %v1855, %v120
    %v1864 = vadd.f32 %v1856, 1e-05
    %v1865 = vadd.f32 %v1857, 1e-05
    %v1866 = vadd.f32 %v1858, 1e-05
    %v1867 = vadd.f32 %v1859, 1e-05
    %v1868 = vadd.f32 %v1860, 1e-05
    %v1869 = vadd.f32 %v1861, 1e-05
    %v1870 = vadd.f32 %v1862, 1e-05
    %v1871 = vadd.f32 %v1863, 1e-05
    %v1872 = vrsqrt.pop %v1864
    %v1873 = vrsqrt.pop %v1865
    %v1874 = vrsqrt.pop %v1866
    %v1875 = vrsqrt.pop %v1867
    %v1876 = vrsqrt.pop %v1868
    %v1877 = vrsqrt.pop %v1869
    %v1878 = vrsqrt.pop %v1870
    %v1879 = vrsqrt.pop %v1871
    %v1880 = vmul.f32 %v1824, %v1872
    %v1881 = vmul.f32 %v1825, %v1873
    %v1882 = vmul.f32 %v1826, %v1874
    %v1883 = vmul.f32 %v1827, %v1875
    %v1884 = vmul.f32 %v1828, %v1876
    %v1885 = vmul.f32 %v1829, %v1877
    %v1886 = vmul.f32 %v1830, %v1878
    %v1887 = vmul.f32 %v1831, %v1879
    %v1888 = vld [vmem:[%s8] sm:$0x1]
    %v1890 = vlaneseq
    %v1891 = vshrl.u32 %v1890, 7
    %v1892 = vsub.s32 0, %v1891
    %v1893 = vrot.slane %v1888, %v1892
    %v1895 = vmul.f32 %v1880, %v1893
    %v1896 = vmul.f32 %v1881, %v1893
    %v1897 = vmul.f32 %v1882, %v1893
    %v1898 = vmul.f32 %v1883, %v1893
    %v1899 = vmul.f32 %v1884, %v1893
    %v1900 = vmul.f32 %v1885, %v1893
    %v1901 = vmul.f32 %v1886, %v1893
    %v1902 = vmul.f32 %v1887, %v1893
    %v1903 = vld [vmem:[%s9] sm:$0x1]
    %v1905 = vlaneseq
    %v1906 = vshrl.u32 %v1905, 7
    %v1907 = vsub.s32 0, %v1906
    %v1908 = vrot.slane %v1903, %v1907
    %v1910 = vadd.f32 %v1895, %v1908
    %v1911 = vadd.f32 %v1896, %v1908
    %v1912 = vadd.f32 %v1897, %v1908
    %v1913 = vadd.f32 %v1898, %v1908
    %v1914 = vadd.f32 %v1899, %v1908
    %v1915 = vadd.f32 %v1900, %v1908
    %v1916 = vadd.f32 %v1901, %v1908
    %v1917 = vadd.f32 %v1902, %v1908
    %v1918 = vld [vmem:[%s10] sm:$0xff]
    %v1919 = vld [vmem:[%s10 + $0x8] sm:$0xff]
    %v1920 = vld [vmem:[%s10 + $0x10] sm:$0xff]
    %v1921 = vld [vmem:[%s10 + $0x18] sm:$0xff]
    %v1922 = vld [vmem:[%s10 + $0x20] sm:$0xff]
    %v1923 = vld [vmem:[%s10 + $0x28] sm:$0xff]
    %v1924 = vld [vmem:[%s10 + $0x30] sm:$0xff]
    %v1925 = vld [vmem:[%s10 + $0x38] sm:$0xff]
    %v1926 = vld [vmem:[%s10 + $0x40] sm:$0xff]
    %v1927 = vld [vmem:[%s10 + $0x48] sm:$0xff]
    %v1928 = vld [vmem:[%s10 + $0x50] sm:$0xff]
    %v1929 = vld [vmem:[%s10 + $0x58] sm:$0xff]
    %v1930 = vld [vmem:[%s10 + $0x60] sm:$0xff]
    %v1931 = vld [vmem:[%s10 + $0x68] sm:$0xff]
    %v1932 = vld [vmem:[%s10 + $0x70] sm:$0xff]
    %v1933 = vld [vmem:[%s10 + $0x78] sm:$0xff]
    %v1934 = vld [vmem:[%s10 + $0x80] sm:$0xff]
    %v1935 = vld [vmem:[%s10 + $0x88] sm:$0xff]
    %v1936 = vld [vmem:[%s10 + $0x90] sm:$0xff]
    %v1937 = vld [vmem:[%s10 + $0x98] sm:$0xff]
    %v1938 = vld [vmem:[%s10 + $0xa0] sm:$0xff]
    %v1939 = vld [vmem:[%s10 + $0xa8] sm:$0xff]
    %v1940 = vld [vmem:[%s10 + $0xb0] sm:$0xff]
    %v1941 = vld [vmem:[%s10 + $0xb8] sm:$0xff]
    %v1942 = vld [vmem:[%s10 + $0xc0] sm:$0xff]
    %v1943 = vld [vmem:[%s10 + $0xc8] sm:$0xff]
    %v1944 = vld [vmem:[%s10 + $0xd0] sm:$0xff]
    %v1945 = vld [vmem:[%s10 + $0xd8] sm:$0xff]
    %v1946 = vld [vmem:[%s10 + $0xe0] sm:$0xff]
    %v1947 = vld [vmem:[%s10 + $0xe8] sm:$0xff]
    %v1948 = vld [vmem:[%s10 + $0xf0] sm:$0xff]
    %v1949 = vld [vmem:[%s10 + $0xf8] sm:$0xff]
    %v1950 = vpack.c.bf16 %v1911, %v1910
    %v1951 = vpack.c.bf16 %v1913, %v1912
    %v1952 = vpack.c.bf16 %v1915, %v1914
    %v1953 = vpack.c.bf16 %v1917, %v1916
    %v1954 = vld [vmem:[%s11] sm:$0xf]
    %v1956 = vlaneseq
    %v1957 = vshrl.u32 %v1956, 7
    %v1958 = vsub.s32 0, %v1957
    %v1959 = vrot.slane %v1954, %v1958
    %v1960 = vlaneseq
    %v1961 = vshrl.u32 %v1960, 7
    %v1962 = vsub.s32 1, %v1961
    %v1963 = vrot.slane %v1954, %v1962
    %v1964 = vlaneseq
    %v1965 = vshrl.u32 %v1964, 7
    %v1966 = vsub.s32 2, %v1965
    %v1967 = vrot.slane %v1954, %v1966
    %v1968 = vlaneseq
    %v1969 = vshrl.u32 %v1968, 7
    %v1970 = vsub.s32 3, %v1969
    %v1971 = vrot.slane %v1954, %v1970
    %v2008 = vunpack.c.l.b16 %v1918
    %v2009 = vunpack.c.h.b16 %v1918
    %v2010 = vunpack.c.l.b16 %v1919
    %v2011 = vunpack.c.h.b16 %v1919
    %v2012 = vunpack.c.l.b16 %v1920
    %v2013 = vunpack.c.h.b16 %v1920
    %v2014 = vunpack.c.l.b16 %v1921
    %v2015 = vunpack.c.h.b16 %v1921
    %v2016 = vunpack.c.l.b16 %v1922
    %v2017 = vunpack.c.h.b16 %v1922
    %v2018 = vunpack.c.l.b16 %v1923
    %v2019 = vunpack.c.h.b16 %v1923
    %v2020 = vunpack.c.l.b16 %v1924
    %v2021 = vunpack.c.h.b16 %v1924
    %v2022 = vunpack.c.l.b16 %v1925
    %v2023 = vunpack.c.h.b16 %v1925
    %v2024 = vunpack.c.l.b16 %v1926
    %v2025 = vunpack.c.h.b16 %v1926
    %v2026 = vunpack.c.l.b16 %v1927
    %v2027 = vunpack.c.h.b16 %v1927
    %v2028 = vunpack.c.l.b16 %v1928
    %v2029 = vunpack.c.h.b16 %v1928
    %v2030 = vunpack.c.l.b16 %v1929
    %v2031 = vunpack.c.h.b16 %v1929
    %v2032 = vunpack.c.l.b16 %v1930
    %v2033 = vunpack.c.h.b16 %v1930
    %v2034 = vunpack.c.l.b16 %v1931
    %v2035 = vunpack.c.h.b16 %v1931
    %v2036 = vunpack.c.l.b16 %v1932
    %v2037 = vunpack.c.h.b16 %v1932
    %v2038 = vunpack.c.l.b16 %v1933
    %v2039 = vunpack.c.h.b16 %v1933
    %v2040 = vunpack.c.l.b16 %v1934
    %v2041 = vunpack.c.h.b16 %v1934
    %v2042 = vunpack.c.l.b16 %v1935
    %v2043 = vunpack.c.h.b16 %v1935
    %v2044 = vunpack.c.l.b16 %v1936
    %v2045 = vunpack.c.h.b16 %v1936
    %v2046 = vunpack.c.l.b16 %v1937
    %v2047 = vunpack.c.h.b16 %v1937
    %v2048 = vunpack.c.l.b16 %v1938
    %v2049 = vunpack.c.h.b16 %v1938
    %v2050 = vunpack.c.l.b16 %v1939
    %v2051 = vunpack.c.h.b16 %v1939
    %v2052 = vunpack.c.l.b16 %v1940
    %v2053 = vunpack.c.h.b16 %v1940
    %v2054 = vunpack.c.l.b16 %v1941
    %v2055 = vunpack.c.h.b16 %v1941
    %v2056 = vunpack.c.l.b16 %v1942
    %v2057 = vunpack.c.h.b16 %v1942
    %v2058 = vunpack.c.l.b16 %v1943
    %v2059 = vunpack.c.h.b16 %v1943
    %v2060 = vunpack.c.l.b16 %v1944
    %v2061 = vunpack.c.h.b16 %v1944
    %v2062 = vunpack.c.l.b16 %v1945
    %v2063 = vunpack.c.h.b16 %v1945
    %v2064 = vunpack.c.l.b16 %v1946
    %v2065 = vunpack.c.h.b16 %v1946
    %v2066 = vunpack.c.l.b16 %v1947
    %v2067 = vunpack.c.h.b16 %v1947
    %v2068 = vunpack.c.l.b16 %v1948
    %v2069 = vunpack.c.h.b16 %v1948
    %v2070 = vunpack.c.l.b16 %v1949
    %v2071 = vunpack.c.h.b16 %v1949
    %v2072 = vpack.c.b16 %v2012, %v2008
    %v2073 = vpack.c.b16 %v2013, %v2009
    %v2074 = vpack.c.b16 %v2014, %v2010
    %v2075 = vpack.c.b16 %v2015, %v2011
    %v2076 = vpack.c.b16 %v2020, %v2016
    %v2077 = vpack.c.b16 %v2021, %v2017
    %v2078 = vpack.c.b16 %v2022, %v2018
    %v2079 = vpack.c.b16 %v2023, %v2019
    %v2080 = vpack.c.b16 %v2028, %v2024
    %v2081 = vpack.c.b16 %v2029, %v2025
    %v2082 = vpack.c.b16 %v2030, %v2026
    %v2083 = vpack.c.b16 %v2031, %v2027
    %v2084 = vpack.c.b16 %v2036, %v2032
    %v2085 = vpack.c.b16 %v2037, %v2033
    %v2086 = vpack.c.b16 %v2038, %v2034
    %v2087 = vpack.c.b16 %v2039, %v2035
    %v2088 = vpack.c.b16 %v2044, %v2040
    %v2089 = vpack.c.b16 %v2045, %v2041
    %v2090 = vpack.c.b16 %v2046, %v2042
    %v2091 = vpack.c.b16 %v2047, %v2043
    %v2092 = vpack.c.b16 %v2052, %v2048
    %v2093 = vpack.c.b16 %v2053, %v2049
    %v2094 = vpack.c.b16 %v2054, %v2050
    %v2095 = vpack.c.b16 %v2055, %v2051
    %v2096 = vpack.c.b16 %v2060, %v2056
    %v2097 = vpack.c.b16 %v2061, %v2057
    %v2098 = vpack.c.b16 %v2062, %v2058
    %v2099 = vpack.c.b16 %v2063, %v2059
    %v2100 = vpack.c.b16 %v2068, %v2064
    %v2101 = vpack.c.b16 %v2069, %v2065
    %v2102 = vpack.c.b16 %v2070, %v2066
    %v2103 = vpack.c.b16 %v2071, %v2067
    %2136 = vmatprep.subr.bf16.mxu0 %v2101
    %2137 = vmatpush1.bf16.msra.mxu0 %v2100
    %2138 = vmatprep.subr.bf16.mxu0 %v2097
    %2139 = vmatpush1.bf16.msra.mxu0 %v2096
    %2140 = vmatprep.subr.bf16.mxu0 %v2093
    %2141 = vmatpush1.bf16.msra.mxu0 %v2092
    %2142 = vmatprep.subr.bf16.mxu0 %v2089
    %2143 = vmatpush1.bf16.msra.mxu0 %v2088
    %2144 = vmatprep.subr.bf16.mxu0 %v2085
    %2145 = vmatpush1.bf16.msra.mxu0 %v2084
    %2146 = vmatprep.subr.bf16.mxu0 %v2081
    %2147 = vmatpush1.bf16.msra.mxu0 %v2080
    %2148 = vmatprep.subr.bf16.mxu0 %v2077
    %2149 = vmatpush1.bf16.msra.mxu0 %v2076
    %2150 = vmatprep.subr.bf16.mxu0 %v2073
    %2151 = vmatpush1.bf16.msra.mxu0 %v2072
    %2152 = vmatprep.subr.bf16.mxu0 0
    %2153 = vmatpush2.bf16.msra.mxu0 0
    %2154 = vmatprep.subr.bf16.mxu0 0
    %2155 = vmatpush2.bf16.msra.mxu0 0
    %2156 = vmatprep.subr.bf16.mxu0 0
    %2157 = vmatpush2.bf16.msra.mxu0 0
    %2158 = vmatprep.subr.bf16.mxu0 0
    %2159 = vmatpush2.bf16.msra.mxu0 0
    %2160 = vmatprep.subr.bf16.mxu0 0
    %2161 = vmatpush2.bf16.msra.mxu0 0
    %2162 = vmatprep.subr.bf16.mxu0 0
    %2163 = vmatpush2.bf16.msra.mxu0 0
    %2164 = vmatprep.subr.bf16.mxu0 0
    %2165 = vmatpush2.bf16.msra.mxu0 0
    %2166 = vmatprep.subr.bf16.mxu0 0
    %2167 = vmatpush2.bf16.msra.mxu0 0
    %2168 = vmatprep.mubr.bf16.mxu0 0
    %2169 = vmatmul.mubr.bf16.gmra.mxu0 %v1950
    %v2170 = vpop.f32.mrf.mxu0
    %v2171 = vadd.f32 %v1959, %v2170
    %v2172 = vpop.f32.mrf.mxu0
    %v2173 = vadd.f32 %v1963, %v2172
    %v2174 = vpop.f32.mrf.mxu0
    %v2175 = vadd.f32 %v1959, %v2174
    %v2176 = vpop.f32.mrf.mxu0
    %v2177 = vadd.f32 %v1963, %v2176
    %2178 = vmatprep.mubr.bf16.mxu0 0
    %2179 = vmatmul.mubr.bf16.gmra.mxu0 %v1951
    %v2180 = vpop.f32.mrf.mxu0
    %v2181 = vadd.f32 %v1959, %v2180
    %v2182 = vpop.f32.mrf.mxu0
    %v2183 = vadd.f32 %v1963, %v2182
    %v2184 = vpop.f32.mrf.mxu0
    %v2185 = vadd.f32 %v1959, %v2184
    %v2186 = vpop.f32.mrf.mxu0
    %v2187 = vadd.f32 %v1963, %v2186
    %2188 = vmatprep.mubr.bf16.mxu0 0
    %2189 = vmatmul.mubr.bf16.gmra.mxu0 %v1952
    %v2190 = vpop.f32.mrf.mxu0
    %v2191 = vadd.f32 %v1959, %v2190
    %v2192 = vpop.f32.mrf.mxu0
    %v2193 = vadd.f32 %v1963, %v2192
    %v2194 = vpop.f32.mrf.mxu0
    %v2195 = vadd.f32 %v1959, %v2194
    %v2196 = vpop.f32.mrf.mxu0
    %v2197 = vadd.f32 %v1963, %v2196
    %2198 = vmatprep.mubr.bf16.mxu0 0
    %2199 = vmatmul.mubr.bf16.gmra.mxu0 %v1953
    %v2200 = vpop.f32.mrf.mxu0
    %v2201 = vadd.f32 %v1959, %v2200
    %v2202 = vpop.f32.mrf.mxu0
    %v2203 = vadd.f32 %v1963, %v2202
    %v2204 = vpop.f32.mrf.mxu0
    %v2205 = vadd.f32 %v1959, %v2204
    %v2206 = vpop.f32.mrf.mxu0
    %v2207 = vadd.f32 %v1963, %v2206
    %2208 = vdwg.mxu0
    %2209 = vmatprep.subr.bf16.mxu0 %v2103
    %2210 = vmatpush1.bf16.msra.mxu0 %v2102
    %2211 = vmatprep.subr.bf16.mxu0 %v2099
    %2212 = vmatpush1.bf16.msra.mxu0 %v2098
    %2213 = vmatprep.subr.bf16.mxu0 %v2095
    %2214 = vmatpush1.bf16.msra.mxu0 %v2094
    %2215 = vmatprep.subr.bf16.mxu0 %v2091
    %2216 = vmatpush1.bf16.msra.mxu0 %v2090
    %2217 = vmatprep.subr.bf16.mxu0 %v2087
    %2218 = vmatpush1.bf16.msra.mxu0 %v2086
    %2219 = vmatprep.subr.bf16.mxu0 %v2083
    %2220 = vmatpush1.bf16.msra.mxu0 %v2082
    %2221 = vmatprep.subr.bf16.mxu0 %v2079
    %2222 = vmatpush1.bf16.msra.mxu0 %v2078
    %2223 = vmatprep.subr.bf16.mxu0 %v2075
    %2224 = vmatpush1.bf16.msra.mxu0 %v2074
    %2225 = vmatprep.subr.bf16.mxu0 0
    %2226 = vmatpush2.bf16.msra.mxu0 0
    %2227 = vmatprep.subr.bf16.mxu0 0
    %2228 = vmatpush2.bf16.msra.mxu0 0
    %2229 = vmatprep.subr.bf16.mxu0 0
    %2230 = vmatpush2.bf16.msra.mxu0 0
    %2231 = vmatprep.subr.bf16.mxu0 0
    %2232 = vmatpush2.bf16.msra.mxu0 0
    %2233 = vmatprep.subr.bf16.mxu0 0
    %2234 = vmatpush2.bf16.msra.mxu0 0
    %2235 = vmatprep.subr.bf16.mxu0 0
    %2236 = vmatpush2.bf16.msra.mxu0 0
    %2237 = vmatprep.subr.bf16.mxu0 0
    %2238 = vmatpush2.bf16.msra.mxu0 0
    %2239 = vmatprep.subr.bf16.mxu0 0
    %2240 = vmatpush2.bf16.msra.mxu0 0
    %2241 = vmatprep.mubr.bf16.mxu0 0
    %2242 = vmatmul.mubr.bf16.gmra.mxu0 %v1950
    %v2243 = vpop.f32.mrf.mxu0
    %v2244 = vadd.f32 %v1967, %v2243
    %v2245 = vpop.f32.mrf.mxu0
    %v2246 = vadd.f32 %v1971, %v2245
    %v2247 = vpop.f32.mrf.mxu0
    %v2248 = vadd.f32 %v1967, %v2247
    %v2249 = vpop.f32.mrf.mxu0
    %v2250 = vadd.f32 %v1971, %v2249
    %2251 = vmatprep.mubr.bf16.mxu0 0
    %2252 = vmatmul.mubr.bf16.gmra.mxu0 %v1951
    %v2253 = vpop.f32.mrf.mxu0
    %v2254 = vadd.f32 %v1967, %v2253
    %v2255 = vpop.f32.mrf.mxu0
    %v2256 = vadd.f32 %v1971, %v2255
    %v2257 = vpop.f32.mrf.mxu0
    %v2258 = vadd.f32 %v1967, %v2257
    %v2259 = vpop.f32.mrf.mxu0
    %v2260 = vadd.f32 %v1971, %v2259
    %2261 = vmatprep.mubr.bf16.mxu0 0
    %2262 = vmatmul.mubr.bf16.gmra.mxu0 %v1952
    %v2263 = vpop.f32.mrf.mxu0
    %v2264 = vadd.f32 %v1967, %v2263
    %v2265 = vpop.f32.mrf.mxu0
    %v2266 = vadd.f32 %v1971, %v2265
    %v2267 = vpop.f32.mrf.mxu0
    %v2268 = vadd.f32 %v1967, %v2267
    %v2269 = vpop.f32.mrf.mxu0
    %v2270 = vadd.f32 %v1971, %v2269
    %2271 = vmatprep.mubr.bf16.mxu0 0
    %2272 = vmatmul.mubr.bf16.gmra.mxu0 %v1953
    %v2273 = vpop.f32.mrf.mxu0
    %v2274 = vadd.f32 %v1967, %v2273
    %v2275 = vpop.f32.mrf.mxu0
    %v2276 = vadd.f32 %v1971, %v2275
    %v2277 = vpop.f32.mrf.mxu0
    %v2278 = vadd.f32 %v1967, %v2277
    %v2279 = vpop.f32.mrf.mxu0
    %v2280 = vadd.f32 %v1971, %v2279
    %2281 = vdwg.mxu0
    %v2282 = vmul.f32 %v2171, 1.702
    %v2283 = vmul.f32 %v2173, 1.702
    %v2284 = vmul.f32 %v2244, 1.702
    %v2285 = vmul.f32 %v2246, 1.702
    %v2286 = vmul.f32 %v2175, 1.702
    %v2287 = vmul.f32 %v2177, 1.702
    %v2288 = vmul.f32 %v2248, 1.702
    %v2289 = vmul.f32 %v2250, 1.702
    %v2290 = vmul.f32 %v2181, 1.702
    %v2291 = vmul.f32 %v2183, 1.702
    %v2292 = vmul.f32 %v2254, 1.702
    %v2293 = vmul.f32 %v2256, 1.702
    %v2294 = vmul.f32 %v2185, 1.702
    %v2295 = vmul.f32 %v2187, 1.702
    %v2296 = vmul.f32 %v2258, 1.702
    %v2297 = vmul.f32 %v2260, 1.702
    %v2298 = vmul.f32 %v2191, 1.702
    %v2299 = vmul.f32 %v2193, 1.702
    %v2300 = vmul.f32 %v2264, 1.702
    %v2301 = vmul.f32 %v2266, 1.702
    %v2302 = vmul.f32 %v2195, 1.702
    %v2303 = vmul.f32 %v2197, 1.702
    %v2304 = vmul.f32 %v2268, 1.702
    %v2305 = vmul.f32 %v2270, 1.702
    %v2306 = vmul.f32 %v2201, 1.702
    %v2307 = vmul.f32 %v2203, 1.702
    %v2308 = vmul.f32 %v2274, 1.702
    %v2309 = vmul.f32 %v2276, 1.702
    %v2310 = vmul.f32 %v2205, 1.702
    %v2311 = vmul.f32 %v2207, 1.702
    %v2312 = vmul.f32 %v2278, 1.702
    %v2313 = vmul.f32 %v2280, 1.702
    %v2314 = vxor.u32 %v2282, 2147483648
    %v2315 = vxor.u32 %v2283, 2147483648
    %v2316 = vxor.u32 %v2284, 2147483648
    %v2317 = vxor.u32 %v2285, 2147483648
    %v2318 = vxor.u32 %v2286, 2147483648
    %v2319 = vxor.u32 %v2287, 2147483648
    %v2320 = vxor.u32 %v2288, 2147483648
    %v2321 = vxor.u32 %v2289, 2147483648
    %v2322 = vxor.u32 %v2290, 2147483648
    %v2323 = vxor.u32 %v2291, 2147483648
    %v2324 = vxor.u32 %v2292, 2147483648
    %v2325 = vxor.u32 %v2293, 2147483648
    %v2326 = vxor.u32 %v2294, 2147483648
    %v2327 = vxor.u32 %v2295, 2147483648
    %v2328 = vxor.u32 %v2296, 2147483648
    %v2329 = vxor.u32 %v2297, 2147483648
    %v2330 = vxor.u32 %v2298, 2147483648
    %v2331 = vxor.u32 %v2299, 2147483648
    %v2332 = vxor.u32 %v2300, 2147483648
    %v2333 = vxor.u32 %v2301, 2147483648
    %v2334 = vxor.u32 %v2302, 2147483648
    %v2335 = vxor.u32 %v2303, 2147483648
    %v2336 = vxor.u32 %v2304, 2147483648
    %v2337 = vxor.u32 %v2305, 2147483648
    %v2338 = vxor.u32 %v2306, 2147483648
    %v2339 = vxor.u32 %v2307, 2147483648
    %v2340 = vxor.u32 %v2308, 2147483648
    %v2341 = vxor.u32 %v2309, 2147483648
    %v2342 = vxor.u32 %v2310, 2147483648
    %v2343 = vxor.u32 %v2311, 2147483648
    %v2344 = vxor.u32 %v2312, 2147483648
    %v2345 = vxor.u32 %v2313, 2147483648
    %v2346 = vmul.f32 %v2314, 1.442695
    %v2347 = vpow.pop %v2346
    %v2348 = vmul.f32 %v2315, 1.442695
    %v2349 = vpow.pop %v2348
    %v2350 = vmul.f32 %v2316, 1.442695
    %v2351 = vpow.pop %v2350
    %v2352 = vmul.f32 %v2317, 1.442695
    %v2353 = vpow.pop %v2352
    %v2354 = vmul.f32 %v2318, 1.442695
    %v2355 = vpow.pop %v2354
    %v2356 = vmul.f32 %v2319, 1.442695
    %v2357 = vpow.pop %v2356
    %v2358 = vmul.f32 %v2320, 1.442695
    %v2359 = vpow.pop %v2358
    %v2360 = vmul.f32 %v2321, 1.442695
    %v2361 = vpow.pop %v2360
    %v2362 = vmul.f32 %v2322, 1.442695
    %v2363 = vpow.pop %v2362
    %v2364 = vmul.f32 %v2323, 1.442695
    %v2365 = vpow.pop %v2364
    %v2366 = vmul.f32 %v2324, 1.442695
    %v2367 = vpow.pop %v2366
    %v2368 = vmul.f32 %v2325, 1.442695
    %v2369 = vpow.pop %v2368
    %v2370 = vmul.f32 %v2326, 1.442695
    %v2371 = vpow.pop %v2370
    %v2372 = vmul.f32 %v2327, 1.442695
    %v2373 = vpow.pop %v2372
    %v2374 = vmul.f32 %v2328, 1.442695
    %v2375 = vpow.pop %v2374
    %v2376 = vmul.f32 %v2329, 1.442695
    %v2377 = vpow.pop %v2376
    %v2378 = vmul.f32 %v2330, 1.442695
    %v2379 = vpow.pop %v2378
    %v2380 = vmul.f32 %v2331, 1.442695
    %v2381 = vpow.pop %v2380
    %v2382 = vmul.f32 %v2332, 1.442695
    %v2383 = vpow.pop %v2382
    %v2384 = vmul.f32 %v2333, 1.442695
    %v2385 = vpow.pop %v2384
    %v2386 = vmul.f32 %v2334, 1.442695
    %v2387 = vpow.pop %v2386
    %v2388 = vmul.f32 %v2335, 1.442695
    %v2389 = vpow.pop %v2388
    %v2390 = vmul.f32 %v2336, 1.442695
    %v2391 = vpow.pop %v2390
    %v2392 = vmul.f32 %v2337, 1.442695
    %v2393 = vpow.pop %v2392
    %v2394 = vmul.f32 %v2338, 1.442695
    %v2395 = vpow.pop %v2394
    %v2396 = vmul.f32 %v2339, 1.442695
    %v2397 = vpow.pop %v2396
    %v2398 = vmul.f32 %v2340, 1.442695
    %v2399 = vpow.pop %v2398
    %v2400 = vmul.f32 %v2341, 1.442695
    %v2401 = vpow.pop %v2400
    %v2402 = vmul.f32 %v2342, 1.442695
    %v2403 = vpow.pop %v2402
    %v2404 = vmul.f32 %v2343, 1.442695
    %v2405 = vpow.pop %v2404
    %v2406 = vmul.f32 %v2344, 1.442695
    %v2407 = vpow.pop %v2406
    %v2408 = vmul.f32 %v2345, 1.442695
    %v2409 = vpow.pop %v2408
    %v2410 = vadd.f32 %v2347, 1.0
    %v2411 = vadd.f32 %v2349, 1.0
    %v2412 = vadd.f32 %v2351, 1.0
    %v2413 = vadd.f32 %v2353, 1.0
    %v2414 = vadd.f32 %v2355, 1.0
    %v2415 = vadd.f32 %v2357, 1.0
    %v2416 = vadd.f32 %v2359, 1.0
    %v2417 = vadd.f32 %v2361, 1.0
    %v2418 = vadd.f32 %v2363, 1.0
    %v2419 = vadd.f32 %v2365, 1.0
    %v2420 = vadd.f32 %v2367, 1.0
    %v2421 = vadd.f32 %v2369, 1.0
    %v2422 = vadd.f32 %v2371, 1.0
    %v2423 = vadd.f32 %v2373, 1.0
    %v2424 = vadd.f32 %v2375, 1.0
    %v2425 = vadd.f32 %v2377, 1.0
    %v2426 = vadd.f32 %v2379, 1.0
    %v2427 = vadd.f32 %v2381, 1.0
    %v2428 = vadd.f32 %v2383, 1.0
    %v2429 = vadd.f32 %v2385, 1.0
    %v2430 = vadd.f32 %v2387, 1.0
    %v2431 = vadd.f32 %v2389, 1.0
    %v2432 = vadd.f32 %v2391, 1.0
    %v2433 = vadd.f32 %v2393, 1.0
    %v2434 = vadd.f32 %v2395, 1.0
    %v2435 = vadd.f32 %v2397, 1.0
    %v2436 = vadd.f32 %v2399, 1.0
    %v2437 = vadd.f32 %v2401, 1.0
    %v2438 = vadd.f32 %v2403, 1.0
    %v2439 = vadd.f32 %v2405, 1.0
    %v2440 = vadd.f32 %v2407, 1.0
    %v2441 = vadd.f32 %v2409, 1.0
    %v2442 = vrcp.pop %v2410
    %v2443 = vmul.f32 1.0, %v2442
    %v2444 = vrcp.pop %v2411
    %v2445 = vmul.f32 1.0, %v2444
    %v2446 = vrcp.pop %v2412
    %v2447 = vmul.f32 1.0, %v2446
    %v2448 = vrcp.pop %v2413
    %v2449 = vmul.f32 1.0, %v2448
    %v2450 = vrcp.pop %v2414
    %v2451 = vmul.f32 1.0, %v2450
    %v2452 = vrcp.pop %v2415
    %v2453 = vmul.f32 1.0, %v2452
    %v2454 = vrcp.pop %v2416
    %v2455 = vmul.f32 1.0, %v2454
    %v2456 = vrcp.pop %v2417
    %v2457 = vmul.f32 1.0, %v2456
    %v2458 = vrcp.pop %v2418
    %v2459 = vmul.f32 1.0, %v2458
    %v2460 = vrcp.pop %v2419
    %v2461 = vmul.f32 1.0, %v2460
    %v2462 = vrcp.pop %v2420
    %v2463 = vmul.f32 1.0, %v2462
    %v2464 = vrcp.pop %v2421
    %v2465 = vmul.f32 1.0, %v2464
    %v2466 = vrcp.pop %v2422
    %v2467 = vmul.f32 1.0, %v2466
    %v2468 = vrcp.pop %v2423
    %v2469 = vmul.f32 1.0, %v2468
    %v2470 = vrcp.pop %v2424
    %v2471 = vmul.f32 1.0, %v2470
    %v2472 = vrcp.pop %v2425
    %v2473 = vmul.f32 1.0, %v2472
    %v2474 = vrcp.pop %v2426
    %v2475 = vmul.f32 1.0, %v2474
    %v2476 = vrcp.pop %v2427
    %v2477 = vmul.f32 1.0, %v2476
    %v2478 = vrcp.pop %v2428
    %v2479 = vmul.f32 1.0, %v2478
    %v2480 = vrcp.pop %v2429
    %v2481 = vmul.f32 1.0, %v2480
    %v2482 = vrcp.pop %v2430
    %v2483 = vmul.f32 1.0, %v2482
    %v2484 = vrcp.pop %v2431
    %v2485 = vmul.f32 1.0, %v2484
    %v2486 = vrcp.pop %v2432
    %v2487 = vmul.f32 1.0, %v2486
    %v2488 = vrcp.pop %v2433
    %v2489 = vmul.f32 1.0, %v2488
    %v2490 = vrcp.pop %v2434
    %v2491 = vmul.f32 1.0, %v2490
    %v2492 = vrcp.pop %v2435
    %v2493 = vmul.f32 1.0, %v2492
    %v2494 = vrcp.pop %v2436
    %v2495 = vmul.f32 1.0, %v2494
    %v2496 = vrcp.pop %v2437
    %v2497 = vmul.f32 1.0, %v2496
    %v2498 = vrcp.pop %v2438
    %v2499 = vmul.f32 1.0, %v2498
    %v2500 = vrcp.pop %v2439
    %v2501 = vmul.f32 1.0, %v2500
    %v2502 = vrcp.pop %v2440
    %v2503 = vmul.f32 1.0, %v2502
    %v2504 = vrcp.pop %v2441
    %v2505 = vmul.f32 1.0, %v2504
    %v2506 = vmul.f32 %v2171, %v2443
    %v2507 = vmul.f32 %v2173, %v2445
    %v2508 = vmul.f32 %v2244, %v2447
    %v2509 = vmul.f32 %v2246, %v2449
    %v2510 = vmul.f32 %v2175, %v2451
    %v2511 = vmul.f32 %v2177, %v2453
    %v2512 = vmul.f32 %v2248, %v2455
    %v2513 = vmul.f32 %v2250, %v2457
    %v2514 = vmul.f32 %v2181, %v2459
    %v2515 = vmul.f32 %v2183, %v2461
    %v2516 = vmul.f32 %v2254, %v2463
    %v2517 = vmul.f32 %v2256, %v2465
    %v2518 = vmul.f32 %v2185, %v2467
    %v2519 = vmul.f32 %v2187, %v2469
    %v2520 = vmul.f32 %v2258, %v2471
    %v2521 = vmul.f32 %v2260, %v2473
    %v2522 = vmul.f32 %v2191, %v2475
    %v2523 = vmul.f32 %v2193, %v2477
    %v2524 = vmul.f32 %v2264, %v2479
    %v2525 = vmul.f32 %v2266, %v2481
    %v2526 = vmul.f32 %v2195, %v2483
    %v2527 = vmul.f32 %v2197, %v2485
    %v2528 = vmul.f32 %v2268, %v2487
    %v2529 = vmul.f32 %v2270, %v2489
    %v2530 = vmul.f32 %v2201, %v2491
    %v2531 = vmul.f32 %v2203, %v2493
    %v2532 = vmul.f32 %v2274, %v2495
    %v2533 = vmul.f32 %v2276, %v2497
    %v2534 = vmul.f32 %v2205, %v2499
    %v2535 = vmul.f32 %v2207, %v2501
    %v2536 = vmul.f32 %v2278, %v2503
    %v2537 = vmul.f32 %v2280, %v2505
    %v2538 = vld [vmem:[%s12] sm:$0xf]
    %v2539 = vld [vmem:[%s12 + $0x4] sm:$0xf]
    %v2540 = vld [vmem:[%s12 + $0x8] sm:$0xf]
    %v2541 = vld [vmem:[%s12 + $0xc] sm:$0xf]
    %v2542 = vld [vmem:[%s12 + $0x10] sm:$0xf]
    %v2543 = vld [vmem:[%s12 + $0x14] sm:$0xf]
    %v2544 = vld [vmem:[%s12 + $0x18] sm:$0xf]
    %v2545 = vld [vmem:[%s12 + $0x1c] sm:$0xf]
    %v2546 = vld [vmem:[%s12 + $0x20] sm:$0xf]
    %v2547 = vld [vmem:[%s12 + $0x24] sm:$0xf]
    %v2548 = vld [vmem:[%s12 + $0x28] sm:$0xf]
    %v2549 = vld [vmem:[%s12 + $0x2c] sm:$0xf]
    %v2550 = vld [vmem:[%s12 + $0x30] sm:$0xf]
    %v2551 = vld [vmem:[%s12 + $0x34] sm:$0xf]
    %v2552 = vld [vmem:[%s12 + $0x38] sm:$0xf]
    %v2553 = vld [vmem:[%s12 + $0x3c] sm:$0xf]
    %v2554 = vld [vmem:[%s12 + $0x40] sm:$0xf]
    %v2555 = vld [vmem:[%s12 + $0x44] sm:$0xf]
    %v2556 = vld [vmem:[%s12 + $0x48] sm:$0xf]
    %v2557 = vld [vmem:[%s12 + $0x4c] sm:$0xf]
    %v2558 = vld [vmem:[%s12 + $0x50] sm:$0xf]
    %v2559 = vld [vmem:[%s12 + $0x54] sm:$0xf]
    %v2560 = vld [vmem:[%s12 + $0x58] sm:$0xf]
    %v2561 = vld [vmem:[%s12 + $0x5c] sm:$0xf]
    %v2562 = vld [vmem:[%s12 + $0x60] sm:$0xf]
    %v2563 = vld [vmem:[%s12 + $0x64] sm:$0xf]
    %v2564 = vld [vmem:[%s12 + $0x68] sm:$0xf]
    %v2565 = vld [vmem:[%s12 + $0x6c] sm:$0xf]
    %v2566 = vld [vmem:[%s12 + $0x70] sm:$0xf]
    %v2567 = vld [vmem:[%s12 + $0x74] sm:$0xf]
    %v2568 = vld [vmem:[%s12 + $0x78] sm:$0xf]
    %v2569 = vld [vmem:[%s12 + $0x7c] sm:$0xf]
    %v2570 = vld [vmem:[%s12 + $0x80] sm:$0xf]
    %v2571 = vld [vmem:[%s12 + $0x84] sm:$0xf]
    %v2572 = vld [vmem:[%s12 + $0x88] sm:$0xf]
    %v2573 = vld [vmem:[%s12 + $0x8c] sm:$0xf]
    %v2574 = vld [vmem:[%s12 + $0x90] sm:$0xf]
    %v2575 = vld [vmem:[%s12 + $0x94] sm:$0xf]
    %v2576 = vld [vmem:[%s12 + $0x98] sm:$0xf]
    %v2577 = vld [vmem:[%s12 + $0x9c] sm:$0xf]
    %v2578 = vld [vmem:[%s12 + $0xa0] sm:$0xf]
    %v2579 = vld [vmem:[%s12 + $0xa4] sm:$0xf]
    %v2580 = vld [vmem:[%s12 + $0xa8] sm:$0xf]
    %v2581 = vld [vmem:[%s12 + $0xac] sm:$0xf]
    %v2582 = vld [vmem:[%s12 + $0xb0] sm:$0xf]
    %v2583 = vld [vmem:[%s12 + $0xb4] sm:$0xf]
    %v2584 = vld [vmem:[%s12 + $0xb8] sm:$0xf]
    %v2585 = vld [vmem:[%s12 + $0xbc] sm:$0xf]
    %v2586 = vld [vmem:[%s12 + $0xc0] sm:$0xf]
    %v2587 = vld [vmem:[%s12 + $0xc4] sm:$0xf]
    %v2588 = vld [vmem:[%s12 + $0xc8] sm:$0xf]
    %v2589 = vld [vmem:[%s12 + $0xcc] sm:$0xf]
    %v2590 = vld [vmem:[%s12 + $0xd0] sm:$0xf]
    %v2591 = vld [vmem:[%s12 + $0xd4] sm:$0xf]
    %v2592 = vld [vmem:[%s12 + $0xd8] sm:$0xf]
    %v2593 = vld [vmem:[%s12 + $0xdc] sm:$0xf]
    %v2594 = vld [vmem:[%s12 + $0xe0] sm:$0xf]
    %v2595 = vld [vmem:[%s12 + $0xe4] sm:$0xf]
    %v2596 = vld [vmem:[%s12 + $0xe8] sm:$0xf]
    %v2597 = vld [vmem:[%s12 + $0xec] sm:$0xf]
    %v2598 = vld [vmem:[%s12 + $0xf0] sm:$0xf]
    %v2599 = vld [vmem:[%s12 + $0xf4] sm:$0xf]
    %v2600 = vld [vmem:[%s12 + $0xf8] sm:$0xf]
    %v2601 = vld [vmem:[%s12 + $0xfc] sm:$0xf]
    %v2602 = vpack.c.bf16 %v2510, %v2506
    %v2603 = vpack.c.bf16 %v2511, %v2507
    %v2604 = vpack.c.bf16 %v2512, %v2508
    %v2605 = vpack.c.bf16 %v2513, %v2509
    %v2606 = vpack.c.bf16 %v2518, %v2514
    %v2607 = vpack.c.bf16 %v2519, %v2515
    %v2608 = vpack.c.bf16 %v2520, %v2516
    %v2609 = vpack.c.bf16 %v2521, %v2517
    %v2610 = vpack.c.bf16 %v2526, %v2522
    %v2611 = vpack.c.bf16 %v2527, %v2523
    %v2612 = vpack.c.bf16 %v2528, %v2524
    %v2613 = vpack.c.bf16 %v2529, %v2525
    %v2614 = vpack.c.bf16 %v2534, %v2530
    %v2615 = vpack.c.bf16 %v2535, %v2531
    %v2616 = vpack.c.bf16 %v2536, %v2532
    %v2617 = vpack.c.bf16 %v2537, %v2533
    %v2682 = vunpack.c.l.b16 %v2538
    %v2683 = vunpack.c.l.b16 %v2539
    %v2684 = vunpack.c.l.b16 %v2540
    %v2685 = vunpack.c.l.b16 %v2541
    %v2686 = vunpack.c.l.b16 %v2542
    %v2687 = vunpack.c.l.b16 %v2543
    %v2688 = vunpack.c.l.b16 %v2544
    %v2689 = vunpack.c.l.b16 %v2545
    %v2690 = vunpack.c.l.b16 %v2546
    %v2691 = vunpack.c.l.b16 %v2547
    %v2692 = vunpack.c.l.b16 %v2548
    %v2693 = vunpack.c.l.b16 %v2549
    %v2694 = vunpack.c.l.b16 %v2550
    %v2695 = vunpack.c.l.b16 %v2551
    %v2696 = vunpack.c.l.b16 %v2552
    %v2697 = vunpack.c.l.b16 %v2553
    %v2698 = vunpack.c.l.b16 %v2554
    %v2699 = vunpack.c.l.b16 %v2555
    %v2700 = vunpack.c.l.b16 %v2556
    %v2701 = vunpack.c.l.b16 %v2557
    %v2702 = vunpack.c.l.b16 %v2558
    %v2703 = vunpack.c.l.b16 %v2559
    %v2704 = vunpack.c.l.b16 %v2560
    %v2705 = vunpack.c.l.b16 %v2561
    %v2706 = vunpack.c.l.b16 %v2562
    %v2707 = vunpack.c.l.b16 %v2563
    %v2708 = vunpack.c.l.b16 %v2564
    %v2709 = vunpack.c.l.b16 %v2565
    %v2710 = vunpack.c.l.b16 %v2566
    %v2711 = vunpack.c.l.b16 %v2567
    %v2712 = vunpack.c.l.b16 %v2568
    %v2713 = vunpack.c.l.b16 %v2569
    %v2714 = vunpack.c.l.b16 %v2570
    %v2715 = vunpack.c.l.b16 %v2571
    %v2716 = vunpack.c.l.b16 %v2572
    %v2717 = vunpack.c.l.b16 %v2573
    %v2718 = vunpack.c.l.b16 %v2574
    %v2719 = vunpack.c.l.b16 %v2575
    %v2720 = vunpack.c.l.b16 %v2576
    %v2721 = vunpack.c.l.b16 %v2577
    %v2722 = vunpack.c.l.b16 %v2578
    %v2723 = vunpack.c.l.b16 %v2579
    %v2724 = vunpack.c.l.b16 %v2580
    %v2725 = vunpack.c.l.b16 %v2581
    %v2726 = vunpack.c.l.b16 %v2582
    %v2727 = vunpack.c.l.b16 %v2583
    %v2728 = vunpack.c.l.b16 %v2584
    %v2729 = vunpack.c.l.b16 %v2585
    %v2730 = vunpack.c.l.b16 %v2586
    %v2731 = vunpack.c.l.b16 %v2587
    %v2732 = vunpack.c.l.b16 %v2588
    %v2733 = vunpack.c.l.b16 %v2589
    %v2734 = vunpack.c.l.b16 %v2590
    %v2735 = vunpack.c.l.b16 %v2591
    %v2736 = vunpack.c.l.b16 %v2592
    %v2737 = vunpack.c.l.b16 %v2593
    %v2738 = vunpack.c.l.b16 %v2594
    %v2739 = vunpack.c.l.b16 %v2595
    %v2740 = vunpack.c.l.b16 %v2596
    %v2741 = vunpack.c.l.b16 %v2597
    %v2742 = vunpack.c.l.b16 %v2598
    %v2743 = vunpack.c.l.b16 %v2599
    %v2744 = vunpack.c.l.b16 %v2600
    %v2745 = vunpack.c.l.b16 %v2601
    %v2746 = vpack.c.b16 %v2683, %v2682
    %v2747 = vpack.c.b16 %v2685, %v2684
    %v2748 = vpack.c.b16 %v2687, %v2686
    %v2749 = vpack.c.b16 %v2689, %v2688
    %v2750 = vpack.c.b16 %v2691, %v2690
    %v2751 = vpack.c.b16 %v2693, %v2692
    %v2752 = vpack.c.b16 %v2695, %v2694
    %v2753 = vpack.c.b16 %v2697, %v2696
    %v2754 = vpack.c.b16 %v2699, %v2698
    %v2755 = vpack.c.b16 %v2701, %v2700
    %v2756 = vpack.c.b16 %v2703, %v2702
    %v2757 = vpack.c.b16 %v2705, %v2704
    %v2758 = vpack.c.b16 %v2707, %v2706
    %v2759 = vpack.c.b16 %v2709, %v2708
    %v2760 = vpack.c.b16 %v2711, %v2710
    %v2761 = vpack.c.b16 %v2713, %v2712
    %v2762 = vpack.c.b16 %v2715, %v2714
    %v2763 = vpack.c.b16 %v2717, %v2716
    %v2764 = vpack.c.b16 %v2719, %v2718
    %v2765 = vpack.c.b16 %v2721, %v2720
    %v2766 = vpack.c.b16 %v2723, %v2722
    %v2767 = vpack.c.b16 %v2725, %v2724
    %v2768 = vpack.c.b16 %v2727, %v2726
    %v2769 = vpack.c.b16 %v2729, %v2728
    %v2770 = vpack.c.b16 %v2731, %v2730
    %v2771 = vpack.c.b16 %v2733, %v2732
    %v2772 = vpack.c.b16 %v2735, %v2734
    %v2773 = vpack.c.b16 %v2737, %v2736
    %v2774 = vpack.c.b16 %v2739, %v2738
    %v2775 = vpack.c.b16 %v2741, %v2740
    %v2776 = vpack.c.b16 %v2743, %v2742
    %v2777 = vpack.c.b16 %v2745, %v2744
    %2810 = vmatprep.subr.bf16.mxu0 0
    %2811 = vmatpush1.bf16.msra.mxu0 %v2753
    %2812 = vmatprep.subr.bf16.mxu0 0
    %2813 = vmatpush1.bf16.msra.mxu0 %v2752
    %2814 = vmatprep.subr.bf16.mxu0 0
    %2815 = vmatpush1.bf16.msra.mxu0 %v2751
    %2816 = vmatprep.subr.bf16.mxu0 0
    %2817 = vmatpush1.bf16.msra.mxu0 %v2750
    %2818 = vmatprep.subr.bf16.mxu0 0
    %2819 = vmatpush1.bf16.msra.mxu0 %v2749
    %2820 = vmatprep.subr.bf16.mxu0 0
    %2821 = vmatpush1.bf16.msra.mxu0 %v2748
    %2822 = vmatprep.subr.bf16.mxu0 0
    %2823 = vmatpush1.bf16.msra.mxu0 %v2747
    %2824 = vmatprep.subr.bf16.mxu0 0
    %2825 = vmatpush1.bf16.msra.mxu0 %v2746
    %2826 = vmatprep.subr.bf16.mxu0 0
    %2827 = vmatpush2.bf16.msra.mxu0 %v2761
    %2828 = vmatprep.subr.bf16.mxu0 0
    %2829 = vmatpush2.bf16.msra.mxu0 %v2760
    %2830 = vmatprep.subr.bf16.mxu0 0
    %2831 = vmatpush2.bf16.msra.mxu0 %v2759
    %2832 = vmatprep.subr.bf16.mxu0 0
    %2833 = vmatpush2.bf16.msra.mxu0 %v2758
    %2834 = vmatprep.subr.bf16.mxu0 0
    %2835 = vmatpush2.bf16.msra.mxu0 %v2757
    %2836 = vmatprep.subr.bf16.mxu0 0
    %2837 = vmatpush2.bf16.msra.mxu0 %v2756
    %2838 = vmatprep.subr.bf16.mxu0 0
    %2839 = vmatpush2.bf16.msra.mxu0 %v2755
    %2840 = vmatprep.subr.bf16.mxu0 0
    %2841 = vmatpush2.bf16.msra.mxu0 %v2754
    %2842 = vmatprep.mubr.bf16.mxu0 %v2603
    %2843 = vmatmul.mubr.bf16.gmra.mxu0 %v2602
    %v2844 = vpop.f32.mrf.mxu0
    %v2845 = vadd.f32 0.0, %v2844
    %v2846 = vpop.f32.mrf.mxu0
    %v2847 = vpop.f32.mrf.mxu0
    %v2848 = vadd.f32 0.0, %v2847
    %v2849 = vpop.f32.mrf.mxu0
    %2850 = vmatprep.mubr.bf16.mxu0 %v2607
    %2851 = vmatmul.mubr.bf16.gmra.mxu0 %v2606
    %v2852 = vpop.f32.mrf.mxu0
    %v2853 = vadd.f32 0.0, %v2852
    %v2854 = vpop.f32.mrf.mxu0
    %v2855 = vpop.f32.mrf.mxu0
    %v2856 = vadd.f32 0.0, %v2855
    %v2857 = vpop.f32.mrf.mxu0
    %2858 = vmatprep.mubr.bf16.mxu0 %v2611
    %2859 = vmatmul.mubr.bf16.gmra.mxu0 %v2610
    %v2860 = vpop.f32.mrf.mxu0
    %v2861 = vadd.f32 0.0, %v2860
    %v2862 = vpop.f32.mrf.mxu0
    %v2863 = vpop.f32.mrf.mxu0
    %v2864 = vadd.f32 0.0, %v2863
    %v2865 = vpop.f32.mrf.mxu0
    %2866 = vmatprep.mubr.bf16.mxu0 %v2615
    %2867 = vmatmul.mubr.bf16.gmra.mxu0 %v2614
    %v2868 = vpop.f32.mrf.mxu0
    %v2869 = vadd.f32 0.0, %v2868
    %v2870 = vpop.f32.mrf.mxu0
    %v2871 = vpop.f32.mrf.mxu0
    %v2872 = vadd.f32 0.0, %v2871
    %v2873 = vpop.f32.mrf.mxu0
    %2874 = vdwg.mxu0
    %2875 = vmatprep.subr.bf16.mxu0 0
    %2876 = vmatpush1.bf16.msra.mxu0 %v2769
    %2877 = vmatprep.subr.bf16.mxu0 0
    %2878 = vmatpush1.bf16.msra.mxu0 %v2768
    %2879 = vmatprep.subr.bf16.mxu0 0
    %2880 = vmatpush1.bf16.msra.mxu0 %v2767
    %2881 = vmatprep.subr.bf16.mxu0 0
    %2882 = vmatpush1.bf16.msra.mxu0 %v2766
    %2883 = vmatprep.subr.bf16.mxu0 0
    %2884 = vmatpush1.bf16.msra.mxu0 %v2765
    %2885 = vmatprep.subr.bf16.mxu0 0
    %2886 = vmatpush1.bf16.msra.mxu0 %v2764
    %2887 = vmatprep.subr.bf16.mxu0 0
    %2888 = vmatpush1.bf16.msra.mxu0 %v2763
    %2889 = vmatprep.subr.bf16.mxu0 0
    %2890 = vmatpush1.bf16.msra.mxu0 %v2762
    %2891 = vmatprep.subr.bf16.mxu0 0
    %2892 = vmatpush2.bf16.msra.mxu0 %v2777
    %2893 = vmatprep.subr.bf16.mxu0 0
    %2894 = vmatpush2.bf16.msra.mxu0 %v2776
    %2895 = vmatprep.subr.bf16.mxu0 0
    %2896 = vmatpush2.bf16.msra.mxu0 %v2775
    %2897 = vmatprep.subr.bf16.mxu0 0
    %2898 = vmatpush2.bf16.msra.mxu0 %v2774
    %2899 = vmatprep.subr.bf16.mxu0 0
    %2900 = vmatpush2.bf16.msra.mxu0 %v2773
    %2901 = vmatprep.subr.bf16.mxu0 0
    %2902 = vmatpush2.bf16.msra.mxu0 %v2772
    %2903 = vmatprep.subr.bf16.mxu0 0
    %2904 = vmatpush2.bf16.msra.mxu0 %v2771
    %2905 = vmatprep.subr.bf16.mxu0 0
    %2906 = vmatpush2.bf16.msra.mxu0 %v2770
    %2907 = vmatprep.mubr.bf16.mxu0 %v2605
    %2908 = vmatmul.mubr.bf16.gmra.mxu0 %v2604
    %v2909 = vpop.f32.mrf.mxu0
    %v2910 = vadd.f32 %v2845, %v2909
    %v2911 = vpop.f32.mrf.mxu0
    %v2912 = vpop.f32.mrf.mxu0
    %v2913 = vadd.f32 %v2848, %v2912
    %v2914 = vpop.f32.mrf.mxu0
    %2915 = vmatprep.mubr.bf16.mxu0 %v2609
    %2916 = vmatmul.mubr.bf16.gmra.mxu0 %v2608
    %v2917 = vpop.f32.mrf.mxu0
    %v2918 = vadd.f32 %v2853, %v2917
    %v2919 = vpop.f32.mrf.mxu0
    %v2920 = vpop.f32.mrf.mxu0
    %v2921 = vadd.f32 %v2856, %v2920
    %v2922 = vpop.f32.mrf.mxu0
    %2923 = vmatprep.mubr.bf16.mxu0 %v2613
    %2924 = vmatmul.mubr.bf16.gmra.mxu0 %v2612
    %v2925 = vpop.f32.mrf.mxu0
    %v2926 = vadd.f32 %v2861, %v2925
    %v2927 = vpop.f32.mrf.mxu0
    %v2928 = vpop.f32.mrf.mxu0
    %v2929 = vadd.f32 %v2864, %v2928
    %v2930 = vpop.f32.mrf.mxu0
    %2931 = vmatprep.mubr.bf16.mxu0 %v2617
    %2932 = vmatmul.mubr.bf16.gmra.mxu0 %v2616
    %v2933 = vpop.f32.mrf.mxu0
    %v2934 = vadd.f32 %v2869, %v2933
    %v2935 = vpop.f32.mrf.mxu0
    %v2936 = vpop.f32.mrf.mxu0
    %v2937 = vadd.f32 %v2872, %v2936
    %v2938 = vpop.f32.mrf.mxu0
    %2939 = vdwg.mxu0
    %v2940 = vadd.f32 %v1792, %v2910
    %v2941 = vadd.f32 %v1793, %v2913
    %v2942 = vadd.f32 %v1794, %v2918
    %v2943 = vadd.f32 %v1795, %v2921
    %v2944 = vadd.f32 %v1796, %v2926
    %v2945 = vadd.f32 %v1797, %v2929
    %v2946 = vadd.f32 %v1798, %v2934
    %v2947 = vadd.f32 %v1799, %v2937
    %v2948 = vld [vmem:[%s13] sm:$0x1]
    %v2950 = vlaneseq
    %v2951 = vshrl.u32 %v2950, 7
    %v2952 = vsub.s32 0, %v2951
    %v2953 = vrot.slane %v2948, %v2952
    %v2955 = vadd.f32 %v2940, %v2953
    %v2956 = vadd.f32 %v2941, %v2953
    %v2957 = vadd.f32 %v2942, %v2953
    %v2958 = vadd.f32 %v2943, %v2953
    %v2959 = vadd.f32 %v2944, %v2953
    %v2960 = vadd.f32 %v2945, %v2953
    %v2961 = vadd.f32 %v2946, %v2953
    %v2962 = vadd.f32 %v2947, %v2953
    %2963 = vadd.xlane.f32.xlu0 %v2955
    %v2964 = vpop.xlane.xlu0 %2963
    %2965 = vadd.xlane.f32.xlu0 %v2956
    %v2966 = vpop.xlane.xlu0 %2965
    %2967 = vadd.xlane.f32.xlu0 %v2957
    %v2968 = vpop.xlane.xlu0 %2967
    %2969 = vadd.xlane.f32.xlu0 %v2958
    %v2970 = vpop.xlane.xlu0 %2969
    %2971 = vadd.xlane.f32.xlu0 %v2959
    %v2972 = vpop.xlane.xlu0 %2971
    %2973 = vadd.xlane.f32.xlu0 %v2960
    %v2974 = vpop.xlane.xlu0 %2973
    %2975 = vadd.xlane.f32.xlu0 %v2961
    %v2976 = vpop.xlane.xlu0 %2975
    %2977 = vadd.xlane.f32.xlu0 %v2962
    %v2978 = vpop.xlane.xlu0 %2977
    %v2979 = vmul.f32 %v2964, %v120
    %v2980 = vmul.f32 %v2966, %v120
    %v2981 = vmul.f32 %v2968, %v120
    %v2982 = vmul.f32 %v2970, %v120
    %v2983 = vmul.f32 %v2972, %v120
    %v2984 = vmul.f32 %v2974, %v120
    %v2985 = vmul.f32 %v2976, %v120
    %v2986 = vmul.f32 %v2978, %v120
    %v2987 = vsub.f32 %v2955, %v2979
    %v2988 = vsub.f32 %v2956, %v2980
    %v2989 = vsub.f32 %v2957, %v2981
    %v2990 = vsub.f32 %v2958, %v2982
    %v2991 = vsub.f32 %v2959, %v2983
    %v2992 = vsub.f32 %v2960, %v2984
    %v2993 = vsub.f32 %v2961, %v2985
    %v2994 = vsub.f32 %v2962, %v2986
    %v2995 = vmul.f32 %v2987, %v2987
    %v2996 = vmul.f32 %v2988, %v2988
    %v2997 = vmul.f32 %v2989, %v2989
    %v2998 = vmul.f32 %v2990, %v2990
    %v2999 = vmul.f32 %v2991, %v2991
    %v3000 = vmul.f32 %v2992, %v2992
    %v3001 = vmul.f32 %v2993, %v2993
    %v3002 = vmul.f32 %v2994, %v2994
    %3003 = vadd.xlane.f32.xlu0 %v2995
    %v3004 = vpop.xlane.xlu0 %3003
    %3005 = vadd.xlane.f32.xlu0 %v2996
    %v3006 = vpop.xlane.xlu0 %3005
    %3007 = vadd.xlane.f32.xlu0 %v2997
    %v3008 = vpop.xlane.xlu0 %3007
    %3009 = vadd.xlane.f32.xlu0 %v2998
    %v3010 = vpop.xlane.xlu0 %3009
    %3011 = vadd.xlane.f32.xlu0 %v2999
    %v3012 = vpop.xlane.xlu0 %3011
    %3013 = vadd.xlane.f32.xlu0 %v3000
    %v3014 = vpop.xlane.xlu0 %3013
    %3015 = vadd.xlane.f32.xlu0 %v3001
    %v3016 = vpop.xlane.xlu0 %3015
    %3017 = vadd.xlane.f32.xlu0 %v3002
    %v3018 = vpop.xlane.xlu0 %3017
    %v3019 = vmul.f32 %v3004, %v120
    %v3020 = vmul.f32 %v3006, %v120
    %v3021 = vmul.f32 %v3008, %v120
    %v3022 = vmul.f32 %v3010, %v120
    %v3023 = vmul.f32 %v3012, %v120
    %v3024 = vmul.f32 %v3014, %v120
    %v3025 = vmul.f32 %v3016, %v120
    %v3026 = vmul.f32 %v3018, %v120
    %v3027 = vadd.f32 %v3019, 1e-05
    %v3028 = vadd.f32 %v3020, 1e-05
    %v3029 = vadd.f32 %v3021, 1e-05
    %v3030 = vadd.f32 %v3022, 1e-05
    %v3031 = vadd.f32 %v3023, 1e-05
    %v3032 = vadd.f32 %v3024, 1e-05
    %v3033 = vadd.f32 %v3025, 1e-05
    %v3034 = vadd.f32 %v3026, 1e-05
    %v3035 = vrsqrt.pop %v3027
    %v3036 = vrsqrt.pop %v3028
    %v3037 = vrsqrt.pop %v3029
    %v3038 = vrsqrt.pop %v3030
    %v3039 = vrsqrt.pop %v3031
    %v3040 = vrsqrt.pop %v3032
    %v3041 = vrsqrt.pop %v3033
    %v3042 = vrsqrt.pop %v3034
    %v3043 = vmul.f32 %v2987, %v3035
    %v3044 = vmul.f32 %v2988, %v3036
    %v3045 = vmul.f32 %v2989, %v3037
    %v3046 = vmul.f32 %v2990, %v3038
    %v3047 = vmul.f32 %v2991, %v3039
    %v3048 = vmul.f32 %v2992, %v3040
    %v3049 = vmul.f32 %v2993, %v3041
    %v3050 = vmul.f32 %v2994, %v3042
    %v3051 = vld [vmem:[%s14] sm:$0x1]
    %v3053 = vlaneseq
    %v3054 = vshrl.u32 %v3053, 7
    %v3055 = vsub.s32 0, %v3054
    %v3056 = vrot.slane %v3051, %v3055
    %v3058 = vmul.f32 %v3043, %v3056
    %v3059 = vmul.f32 %v3044, %v3056
    %v3060 = vmul.f32 %v3045, %v3056
    %v3061 = vmul.f32 %v3046, %v3056
    %v3062 = vmul.f32 %v3047, %v3056
    %v3063 = vmul.f32 %v3048, %v3056
    %v3064 = vmul.f32 %v3049, %v3056
    %v3065 = vmul.f32 %v3050, %v3056
    %v3066 = vld [vmem:[%s15] sm:$0x1]
    %v3068 = vlaneseq
    %v3069 = vshrl.u32 %v3068, 7
    %v3070 = vsub.s32 0, %v3069
    %v3071 = vrot.slane %v3066, %v3070
    %v3073 = vadd.f32 %v3058, %v3071
    %v3074 = vadd.f32 %v3059, %v3071
    %v3075 = vadd.f32 %v3060, %v3071
    %v3076 = vadd.f32 %v3061, %v3071
    %v3077 = vadd.f32 %v3062, %v3071
    %v3078 = vadd.f32 %v3063, %v3071
    %v3079 = vadd.f32 %v3064, %v3071
    %v3080 = vadd.f32 %v3065, %v3071
    %v3081 = vld [vmem:[%s17] sm:$0xf]
    %v3082 = vlaneseq
    %v3083 = vshrl.u32 %v3082, 7
    %v3084 = vsub.s32 0, %v3083
    %v3085 = vrot.slane %v3081, %v3084
    %3087 = vbcast.lane.b32.xlu0 %v3085, 256
    %v3088 = vpop.permute.xlu0 %3087
    %s3090 = sor.u32 256, 8
    %3091 = vbcast.lane.b32.xlu0 %v3085, %s3090
    %v3092 = vpop.permute.xlu0 %3091
    %v3093 = vlaneseq
    %v3094 = vshrl.u32 %v3093, 7
    %v3095 = vsub.s32 1, %v3094
    %v3096 = vrot.slane %v3081, %v3095
    %3098 = vbcast.lane.b32.xlu0 %v3096, 256
    %v3099 = vpop.permute.xlu0 %3098
    %s3101 = sor.u32 256, 8
    %3102 = vbcast.lane.b32.xlu0 %v3096, %s3101
    %v3103 = vpop.permute.xlu0 %3102
    %v3104 = vlaneseq
    %v3105 = vshrl.u32 %v3104, 7
    %v3106 = vsub.s32 2, %v3105
    %v3107 = vrot.slane %v3081, %v3106
    %3109 = vbcast.lane.b32.xlu0 %v3107, 256
    %v3110 = vpop.permute.xlu0 %3109
    %s3112 = sor.u32 256, 8
    %3113 = vbcast.lane.b32.xlu0 %v3107, %s3112
    %v3114 = vpop.permute.xlu0 %3113
    %v3115 = vlaneseq
    %v3116 = vshrl.u32 %v3115, 7
    %v3117 = vsub.s32 3, %v3116
    %v3118 = vrot.slane %v3081, %v3117
    %3120 = vbcast.lane.b32.xlu0 %v3118, 256
    %v3121 = vpop.permute.xlu0 %3120
    %s3123 = sor.u32 256, 8
    %3124 = vbcast.lane.b32.xlu0 %v3118, %s3123
    %v3125 = vpop.permute.xlu0 %3124
    %v3126 = vmul.f32 %v3088, %v3073
    %v3127 = vmul.f32 %v3092, %v3074
    %v3128 = vmul.f32 %v3099, %v3075
    %v3129 = vmul.f32 %v3103, %v3076
    %v3130 = vmul.f32 %v3110, %v3077
    %v3131 = vmul.f32 %v3114, %v3078
    %v3132 = vmul.f32 %v3121, %v3079
    %v3133 = vmul.f32 %v3125, %v3080
    %v3134 = vadd.f32 %v3126, %v3127
    %v3135 = vrot.slane %v3134, 4
    %v3136 = vadd.f32 %v3134, %v3135
    %v3137 = vrot.slane %v3136, 2
    %v3138 = vadd.f32 %v3136, %v3137
    %v3139 = vrot.slane %v3138, 1
    %v3140 = vadd.f32 %v3138, %v3139
    %v3141 = vadd.f32 %v3128, %v3129
    %v3142 = vrot.slane %v3141, 4
    %v3143 = vadd.f32 %v3141, %v3142
    %v3144 = vrot.slane %v3143, 2
    %v3145 = vadd.f32 %v3143, %v3144
    %v3146 = vrot.slane %v3145, 1
    %v3147 = vadd.f32 %v3145, %v3146
    %v3148 = vadd.f32 %v3130, %v3131
    %v3149 = vrot.slane %v3148, 4
    %v3150 = vadd.f32 %v3148, %v3149
    %v3151 = vrot.slane %v3150, 2
    %v3152 = vadd.f32 %v3150, %v3151
    %v3153 = vrot.slane %v3152, 1
    %v3154 = vadd.f32 %v3152, %v3153
    %v3155 = vadd.f32 %v3132, %v3133
    %v3156 = vrot.slane %v3155, 4
    %v3157 = vadd.f32 %v3155, %v3156
    %v3158 = vrot.slane %v3157, 2
    %v3159 = vadd.f32 %v3157, %v3158
    %v3160 = vrot.slane %v3159, 1
    %v3161 = vadd.f32 %v3159, %v3160
    %v3162 = vld [vmem:[%s16] sm:$0xf]
    %v3163 = vld [vmem:[%s16 + $0x4] sm:$0xf]
    %v3164 = vld [vmem:[%s16 + $0x8] sm:$0xf]
    %v3165 = vld [vmem:[%s16 + $0xc] sm:$0xf]
    %v3166 = vld [vmem:[%s16 + $0x10] sm:$0xf]
    %v3167 = vld [vmem:[%s16 + $0x14] sm:$0xf]
    %v3168 = vld [vmem:[%s16 + $0x18] sm:$0xf]
    %v3169 = vld [vmem:[%s16 + $0x1c] sm:$0xf]
    %v3170 = vld [vmem:[%s16 + $0x20] sm:$0xf]
    %v3171 = vld [vmem:[%s16 + $0x24] sm:$0xf]
    %v3172 = vld [vmem:[%s16 + $0x28] sm:$0xf]
    %v3173 = vld [vmem:[%s16 + $0x2c] sm:$0xf]
    %v3174 = vld [vmem:[%s16 + $0x30] sm:$0xf]
    %v3175 = vld [vmem:[%s16 + $0x34] sm:$0xf]
    %v3176 = vld [vmem:[%s16 + $0x38] sm:$0xf]
    %v3177 = vld [vmem:[%s16 + $0x3c] sm:$0xf]
    %v3178 = vpack.c.bf16 %v3140, %v3140
    %v3179 = vpack.c.bf16 %v3147, %v3147
    %v3180 = vpack.c.bf16 %v3154, %v3154
    %v3181 = vpack.c.bf16 %v3161, %v3161
    %v3186 = vunpack.c.l.b16 %v3178
    %v3187 = vunpack.c.l.b16 %v3179
    %v3188 = vunpack.c.l.b16 %v3180
    %v3189 = vunpack.c.l.b16 %v3181
    %vm3190 = vcmask 1041409
    %v3191 = vsel %vm3190, %v3187, %v3186
    %vm3192 = vcmask 1042434
    %v3193 = vsel %vm3192, %v3188, %v3191
    %vm3194 = vcmask 1043459
    %v3195 = vsel %vm3194, %v3189, %v3193
    %v3196 = vpack.c.b16 %v3195, %v3195
    %v3214 = vunpack.c.l.b16 %v3162
    %v3215 = vunpack.c.l.b16 %v3163
    %v3216 = vunpack.c.l.b16 %v3164
    %v3217 = vunpack.c.l.b16 %v3165
    %v3218 = vunpack.c.l.b16 %v3166
    %v3219 = vunpack.c.l.b16 %v3167
    %v3220 = vunpack.c.l.b16 %v3168
    %v3221 = vunpack.c.l.b16 %v3169
    %v3222 = vunpack.c.l.b16 %v3170
    %v3223 = vunpack.c.l.b16 %v3171
    %v3224 = vunpack.c.l.b16 %v3172
    %v3225 = vunpack.c.l.b16 %v3173
    %v3226 = vunpack.c.l.b16 %v3174
    %v3227 = vunpack.c.l.b16 %v3175
    %v3228 = vunpack.c.l.b16 %v3176
    %v3229 = vunpack.c.l.b16 %v3177
    %v3230 = vpack.c.b16 %v3215, %v3214
    %v3231 = vpack.c.b16 %v3217, %v3216
    %v3232 = vpack.c.b16 %v3219, %v3218
    %v3233 = vpack.c.b16 %v3221, %v3220
    %v3234 = vpack.c.b16 %v3223, %v3222
    %v3235 = vpack.c.b16 %v3225, %v3224
    %v3236 = vpack.c.b16 %v3227, %v3226
    %v3237 = vpack.c.b16 %v3229, %v3228
    %3246 = vmatprep.subr.bf16.mxu0 0
    %3247 = vmatpush1.bf16.msra.mxu0 %v3237
    %3248 = vmatprep.subr.bf16.mxu0 0
    %3249 = vmatpush1.bf16.msra.mxu0 %v3236
    %3250 = vmatprep.subr.bf16.mxu0 0
    %3251 = vmatpush1.bf16.msra.mxu0 %v3235
    %3252 = vmatprep.subr.bf16.mxu0 0
    %3253 = vmatpush1.bf16.msra.mxu0 %v3234
    %3254 = vmatprep.subr.bf16.mxu0 0
    %3255 = vmatpush1.bf16.msra.mxu0 %v3233
    %3256 = vmatprep.subr.bf16.mxu0 0
    %3257 = vmatpush1.bf16.msra.mxu0 %v3232
    %3258 = vmatprep.subr.bf16.mxu0 0
    %3259 = vmatpush1.bf16.msra.mxu0 %v3231
    %3260 = vmatprep.subr.bf16.mxu0 0
    %3261 = vmatpush1.bf16.msra.mxu0 %v3230
    %3262 = vmatprep.subr.bf16.mxu0 0
    %3263 = vmatpush2.bf16.msra.mxu0 0
    %3264 = vmatprep.subr.bf16.mxu0 0
    %3265 = vmatpush2.bf16.msra.mxu0 0
    %3266 = vmatprep.subr.bf16.mxu0 0
    %3267 = vmatpush2.bf16.msra.mxu0 0
    %3268 = vmatprep.subr.bf16.mxu0 0
    %3269 = vmatpush2.bf16.msra.mxu0 0
    %3270 = vmatprep.subr.bf16.mxu0 0
    %3271 = vmatpush2.bf16.msra.mxu0 0
    %3272 = vmatprep.subr.bf16.mxu0 0
    %3273 = vmatpush2.bf16.msra.mxu0 0
    %3274 = vmatprep.subr.bf16.mxu0 0
    %3275 = vmatpush2.bf16.msra.mxu0 0
    %3276 = vmatprep.subr.bf16.mxu0 0
    %3277 = vmatpush2.bf16.msra.mxu0 0
    %3278 = vmatprep.mubr.bf16.mxu0 0
    %3279 = vmatmul.mubr.bf16.gmra.mxu0 %v3196
    %v3280 = vpop.f32.mrf.mxu0
    %v3281 = vadd.f32 0.0, %v3280
    %v3282 = vpop.f32.mrf.mxu0
    %v3283 = vpop.f32.mrf.mxu0
    %v3284 = vpop.f32.mrf.mxu0
    %3285 = vdwg.mxu0
    %v3286 = vld [vmem:[%s19] sm:$0xff]
    %v3287 = vld [vmem:[%s19 + $0x8] sm:$0xff]
    %v3288 = vld [vmem:[%s18] sm:$0xff]
    %v3289 = vld [vmem:[%s18 + $0x8] sm:$0xff]
    %v3290 = vpack.c.bf16 %v3287, %v3286
    %v3291 = vpack.c.bf16 %v3289, %v3288
    %v3293 = vsel %vm782, %v3290, 0
    %3295 = vmatprep.subr.bf16.mxu0 0
    %3296 = vmatpush1.bf16.msra.mxu0 0
    %3297 = vmatprep.subr.bf16.mxu0 0
    %3298 = vmatpush1.bf16.msra.mxu0 0
    %3299 = vmatprep.subr.bf16.mxu0 0
    %3300 = vmatpush1.bf16.msra.mxu0 0
    %3301 = vmatprep.subr.bf16.mxu0 0
    %3302 = vmatpush1.bf16.msra.mxu0 0
    %3303 = vmatprep.subr.bf16.mxu0 0
    %3304 = vmatpush1.bf16.msra.mxu0 0
    %3305 = vmatprep.subr.bf16.mxu0 0
    %3306 = vmatpush1.bf16.msra.mxu0 0
    %3307 = vmatprep.subr.bf16.mxu0 0
    %3308 = vmatpush1.bf16.msra.mxu0 0
    %3309 = vmatprep.subr.bf16.mxu0 0
    %3310 = vmatpush1.bf16.msra.mxu0 %v3291
    %3311 = vmatprep.subr.bf16.mxu0 0
    %3312 = vmatpush2.bf16.msra.mxu0 0
    %3313 = vmatprep.subr.bf16.mxu0 0
    %3314 = vmatpush2.bf16.msra.mxu0 0
    %3315 = vmatprep.subr.bf16.mxu0 0
    %3316 = vmatpush2.bf16.msra.mxu0 0
    %3317 = vmatprep.subr.bf16.mxu0 0
    %3318 = vmatpush2.bf16.msra.mxu0 0
    %3319 = vmatprep.subr.bf16.mxu0 0
    %3320 = vmatpush2.bf16.msra.mxu0 0
    %3321 = vmatprep.subr.bf16.mxu0 0
    %3322 = vmatpush2.bf16.msra.mxu0 0
    %3323 = vmatprep.subr.bf16.mxu0 0
    %3324 = vmatpush2.bf16.msra.mxu0 0
    %3325 = vmatprep.subr.bf16.mxu0 0
    %3326 = vmatpush2.bf16.msra.mxu0 0
    %3327 = vmatprep.mubr.bf16.mxu0 0
    %3328 = vmatmul.mubr.bf16.gmra.mxu0 %v3293
    %v3329 = vpop.f32.mrf.mxu0
    %v3330 = vadd.f32 0.0, %v3329
    %v3331 = vpop.f32.mrf.mxu0
    %v3332 = vpop.f32.mrf.mxu0
    %v3333 = vadd.f32 0.0, %v3332
    %v3334 = vpop.f32.mrf.mxu0
    %3335 = vdwg.mxu0
    %v3336 = vld [vmem:[%s21] sm:$0xf]
    %v3337 = vld [vmem:[%s21 + $0x4] sm:$0xf]
    %v3338 = vld [vmem:[%s21 + $0x8] sm:$0xf]
    %v3339 = vld [vmem:[%s21 + $0xc] sm:$0xf]
    %v3340 = vld [vmem:[%s21 + $0x10] sm:$0xf]
    %v3341 = vld [vmem:[%s21 + $0x14] sm:$0xf]
    %v3342 = vld [vmem:[%s21 + $0x18] sm:$0xf]
    %v3343 = vld [vmem:[%s21 + $0x1c] sm:$0xf]
    %v3344 = vld [vmem:[%s21 + $0x20] sm:$0xf]
    %v3345 = vld [vmem:[%s21 + $0x24] sm:$0xf]
    %v3346 = vld [vmem:[%s21 + $0x28] sm:$0xf]
    %v3347 = vld [vmem:[%s21 + $0x2c] sm:$0xf]
    %v3348 = vld [vmem:[%s21 + $0x30] sm:$0xf]
    %v3349 = vld [vmem:[%s21 + $0x34] sm:$0xf]
    %v3350 = vld [vmem:[%s21 + $0x38] sm:$0xf]
    %v3351 = vld [vmem:[%s21 + $0x3c] sm:$0xf]
    %v3352 = vpack.c.bf16 %v3333, %v3330
    %v3353 = vld [vmem:[%s22] sm:$0x1]
    %v3355 = vlaneseq
    %v3356 = vshrl.u32 %v3355, 7
    %v3357 = vsub.s32 0, %v3356
    %v3358 = vrot.slane %v3353, %v3357
    %v3376 = vunpack.c.l.b16 %v3336
    %v3377 = vunpack.c.l.b16 %v3337
    %v3378 = vunpack.c.l.b16 %v3338
    %v3379 = vunpack.c.l.b16 %v3339
    %v3380 = vunpack.c.l.b16 %v3340
    %v3381 = vunpack.c.l.b16 %v3341
    %v3382 = vunpack.c.l.b16 %v3342
    %v3383 = vunpack.c.l.b16 %v3343
    %v3384 = vunpack.c.l.b16 %v3344
    %v3385 = vunpack.c.l.b16 %v3345
    %v3386 = vunpack.c.l.b16 %v3346
    %v3387 = vunpack.c.l.b16 %v3347
    %v3388 = vunpack.c.l.b16 %v3348
    %v3389 = vunpack.c.l.b16 %v3349
    %v3390 = vunpack.c.l.b16 %v3350
    %v3391 = vunpack.c.l.b16 %v3351
    %v3392 = vpack.c.b16 %v3377, %v3376
    %v3393 = vpack.c.b16 %v3379, %v3378
    %v3394 = vpack.c.b16 %v3381, %v3380
    %v3395 = vpack.c.b16 %v3383, %v3382
    %v3396 = vpack.c.b16 %v3385, %v3384
    %v3397 = vpack.c.b16 %v3387, %v3386
    %v3398 = vpack.c.b16 %v3389, %v3388
    %v3399 = vpack.c.b16 %v3391, %v3390
    %3408 = vmatprep.subr.bf16.mxu0 0
    %3409 = vmatpush1.bf16.msra.mxu0 %v3399
    %3410 = vmatprep.subr.bf16.mxu0 0
    %3411 = vmatpush1.bf16.msra.mxu0 %v3398
    %3412 = vmatprep.subr.bf16.mxu0 0
    %3413 = vmatpush1.bf16.msra.mxu0 %v3397
    %3414 = vmatprep.subr.bf16.mxu0 0
    %3415 = vmatpush1.bf16.msra.mxu0 %v3396
    %3416 = vmatprep.subr.bf16.mxu0 0
    %3417 = vmatpush1.bf16.msra.mxu0 %v3395
    %3418 = vmatprep.subr.bf16.mxu0 0
    %3419 = vmatpush1.bf16.msra.mxu0 %v3394
    %3420 = vmatprep.subr.bf16.mxu0 0
    %3421 = vmatpush1.bf16.msra.mxu0 %v3393
    %3422 = vmatprep.subr.bf16.mxu0 0
    %3423 = vmatpush1.bf16.msra.mxu0 %v3392
    %3424 = vmatprep.subr.bf16.mxu0 0
    %3425 = vmatpush2.bf16.msra.mxu0 0
    %3426 = vmatprep.subr.bf16.mxu0 0
    %3427 = vmatpush2.bf16.msra.mxu0 0
    %3428 = vmatprep.subr.bf16.mxu0 0
    %3429 = vmatpush2.bf16.msra.mxu0 0
    %3430 = vmatprep.subr.bf16.mxu0 0
    %3431 = vmatpush2.bf16.msra.mxu0 0
    %3432 = vmatprep.subr.bf16.mxu0 0
    %3433 = vmatpush2.bf16.msra.mxu0 0
    %3434 = vmatprep.subr.bf16.mxu0 0
    %3435 = vmatpush2.bf16.msra.mxu0 0
    %3436 = vmatprep.subr.bf16.mxu0 0
    %3437 = vmatpush2.bf16.msra.mxu0 0
    %3438 = vmatprep.subr.bf16.mxu0 0
    %3439 = vmatpush2.bf16.msra.mxu0 0
    %3440 = vmatprep.mubr.bf16.mxu0 0
    %3441 = vmatmul.mubr.bf16.gmra.mxu0 %v3352
    %v3442 = vpop.f32.mrf.mxu0
    %v3443 = vadd.f32 %v3358, %v3442
    %v3444 = vpop.f32.mrf.mxu0
    %v3445 = vpop.f32.mrf.mxu0
    %v3446 = vadd.f32 %v3358, %v3445
    %v3447 = vpop.f32.mrf.mxu0
    %3448 = vdwg.mxu0
    %v3449 = vmax.f32 %v3443, 0.0
    %v3450 = vmax.f32 %v3446, 0.0
    %v3451 = vpack.c.bf16 %v3450, %v3449
    %3452 = vmatprep.subr.bf16.mxu0 0
    %3453 = vmatpush1.bf16.msra.mxu0 0
    %3454 = vmatprep.subr.bf16.mxu0 0
    %3455 = vmatpush1.bf16.msra.mxu0 0
    %3456 = vmatprep.subr.bf16.mxu0 0
    %3457 = vmatpush1.bf16.msra.mxu0 0
    %3458 = vmatprep.subr.bf16.mxu0 0
    %3459 = vmatpush1.bf16.msra.mxu0 0
    %3460 = vmatprep.subr.bf16.mxu0 0
    %3461 = vmatpush1.bf16.msra.mxu0 0
    %3462 = vmatprep.subr.bf16.mxu0 0
    %3463 = vmatpush1.bf16.msra.mxu0 0
    %3464 = vmatprep.subr.bf16.mxu0 0
    %3465 = vmatpush1.bf16.msra.mxu0 0
    %3466 = vmatprep.subr.bf16.mxu0 0
    %3467 = vmatpush1.bf16.msra.mxu0 %v3451
    %3468 = vmatprep.subr.bf16.mxu0 0
    %3469 = vmatpush2.bf16.msra.mxu0 0
    %3470 = vmatprep.subr.bf16.mxu0 0
    %3471 = vmatpush2.bf16.msra.mxu0 0
    %3472 = vmatprep.subr.bf16.mxu0 0
    %3473 = vmatpush2.bf16.msra.mxu0 0
    %3474 = vmatprep.subr.bf16.mxu0 0
    %3475 = vmatpush2.bf16.msra.mxu0 0
    %3476 = vmatprep.subr.bf16.mxu0 0
    %3477 = vmatpush2.bf16.msra.mxu0 0
    %3478 = vmatprep.subr.bf16.mxu0 0
    %3479 = vmatpush2.bf16.msra.mxu0 0
    %3480 = vmatprep.subr.bf16.mxu0 0
    %3481 = vmatpush2.bf16.msra.mxu0 0
    %3482 = vmatprep.subr.bf16.mxu0 0
    %3483 = vmatpush2.bf16.msra.mxu0 0
    %3484 = vmatprep.mubr.bf16.mxu0 0
    %3485 = vmatmul.mubr.bf16.gmra.mxu0 %v3293
    %v3486 = vpop.f32.mrf.mxu0
    %v3487 = vadd.f32 0.0, %v3486
    %v3488 = vpop.f32.mrf.mxu0
    %v3489 = vpop.f32.mrf.mxu0
    %v3490 = vadd.f32 0.0, %v3489
    %v3491 = vpop.f32.mrf.mxu0
    %3492 = vdwg.mxu0
    %v3493 = vld [vmem:[%s20] sm:$0x3]
    %v3495 = vsel %vm782, %v3493, 0
    %3497 = vmatprep.subr.mxu0 0.0
    %3498 = vmatpush1.msra.mxu0 0.0
    %3499 = vmatprep.subr.mxu0 0.0
    %3500 = vmatpush1.msra.mxu0 0.0
    %3501 = vmatprep.subr.mxu0 0.0
    %3502 = vmatpush1.msra.mxu0 0.0
    %3503 = vmatprep.subr.mxu0 0.0
    %3504 = vmatpush1.msra.mxu0 0.0
    %3505 = vmatprep.subr.mxu0 0.0
    %3506 = vmatpush1.msra.mxu0 0.0
    %3507 = vmatprep.subr.mxu0 0.0
    %3508 = vmatpush1.msra.mxu0 0.0
    %3509 = vmatprep.subr.mxu0 0.0
    %3510 = vmatpush1.msra.mxu0 0.0
    %3511 = vmatprep.subr.mxu0 0.0
    %3512 = vmatpush1.msra.mxu0 0.0
    %3513 = vmatprep.subr.mxu0 0.0
    %3514 = vmatpush1.msra.mxu0 0.0
    %3515 = vmatprep.subr.mxu0 0.0
    %3516 = vmatpush1.msra.mxu0 0.0
    %3517 = vmatprep.subr.mxu0 0.0
    %3518 = vmatpush1.msra.mxu0 0.0
    %3519 = vmatprep.subr.mxu0 0.0
    %3520 = vmatpush1.msra.mxu0 0.0
    %3521 = vmatprep.subr.mxu0 0.0
    %3522 = vmatpush1.msra.mxu0 0.0
    %3523 = vmatprep.subr.mxu0 0.0
    %3524 = vmatpush1.msra.mxu0 0.0
    %3525 = vmatprep.subr.mxu0 0.0
    %3526 = vmatpush1.msra.mxu0 %v3490
    %3527 = vmatprep.subr.mxu0 0.0
    %3528 = vmatpush1.msra.mxu0 %v3487
    %3529 = vmatprep.subr.mxu0 0.0
    %3530 = vmatpush2.msra.mxu0 0.0
    %3531 = vmatprep.subr.mxu0 0.0
    %3532 = vmatpush2.msra.mxu0 0.0
    %3533 = vmatprep.subr.mxu0 0.0
    %3534 = vmatpush2.msra.mxu0 0.0
    %3535 = vmatprep.subr.mxu0 0.0
    %3536 = vmatpush2.msra.mxu0 0.0
    %3537 = vmatprep.subr.mxu0 0.0
    %3538 = vmatpush2.msra.mxu0 0.0
    %3539 = vmatprep.subr.mxu0 0.0
    %3540 = vmatpush2.msra.mxu0 0.0
    %3541 = vmatprep.subr.mxu0 0.0
    %3542 = vmatpush2.msra.mxu0 0.0
    %3543 = vmatprep.subr.mxu0 0.0
    %3544 = vmatpush2.msra.mxu0 0.0
    %3545 = vmatprep.subr.mxu0 0.0
    %3546 = vmatpush2.msra.mxu0 0.0
    %3547 = vmatprep.subr.mxu0 0.0
    %3548 = vmatpush2.msra.mxu0 0.0
    %3549 = vmatprep.subr.mxu0 0.0
    %3550 = vmatpush2.msra.mxu0 0.0
    %3551 = vmatprep.subr.mxu0 0.0
    %3552 = vmatpush2.msra.mxu0 0.0
    %3553 = vmatprep.subr.mxu0 0.0
    %3554 = vmatpush2.msra.mxu0 0.0
    %3555 = vmatprep.subr.mxu0 0.0
    %3556 = vmatpush2.msra.mxu0 0.0
    %3557 = vmatprep.subr.mxu0 0.0
    %3558 = vmatpush2.msra.mxu0 0.0
    %3559 = vmatprep.subr.mxu0 0.0
    %3560 = vmatpush2.msra.mxu0 0.0
    %3561 = vmatprep.mubr.f32.mxu0 0.0
    %3562 = vmatmul.mubr.f32.gmra.mxu0 %v3495
    %v3563 = vpop.f32.mrf.mxu0
    %v3564 = vadd.f32 0.0, %v3563
    %v3565 = vpop.f32.mrf.mxu0
    %3566 = vdwg.mxu0
    %v3567 = vld [vmem:[%s23] sm:$0xf]
    %v3568 = vld [vmem:[%s23 + $0x4] sm:$0xf]
    %v3569 = vld [vmem:[%s23 + $0x8] sm:$0xf]
    %v3570 = vld [vmem:[%s23 + $0xc] sm:$0xf]
    %v3571 = vld [vmem:[%s23 + $0x10] sm:$0xf]
    %v3572 = vld [vmem:[%s23 + $0x14] sm:$0xf]
    %v3573 = vld [vmem:[%s23 + $0x18] sm:$0xf]
    %v3574 = vld [vmem:[%s23 + $0x1c] sm:$0xf]
    %v3575 = vld [vmem:[%s23 + $0x20] sm:$0xf]
    %v3576 = vld [vmem:[%s23 + $0x24] sm:$0xf]
    %v3577 = vld [vmem:[%s23 + $0x28] sm:$0xf]
    %v3578 = vld [vmem:[%s23 + $0x2c] sm:$0xf]
    %v3579 = vld [vmem:[%s23 + $0x30] sm:$0xf]
    %v3580 = vld [vmem:[%s23 + $0x34] sm:$0xf]
    %v3581 = vld [vmem:[%s23 + $0x38] sm:$0xf]
    %v3582 = vld [vmem:[%s23 + $0x3c] sm:$0xf]
    %v3583 = vpack.c.bf16 %v3564, %v3564
    %v3584 = vld [vmem:[%s24] sm:$0x1]
    %v3586 = vlaneseq
    %v3587 = vshrl.u32 %v3586, 7
    %v3588 = vsub.s32 0, %v3587
    %v3589 = vrot.slane %v3584, %v3588
    %v3607 = vunpack.c.l.b16 %v3567
    %v3608 = vunpack.c.l.b16 %v3568
    %v3609 = vunpack.c.l.b16 %v3569
    %v3610 = vunpack.c.l.b16 %v3570
    %v3611 = vunpack.c.l.b16 %v3571
    %v3612 = vunpack.c.l.b16 %v3572
    %v3613 = vunpack.c.l.b16 %v3573
    %v3614 = vunpack.c.l.b16 %v3574
    %v3615 = vunpack.c.l.b16 %v3575
    %v3616 = vunpack.c.l.b16 %v3576
    %v3617 = vunpack.c.l.b16 %v3577
    %v3618 = vunpack.c.l.b16 %v3578
    %v3619 = vunpack.c.l.b16 %v3579
    %v3620 = vunpack.c.l.b16 %v3580
    %v3621 = vunpack.c.l.b16 %v3581
    %v3622 = vunpack.c.l.b16 %v3582
    %v3623 = vpack.c.b16 %v3608, %v3607
    %v3624 = vpack.c.b16 %v3610, %v3609
    %v3625 = vpack.c.b16 %v3612, %v3611
    %v3626 = vpack.c.b16 %v3614, %v3613
    %v3627 = vpack.c.b16 %v3616, %v3615
    %v3628 = vpack.c.b16 %v3618, %v3617
    %v3629 = vpack.c.b16 %v3620, %v3619
    %v3630 = vpack.c.b16 %v3622, %v3621
    %3639 = vmatprep.subr.bf16.mxu0 0
    %3640 = vmatpush1.bf16.msra.mxu0 %v3630
    %3641 = vmatprep.subr.bf16.mxu0 0
    %3642 = vmatpush1.bf16.msra.mxu0 %v3629
    %3643 = vmatprep.subr.bf16.mxu0 0
    %3644 = vmatpush1.bf16.msra.mxu0 %v3628
    %3645 = vmatprep.subr.bf16.mxu0 0
    %3646 = vmatpush1.bf16.msra.mxu0 %v3627
    %3647 = vmatprep.subr.bf16.mxu0 0
    %3648 = vmatpush1.bf16.msra.mxu0 %v3626
    %3649 = vmatprep.subr.bf16.mxu0 0
    %3650 = vmatpush1.bf16.msra.mxu0 %v3625
    %3651 = vmatprep.subr.bf16.mxu0 0
    %3652 = vmatpush1.bf16.msra.mxu0 %v3624
    %3653 = vmatprep.subr.bf16.mxu0 0
    %3654 = vmatpush1.bf16.msra.mxu0 %v3623
    %3655 = vmatprep.subr.bf16.mxu0 0
    %3656 = vmatpush2.bf16.msra.mxu0 0
    %3657 = vmatprep.subr.bf16.mxu0 0
    %3658 = vmatpush2.bf16.msra.mxu0 0
    %3659 = vmatprep.subr.bf16.mxu0 0
    %3660 = vmatpush2.bf16.msra.mxu0 0
    %3661 = vmatprep.subr.bf16.mxu0 0
    %3662 = vmatpush2.bf16.msra.mxu0 0
    %3663 = vmatprep.subr.bf16.mxu0 0
    %3664 = vmatpush2.bf16.msra.mxu0 0
    %3665 = vmatprep.subr.bf16.mxu0 0
    %3666 = vmatpush2.bf16.msra.mxu0 0
    %3667 = vmatprep.subr.bf16.mxu0 0
    %3668 = vmatpush2.bf16.msra.mxu0 0
    %3669 = vmatprep.subr.bf16.mxu0 0
    %3670 = vmatpush2.bf16.msra.mxu0 0
    %3671 = vmatprep.mubr.bf16.mxu0 0
    %3672 = vmatmul.mubr.bf16.gmra.mxu0 %v3583
    %v3673 = vpop.f32.mrf.mxu0
    %v3674 = vadd.f32 %v3589, %v3673
    %v3675 = vpop.f32.mrf.mxu0
    %v3676 = vpop.f32.mrf.mxu0
    %v3677 = vpop.f32.mrf.mxu0
    %3678 = vdwg.mxu0
    %v3679 = vmul.f32 %v3674, %v3674
    %vm3680 = vcmask 1041408
    %v3681 = vsel %vm3680, %v3679, 0.0
    %3682 = vadd.xlane.f32.xlu0 %v3681
    %v3683 = vpop.xlane.xlu0 %3682
    %v3684 = vadd.f32 %v3683, 1e-12
    %v3685 = vrsqrt.pop %v3684
    %v3686 = vmul.f32 %v3674, %v3685
    %v3687 = vmul.f32 %v3281, %v3281
    %vm3688 = vcmask 1043456
    %v3689 = vsel %vm3688, %v3687, 0.0
    %3690 = vadd.xlane.f32.xlu0 %v3689
    %v3691 = vpop.xlane.xlu0 %3690
    %v3692 = vadd.f32 %v3691, 1e-12
    %v3693 = vrsqrt.pop %v3692
    %v3694 = vmul.f32 %v3281, %v3693
    %s3695 = sld [smem:[#allocation2]]
    %v3696 = vstv %s3695
    %v3697 = vmul.f32 %v3696, 1.442695
    %v3698 = vpow.pop %v3697
    %s3699 = vtos %v3698
    %3700 = vmatprep.subr.mxu0 0.0
    %3701 = vmatpush1.xpose.msra.mxu0 0.0
    %3702 = vmatprep.subr.mxu0 0.0
    %3703 = vmatpush1.xpose.msra.mxu0 0.0
    %3704 = vmatprep.subr.mxu0 0.0
    %3705 = vmatpush1.xpose.msra.mxu0 0.0
    %3706 = vmatprep.subr.mxu0 0.0
    %3707 = vmatpush1.xpose.msra.mxu0 0.0
    %3708 = vmatprep.subr.mxu0 0.0
    %3709 = vmatpush1.xpose.msra.mxu0 0.0
    %3710 = vmatprep.subr.mxu0 0.0
    %3711 = vmatpush1.xpose.msra.mxu0 0.0
    %3712 = vmatprep.subr.mxu0 0.0
    %3713 = vmatpush1.xpose.msra.mxu0 0.0
    %3714 = vmatprep.subr.mxu0 0.0
    %3715 = vmatpush1.xpose.msra.mxu0 0.0
    %3716 = vmatprep.subr.mxu0 0.0
    %3717 = vmatpush1.xpose.msra.mxu0 0.0
    %3718 = vmatprep.subr.mxu0 0.0
    %3719 = vmatpush1.xpose.msra.mxu0 0.0
    %3720 = vmatprep.subr.mxu0 0.0
    %3721 = vmatpush1.xpose.msra.mxu0 0.0
    %3722 = vmatprep.subr.mxu0 0.0
    %3723 = vmatpush1.xpose.msra.mxu0 0.0
    %3724 = vmatprep.subr.mxu0 0.0
    %3725 = vmatpush1.xpose.msra.mxu0 0.0
    %3726 = vmatprep.subr.mxu0 0.0
    %3727 = vmatpush1.xpose.msra.mxu0 0.0
    %3728 = vmatprep.subr.mxu0 0.0
    %3729 = vmatpush1.xpose.msra.mxu0 0.0
    %3730 = vmatprep.subr.mxu0 0.0
    %3731 = vmatpush1.xpose.msra.mxu0 %v3694
    %3732 = vmatprep.subr.mxu0 0.0
    %3733 = vmatpush2.xpose.msra.mxu0 0.0
    %3734 = vmatprep.subr.mxu0 0.0
    %3735 = vmatpush2.xpose.msra.mxu0 0.0
    %3736 = vmatprep.subr.mxu0 0.0
    %3737 = vmatpush2.xpose.msra.mxu0 0.0
    %3738 = vmatprep.subr.mxu0 0.0
    %3739 = vmatpush2.xpose.msra.mxu0 0.0
    %3740 = vmatprep.subr.mxu0 0.0
    %3741 = vmatpush2.xpose.msra.mxu0 0.0
    %3742 = vmatprep.subr.mxu0 0.0
    %3743 = vmatpush2.xpose.msra.mxu0 0.0
    %3744 = vmatprep.subr.mxu0 0.0
    %3745 = vmatpush2.xpose.msra.mxu0 0.0
    %3746 = vmatprep.subr.mxu0 0.0
    %3747 = vmatpush2.xpose.msra.mxu0 0.0
    %3748 = vmatprep.subr.mxu0 0.0
    %3749 = vmatpush2.xpose.msra.mxu0 0.0
    %3750 = vmatprep.subr.mxu0 0.0
    %3751 = vmatpush2.xpose.msra.mxu0 0.0
    %3752 = vmatprep.subr.mxu0 0.0
    %3753 = vmatpush2.xpose.msra.mxu0 0.0
    %3754 = vmatprep.subr.mxu0 0.0
    %3755 = vmatpush2.xpose.msra.mxu0 0.0
    %3756 = vmatprep.subr.mxu0 0.0
    %3757 = vmatpush2.xpose.msra.mxu0 0.0
    %3758 = vmatprep.subr.mxu0 0.0
    %3759 = vmatpush2.xpose.msra.mxu0 0.0
    %3760 = vmatprep.subr.mxu0 0.0
    %3761 = vmatpush2.xpose.msra.mxu0 0.0
    %3762 = vmatprep.subr.mxu0 0.0
    %3763 = vmatpush2.xpose.msra.mxu0 0.0
    %3764 = vmatprep.mubr.f32.mxu0 0.0
    %3765 = vmatmul.mubr.f32.gmra.mxu0 %v3686
    %v3766 = vpop.f32.mrf.mxu0
    %v3767 = vadd.f32 0.0, %v3766
    %v3768 = vpop.f32.mrf.mxu0
    %3769 = vdwg.mxu0
    %v3770 = vstv %s3699
    %v3771 = vmul.f32 %v3770, %v3767
    %vm3772 = vcmask 25600
    %3773 = vst.msk [vmem:[#allocation3] sm:$0x3] %vm3772, %v3771
    // Predicated region
    $region106: #{custom_clip_forward.1} parent=1 // pred_check
      _
    $region107: #{custom_clip_forward.1} parent=1 // pred_check_branch
      %3775 = sbr.rel (0) target = $region109
    $region108: #{custom_clip_forward.1} parent=1 // pred_region
      %s3777 = ssub.s32 32, 32
      %3778 = vsyncadd [#allocation4], %s3777
      %s3780 = sshll.u32 [#allocation3], 4
      %s3781 = int_to_ptr.vmem [resolvable:$true] %s3780
      %3783 = dma.vmem_to_hbm [thread:$0]  %s3781, 32, %s26, [#allocation4]
    $region109: #{custom_clip_forward.1} parent=1 // pred_fallthru
      _
    // Predicated region
    $region110: #{custom_clip_forward.1} parent=1 // pred_check
      _
    $region111: #{custom_clip_forward.1} parent=1 // pred_check_branch
      %3785 = sbr.rel (0) target = $region113
    $region112: #{custom_clip_forward.1} parent=1 // pred_region
      %3786 = dma.done [#allocation4], 32
    $region113: #{custom_clip_forward.1} parent=1 // pred_fallthru
      _
    %3787 = vsyncpa [#allocation4], 1

</llo_original>
